<compile_context>
chip_gen: v7x
topology: tpu7x:2x2x1
jax: 0.10.0
libtpu: 0.0.40
codegen_flags: <defaults>
</compile_context>

<pallas_src>
import functools
import math

import numpy as np
import jax
import jax.numpy as jnp
from jax import lax
from jax.experimental import pallas as pl
from jax.experimental.pallas import tpu as pltpu


# ---------------------------------------------------------------------------
# Bilinear upsampling filter (same as the PyTorch module)
# ---------------------------------------------------------------------------
def upsample_filt(size):
    factor = (size + 1) // 2
    if size % 2 == 1:
        center = factor - 1
    else:
        center = factor - 0.5
    og = np.ogrid[:size, :size]
    return ((1 - abs(og[0] - center) / factor) *
            (1 - abs(og[1] - center) / factor)).astype(np.float32)


# ---------------------------------------------------------------------------
# Fused Pallas kernel (one row strip of one image per grid step)
# ---------------------------------------------------------------------------
def _recon_kernel(f_ref, ftop_ref, fbot_ref, ci_ref, wr_ref, mask_ref, b_ref,
                  o_ref, g_ref, *, TR, Wo, K, S, BASE, OFF_MID, SCR_W):
    # f_ref    : (1, 64, TR*Wo)   flat NCHW strip of convt_F (matmul RHS)
    # ftop_ref : (1, 64, K*Wo)    block holding the row above the strip (last row)
    # fbot_ref : (1, 64, K*Wo)    block holding the row below the strip (first row)
    # ci_ref   : (1, 1, TR*Wo)    convt_I addend (flat)
    # wr_ref   : (16, 64)         conv_R weights, tap-major (rows 9..15 zero)
    # mask_ref : (2, TR*Wo)       column-edge masks (x==0 / x==Wo-1)
    # b_ref    : SMEM (1,)        combined bias (b_R + bt_I)
    # o_ref    : (1, 1, TR*Wo)    flat output strip
    # g_ref    : VMEM (16, SCR_W) zero-guarded, flattened per-tap planes
    f32 = jnp.float32
    L = TR * Wo
    r = pl.program_id(1)

    dot = functools.partial(jnp.dot, precision=jax.lax.Precision.HIGHEST,
                            preferred_element_type=f32)
    wr = wr_ref[...]                                        # (16, 64)

    # ---- MXU: channel contraction for the strip and its two halo rows ----
    g_mid = dot(wr, f_ref[0])                               # (16, TR*Wo)
    g_top = dot(wr, ftop_ref[0][:, (K - 1) * Wo:])          # (16, Wo)
    g_bot = dot(wr, fbot_ref[0][:, :Wo])                    # (16, Wo)
    # Clamped halo block indices read junk at the image borders -> zero them.
    g_top = g_top * (r > 0).astype(f32)
    g_bot = g_bot * (r < S - 1).astype(f32)

    # ---- stage the flattened tap planes in VMEM scratch ----
    # Column BASE + ry*Wo + x holds G(tap, padded-row ry, col x):
    # ry = 0 is the top halo row, 1..TR the strip rows, TR+1 the bottom halo.
    end = OFF_MID + L + Wo
    g_ref[:, 0:BASE] = jnp.zeros((16, BASE), f32)               # left guard
    g_ref[:, BASE:BASE + Wo] = g_top
    g_ref[:, OFF_MID:OFF_MID + L] = g_mid                       # lane-aligned store
    g_ref[:, OFF_MID + L:end] = g_bot
    g_ref[:, end:SCR_W] = jnp.zeros((16, SCR_W - end), f32)     # right guard

    # ---- 9 shifted adds of single-channel planes (+ column-edge masks) ----
    m_l = mask_ref[0:1, :]                                  # 0 where x == 0
    m_r = mask_ref[1:2, :]                                  # 0 where x == Wo-1
    acc = ci_ref[0] + b_ref[0]                              # convt_I + fused bias
    for dy in range(3):
        t = 3 * dy
        s = BASE + dy * Wo - 1
        acc = acc + m_l * g_ref[t:t + 1, s:s + L]               # dx = 0
        acc = acc + g_ref[t + 1:t + 2, s + 1:s + 1 + L]         # dx = 1
        acc = acc + m_r * g_ref[t + 2:t + 3, s + 2:s + 2 + L]   # dx = 2
    o_ref[0] = acc


def _pick_tile_rows(Ho, Wo):
    """Largest strip that keeps double-buffered blocks + scratch well inside the
    scoped VMEM limit; prefers >= 2 strips so row-parallelism has work."""
    max_l = (14 * 1024 * 1024) // 600            # ~600 B of VMEM per flat element
    cands = [t for t in (64, 32, 16, 8) if Ho % t == 0 and t * Wo <= max_l]
    if not cands:
        cands = [8]
    multi = [t for t in cands if Ho // t >= 2]
    return (multi or cands)[0]


# ---------------------------------------------------------------------------
# Wrapper (layout plumbing + pallas_call)
# ---------------------------------------------------------------------------
def image_reconstruction(params, LR, convt_F):
    """LR: (N,1,H,W), convt_F: (N,64,2H,2W)  ->  HR: (N,1,2H,2W)."""
    N, _, H, W = LR.shape
    C = convt_F.shape[1]
    Ho, Wo = 2 * H, 2 * W
    assert convt_F.shape == (N, C, Ho, Wo), convt_F.shape
    assert H % 8 == 0 and W % 8 == 0, "H, W must be multiples of 8"

    f32 = jnp.float32
    TR = _pick_tile_rows(Ho, Wo)                 # output rows per strip
    S = Ho // TR                                 # strips per image
    L = TR * Wo
    K = 128 // math.gcd(Wo, 128)                 # rows per 128-lane-aligned halo block
    RPK = TR // K
    OFF_MID = -(-(Wo + 1) // 128) * 128          # aligned start of the strip rows
    BASE = OFF_MID - Wo                          # start of padded-row 0 (top halo)
    SCR_W = -(-(OFF_MID + L + Wo + 1) // 128) * 128

    # conv_R inputs: native NCHW kept, flat reshape is free (no HBM transpose).
    f_flat = convt_F.astype(f32).reshape(N, C, Ho * Wo)
    wr9 = jnp.transpose(params["w_R"][0], (1, 2, 0)).reshape(9, C).astype(f32)
    wr16 = jnp.zeros((16, C), f32).at[:9].set(wr9)   # pad taps to a full sublane tile

    # convt_I branch (1->1 channels, ~1/64 of the traffic): computed with XLA and
    # streamed into the kernel as a flat addend (bias is fused in-kernel).
    # TODO(synk): fuse via an in-kernel polyphase path if this ever matters.
    x = jnp.transpose(LR, (0, 2, 3, 1)).astype(f32)
    wI = jnp.flip(jnp.transpose(params["wt_I"], (2, 3, 0, 1)), axis=(0, 1)).astype(f32)
    ci = lax.conv_general_dilated(x, wI, (1, 1), [(2, 2), (2, 2)],
                                  lhs_dilation=(2, 2),
                                  dimension_numbers=("NHWC", "HWIO", "NHWC"))
    ci_flat = ci[..., 0].reshape(N, 1, Ho * Wo)

    col = jnp.arange(L, dtype=jnp.int32) % Wo
    masks = jnp.stack([(col != 0), (col != Wo - 1)]).astype(f32)     # (2, L)
    bias = (params["b_R"] + params["bt_I"]).reshape(1).astype(f32)

    kernel = functools.partial(_recon_kernel, TR=TR, Wo=Wo, K=K, S=S,
                               BASE=BASE, OFF_MID=OFF_MID, SCR_W=SCR_W)

    out = pl.pallas_call(
        kernel,
        out_shape=jax.ShapeDtypeStruct((N, 1, Ho * Wo), f32),
        grid=(N, S),
        in_specs=[
            pl.BlockSpec((1, C, L), lambda n, r: (n, 0, r)),                 # F strip
            pl.BlockSpec((1, C, K * Wo),                                     # top halo row
                         lambda n, r: (n, 0, jnp.maximum(r * RPK - 1, 0))),
            pl.BlockSpec((1, C, K * Wo),                                     # bottom halo row
                         lambda n, r: (n, 0, jnp.minimum((r + 1) * RPK,
                                                         Ho // K - 1))),
            pl.BlockSpec((1, 1, L), lambda n, r: (n, 0, r)),                 # convt_I addend
            pl.BlockSpec((16, C), lambda n, r: (0, 0)),                      # conv_R weights
            pl.BlockSpec((2, L), lambda n, r: (0, 0)),                       # edge masks
            pl.BlockSpec(memory_space=pltpu.MemorySpace.SMEM),               # fused bias
        ],
        out_specs=pl.BlockSpec((1, 1, L), lambda n, r: (n, 0, r)),
        scratch_shapes=[pltpu.VMEM((16, SCR_W), f32)],
        compiler_params=pltpu.CompilerParams(
            dimension_semantics=("parallel", "parallel"),
            vmem_limit_bytes=32 * 1024 * 1024),
    )(f_flat, f_flat, f_flat, ci_flat, wr16, masks, bias)

    return out.reshape(N, 1, Ho, Wo)


# ---------------------------------------------------------------------------
# Parameters (module-equivalent init) and plain-JAX reference
# ---------------------------------------------------------------------------
def init_params(key):
    k1, k2, k3 = jax.random.split(key, 3)
    fan_in = 64 * 3 * 3
    bound = 1.0 / np.sqrt(fan_in)
    return {
        "w_R": jax.random.uniform(k1, (1, 64, 3, 3), jnp.float32, -bound, bound),
        "b_R": jax.random.uniform(k2, (1,), jnp.float32, -bound, bound),
        "wt_I": jnp.asarray(upsample_filt(4)).reshape(1, 1, 4, 4),
        "bt_I": jax.random.uniform(k3, (1,), jnp.float32, -0.1, 0.1),
    }


def image_reconstruction_reference(params, LR, convt_F):
    dn = ("NHWC", "HWIO", "NHWC")
    x = jnp.transpose(LR, (0, 2, 3, 1))                              # (N, H, W, 1)
    wI = jnp.flip(jnp.transpose(params["wt_I"], (2, 3, 0, 1)), axis=(0, 1))
    convt_I = lax.conv_general_dilated(x, wI, (1, 1), [(2, 2), (2, 2)],
                                       lhs_dilation=(2, 2),
                                       dimension_numbers=dn) + params["bt_I"]
    F = jnp.transpose(convt_F, (0, 2, 3, 1))
    wR = jnp.transpose(params["w_R"], (2, 3, 1, 0))                  # OIHW -> HWIO
    conv_R = lax.conv_general_dilated(F, wR, (1, 1), [(1, 1), (1, 1)],
                                      dimension_numbers=dn) + params["b_R"]
    return jnp.transpose(convt_I + conv_R, (0, 3, 1, 2))


if __name__ == "__main__":
    key = jax.random.PRNGKey(0)
    kp, k1, k2 = jax.random.split(key, 3)
    params = init_params(kp)

    N, H, W = 2, 16, 16
    LR = jax.random.normal(k1, (N, 1, H, W), jnp.float32)
    convt_F = jax.random.normal(k2, (N, 64, 2 * H, 2 * W), jnp.float32)

    hr = jax.block_until_ready(jax.jit(image_reconstruction)(params, LR, convt_F))
    assert hr.shape == (N, 1, 2 * H, 2 * W), hr.shape

    ref = jax.block_until_ready(
        jax.jit(image_reconstruction_reference)(params, LR, convt_F))
    np.testing.assert_allclose(np.asarray(hr), np.asarray(ref),
                               rtol=2e-4, atol=2e-4)
    print("KERNEL_OK")
</pallas_src>

<mosaic_0001>
module attributes {stable_mosaic.version = 11 : i64} {
  func.func @_recon_kernel(%arg0: i32, %arg1: i32, %arg2: memref<1x64x512xf32, #tpu.memory_space<vmem>>, %arg3: memref<1x64x128xf32, #tpu.memory_space<vmem>>, %arg4: memref<1x64x128xf32, #tpu.memory_space<vmem>>, %arg5: memref<1x1x512xf32, #tpu.memory_space<vmem>>, %arg6: memref<16x64xf32, #tpu.memory_space<vmem>>, %arg7: memref<2x512xf32, #tpu.memory_space<vmem>>, %arg8: memref<1xf32, #tpu.memory_space<smem>>, %arg9: memref<1x1x512xf32, #tpu.memory_space<vmem>>, %arg10: memref<16x768xf32, #tpu.memory_space<vmem>>) attributes {dimension_semantics = [#tpu.dimension_semantics<parallel>, #tpu.dimension_semantics<parallel>], iteration_bounds = array<i64: 2, 2>, scalar_prefetch = 0 : i64, scratch_operands = 1 : i64, tpu.core_type = #tpu.core_type<tc>, window_params = [{transform_indices = @transform_0, window_bounds = array<i64: 1, 64, 512>}, {transform_indices = @transform_1, window_bounds = array<i64: 1, 64, 128>}, {transform_indices = @transform_2, window_bounds = array<i64: 1, 64, 128>}, {transform_indices = @transform_3, window_bounds = array<i64: 1, 1, 512>}, {pipeline_mode = #tpu.pipeline_mode<synchronous>, transform_indices = @transform_4, window_bounds = array<i64: 16, 64>}, {pipeline_mode = #tpu.pipeline_mode<synchronous>, transform_indices = @transform_5, window_bounds = array<i64: 2, 512>}, {transform_indices = @transform_6, window_bounds = array<i64: 1>}, {transform_indices = @transform_7, window_bounds = array<i64: 1, 1, 512>}]} {
    %c0 = arith.constant 0 : index
    %c0_0 = arith.constant 0 : index
    %0 = vector.load %arg6[%c0, %c0_0] : memref<16x64xf32, #tpu.memory_space<vmem>>, vector<16x64xf32>
    %c0_1 = arith.constant 0 : index
    %c0_2 = arith.constant 0 : index
    %c0_3 = arith.constant 0 : index
    %1 = vector.load %arg2[%c0_1, %c0_2, %c0_3] : memref<1x64x512xf32, #tpu.memory_space<vmem>>, vector<1x64x512xf32>
    %2 = vector.shape_cast %1 : vector<1x64x512xf32> to vector<64x512xf32>
    %cst = arith.constant dense<0.000000e+00> : vector<16x512xf32>
    %3 = tpu.matmul %0, %2, %cst {dimension_numbers = #tpu.dot_dimension_numbers<[1], [0], [0], [1], [0, 0, 1, 1], [], []>, precision = #tpu.contract_precision<fp32>} : vector<16x64xf32>, vector<64x512xf32>, vector<16x512xf32> -> vector<16x512xf32>
    %c0_4 = arith.constant 0 : index
    %c0_5 = arith.constant 0 : index
    %c0_6 = arith.constant 0 : index
    %4 = vector.load %arg3[%c0_4, %c0_5, %c0_6] : memref<1x64x128xf32, #tpu.memory_space<vmem>>, vector<1x64x128xf32>
    %5 = vector.shape_cast %4 : vector<1x64x128xf32> to vector<64x128xf32>
    %6 = vector.extract_strided_slice %5 {offsets = [0, 96], sizes = [64, 32], strides = [1, 1]} : vector<64x128xf32> to vector<64x32xf32>
    %cst_7 = arith.constant dense<0.000000e+00> : vector<16x32xf32>
    %7 = tpu.matmul %0, %6, %cst_7 {dimension_numbers = #tpu.dot_dimension_numbers<[1], [0], [0], [1], [0, 0, 1, 1], [], []>, precision = #tpu.contract_precision<fp32>} : vector<16x64xf32>, vector<64x32xf32>, vector<16x32xf32> -> vector<16x32xf32>
    %c0_8 = arith.constant 0 : index
    %c0_9 = arith.constant 0 : index
    %c0_10 = arith.constant 0 : index
    %8 = vector.load %arg4[%c0_8, %c0_9, %c0_10] : memref<1x64x128xf32, #tpu.memory_space<vmem>>, vector<1x64x128xf32>
    %9 = vector.shape_cast %8 : vector<1x64x128xf32> to vector<64x128xf32>
    %10 = vector.extract_strided_slice %9 {offsets = [0, 0], sizes = [64, 32], strides = [1, 1]} : vector<64x128xf32> to vector<64x32xf32>
    %cst_11 = arith.constant dense<0.000000e+00> : vector<16x32xf32>
    %11 = tpu.matmul %0, %10, %cst_11 {dimension_numbers = #tpu.dot_dimension_numbers<[1], [0], [0], [1], [0, 0, 1, 1], [], []>, precision = #tpu.contract_precision<fp32>} : vector<16x64xf32>, vector<64x32xf32>, vector<16x32xf32> -> vector<16x32xf32>
    %c0_i32 = arith.constant 0 : i32
    %12 = arith.cmpi sgt, %arg1, %c0_i32 : i32
    %13 = arith.extui %12 : i1 to i32
    %14 = arith.sitofp %13 : i32 to f32
    %15 = vector.broadcast %14 : f32 to vector<16x32xf32>
    %16 = arith.mulf %7, %15 : vector<16x32xf32>
    %c1_i32 = arith.constant 1 : i32
    %17 = arith.cmpi slt, %arg1, %c1_i32 : i32
    %18 = arith.extui %17 : i1 to i32
    %19 = arith.sitofp %18 : i32 to f32
    %20 = vector.broadcast %19 : f32 to vector<16x32xf32>
    %21 = arith.mulf %11, %20 : vector<16x32xf32>
    %cst_12 = arith.constant 0.000000e+00 : f32
    %22 = vector.broadcast %cst_12 : f32 to vector<16x96xf32>
    %c0_13 = arith.constant 0 : index
    %c0_14 = arith.constant 0 : index
    %23 = vector.load %arg10[%c0_13, %c0_14] : memref<16x768xf32, #tpu.memory_space<vmem>>, vector<16x96xf32>
    tpu.vector_store %arg10[%c0_13, %c0_14], %22 {strides = array<i32>} : memref<16x768xf32, #tpu.memory_space<vmem>>, vector<16x96xf32>,
    %c0_15 = arith.constant 0 : index
    %c96 = arith.constant 96 : index
    %24 = vector.load %arg10[%c0_15, %c96] : memref<16x768xf32, #tpu.memory_space<vmem>>, vector<16x32xf32>
    tpu.vector_store %arg10[%c0_15, %c96], %16 {strides = array<i32>} : memref<16x768xf32, #tpu.memory_space<vmem>>, vector<16x32xf32>,
    %c0_16 = arith.constant 0 : index
    %c128 = arith.constant 128 : index
    %25 = vector.load %arg10[%c0_16, %c128] : memref<16x768xf32, #tpu.memory_space<vmem>>, vector<16x512xf32>
    tpu.vector_store %arg10[%c0_16, %c128], %3 {strides = array<i32>} : memref<16x768xf32, #tpu.memory_space<vmem>>, vector<16x512xf32>,
    %c0_17 = arith.constant 0 : index
    %c640 = arith.constant 640 : index
    %26 = vector.load %arg10[%c0_17, %c640] : memref<16x768xf32, #tpu.memory_space<vmem>>, vector<16x32xf32>
    tpu.vector_store %arg10[%c0_17, %c640], %21 {strides = array<i32>} : memref<16x768xf32, #tpu.memory_space<vmem>>, vector<16x32xf32>,
    %cst_18 = arith.constant 0.000000e+00 : f32
    %27 = vector.broadcast %cst_18 : f32 to vector<16x96xf32>
    %c0_19 = arith.constant 0 : index
    %c672 = arith.constant 672 : index
    %28 = vector.load %arg10[%c0_19, %c672] : memref<16x768xf32, #tpu.memory_space<vmem>>, vector<16x96xf32>
    tpu.vector_store %arg10[%c0_19, %c672], %27 {strides = array<i32>} : memref<16x768xf32, #tpu.memory_space<vmem>>, vector<16x96xf32>,
    %c0_20 = arith.constant 0 : index
    %c0_21 = arith.constant 0 : index
    %29 = vector.load %arg7[%c0_20, %c0_21] : memref<2x512xf32, #tpu.memory_space<vmem>>, vector<1x512xf32>
    %c1 = arith.constant 1 : index
    %c0_22 = arith.constant 0 : index
    %30 = vector.load %arg7[%c1, %c0_22] : memref<2x512xf32, #tpu.memory_space<vmem>>, vector<1x512xf32>
    %c0_23 = arith.constant 0 : index
    %c0_24 = arith.constant 0 : index
    %c0_25 = arith.constant 0 : index
    %31 = vector.load %arg5[%c0_23, %c0_24, %c0_25] : memref<1x1x512xf32, #tpu.memory_space<vmem>>, vector<1x1x512xf32>
    %32 = vector.shape_cast %31 : vector<1x1x512xf32> to vector<1x512xf32>
    %c0_26 = arith.constant 0 : index
    %33 = memref.load %arg8[%c0_26] : memref<1xf32, #tpu.memory_space<smem>>
    %34 = vector.broadcast %33 : f32 to vector<1x512xf32>
    %35 = arith.addf %32, %34 : vector<1x512xf32>
    %c0_27 = arith.constant 0 : index
    %c95 = arith.constant 95 : index
    %36 = vector.load %arg10[%c0_27, %c95] : memref<16x768xf32, #tpu.memory_space<vmem>>, vector<1x512xf32>
    %37 = arith.mulf %29, %36 : vector<1x512xf32>
    %38 = arith.addf %35, %37 : vector<1x512xf32>
    %c1_28 = arith.constant 1 : index
    %c96_29 = arith.constant 96 : index
    %39 = vector.load %arg10[%c1_28, %c96_29] : memref<16x768xf32, #tpu.memory_space<vmem>>, vector<1x512xf32>
    %40 = arith.addf %38, %39 : vector<1x512xf32>
    %c2 = arith.constant 2 : index
    %c97 = arith.constant 97 : index
    %41 = vector.load %arg10[%c2, %c97] : memref<16x768xf32, #tpu.memory_space<vmem>>, vector<1x512xf32>
    %42 = arith.mulf %30, %41 : vector<1x512xf32>
    %43 = arith.addf %40, %42 : vector<1x512xf32>
    %c3 = arith.constant 3 : index
    %c127 = arith.constant 127 : index
    %44 = vector.load %arg10[%c3, %c127] : memref<16x768xf32, #tpu.memory_space<vmem>>, vector<1x512xf32>
    %45 = arith.mulf %29, %44 : vector<1x512xf32>
    %46 = arith.addf %43, %45 : vector<1x512xf32>
    %c4 = arith.constant 4 : index
    %c128_30 = arith.constant 128 : index
    %47 = vector.load %arg10[%c4, %c128_30] : memref<16x768xf32, #tpu.memory_space<vmem>>, vector<1x512xf32>
    %48 = arith.addf %46, %47 : vector<1x512xf32>
    %c5 = arith.constant 5 : index
    %c129 = arith.constant 129 : index
    %49 = vector.load %arg10[%c5, %c129] : memref<16x768xf32, #tpu.memory_space<vmem>>, vector<1x512xf32>
    %50 = arith.mulf %30, %49 : vector<1x512xf32>
    %51 = arith.addf %48, %50 : vector<1x512xf32>
    %c6 = arith.constant 6 : index
    %c159 = arith.constant 159 : index
    %52 = vector.load %arg10[%c6, %c159] : memref<16x768xf32, #tpu.memory_space<vmem>>, vector<1x512xf32>
    %53 = arith.mulf %29, %52 : vector<1x512xf32>
    %54 = arith.addf %51, %53 : vector<1x512xf32>
    %c7 = arith.constant 7 : index
    %c160 = arith.constant 160 : index
    %55 = vector.load %arg10[%c7, %c160] : memref<16x768xf32, #tpu.memory_space<vmem>>, vector<1x512xf32>
    %56 = arith.addf %54, %55 : vector<1x512xf32>
    %c8 = arith.constant 8 : index
    %c161 = arith.constant 161 : index
    %57 = vector.load %arg10[%c8, %c161] : memref<16x768xf32, #tpu.memory_space<vmem>>, vector<1x512xf32>
    %58 = arith.mulf %30, %57 : vector<1x512xf32>
    %59 = arith.addf %56, %58 : vector<1x512xf32>
    %c0_31 = arith.constant 0 : index
    %c0_32 = arith.constant 0 : index
    %c0_33 = arith.constant 0 : index
    %60 = vector.load %arg9[%c0_31, %c0_32, %c0_33] : memref<1x1x512xf32, #tpu.memory_space<vmem>>, vector<1x1x512xf32>
    %61 = vector.shape_cast %60 : vector<1x1x512xf32> to vector<1x512xf32>
    %62 = vector.shape_cast %59 : vector<1x512xf32> to vector<1x1x512xf32>
    tpu.vector_store %arg9[%c0_31, %c0_32, %c0_33], %62 {strides = array<i32>} : memref<1x1x512xf32, #tpu.memory_space<vmem>>, vector<1x1x512xf32>,
    return
  }
  func.func @transform_0(%arg0: i32, %arg1: i32) -> (i32, i32, i32) {
    %c0_i32 = arith.constant 0 : i32
    %c0_i32_0 = arith.constant 0 : i32
    return %arg0, %c0_i32, %arg1 : i32, i32, i32
  }
  func.func @transform_1(%arg0: i32, %arg1: i32) -> (i32, i32, i32) {
    %c4_i32 = arith.constant 4 : i32
    %0 = arith.muli %arg1, %c4_i32 : i32
    %c1_i32 = arith.constant 1 : i32
    %1 = arith.subi %0, %c1_i32 : i32
    %c0_i32 = arith.constant 0 : i32
    %2 = arith.maxsi %1, %c0_i32 : i32
    %c0_i32_0 = arith.constant 0 : i32
    %c0_i32_1 = arith.constant 0 : i32
    return %arg0, %c0_i32_0, %2 : i32, i32, i32
  }
  func.func @transform_2(%arg0: i32, %arg1: i32) -> (i32, i32, i32) {
    %c1_i32 = arith.constant 1 : i32
    %0 = arith.addi %arg1, %c1_i32 : i32
    %c4_i32 = arith.constant 4 : i32
    %1 = arith.muli %0, %c4_i32 : i32
    %c7_i32 = arith.constant 7 : i32
    %2 = arith.minsi %1, %c7_i32 : i32
    %c0_i32 = arith.constant 0 : i32
    %c0_i32_0 = arith.constant 0 : i32
    return %arg0, %c0_i32, %2 : i32, i32, i32
  }
  func.func @transform_3(%arg0: i32, %arg1: i32) -> (i32, i32, i32) {
    %c0_i32 = arith.constant 0 : i32
    %c0_i32_0 = arith.constant 0 : i32
    return %arg0, %c0_i32, %arg1 : i32, i32, i32
  }
  func.func @transform_4(%arg0: i32, %arg1: i32) -> (i32, i32) {
    %c0_i32 = arith.constant 0 : i32
    %c0_i32_0 = arith.constant 0 : i32
    %c0_i32_1 = arith.constant 0 : i32
    return %c0_i32, %c0_i32_0 : i32, i32
  }
  func.func @transform_5(%arg0: i32, %arg1: i32) -> (i32, i32) {
    %c0_i32 = arith.constant 0 : i32
    %c0_i32_0 = arith.constant 0 : i32
    %c0_i32_1 = arith.constant 0 : i32
    return %c0_i32, %c0_i32_0 : i32, i32
  }
  func.func @transform_6(%arg0: i32, %arg1: i32) -> i32 {
    %c0_i32 = arith.constant 0 : i32
    %c0_i32_0 = arith.constant 0 : i32
    return %c0_i32 : i32
  }
  func.func @transform_7(%arg0: i32, %arg1: i32) -> (i32, i32, i32) {
    %c0_i32 = arith.constant 0 : i32
    %c0_i32_0 = arith.constant 0 : i32
    return %arg0, %c0_i32, %arg1 : i32, i32, i32
  }
}

</mosaic_0001>

<llo_original>
// kernel: image_reconstruction.1
$region0: #{image_reconstruction.1}
  #allocation0 [shape = 'u32[]', space=smem, size = 0x4, offset = 0x4, fixed_abs, tag = 'smem constant byte address 0x4 - core index']
  #allocation1 [shape = 'u32[144,128]{1,0:T(1,128)}', space=vmem, size = 0x12000, scoped, tag = 'internal scratch']
  #allocation2 [shape = 'f32[16,768]{1,0:T(8,128)}', space=vmem, size = 0xc000, scoped, tag = 'scratch operand']
  #allocation3 [shape = 'f32[1]{0:T(128)S(6)}', space=smem, size = 0x200, scoped, tag = 'scoped memory for image_reconstruction.1']
  %s0 = inlined_call_operand.vmem [shape: f32[2,64,1024], index: 0, kind: input, shape index: {}, may-alias: {0,1,2}]
  %s1 = inlined_call_operand.vmem [shape: f32[2,64,1024], index: 1, kind: input, shape index: {}, may-alias: {0,1,2}]
  %s2 = inlined_call_operand.vmem [shape: f32[2,64,1024], index: 2, kind: input, shape index: {}, may-alias: {0,1,2}]
  %s3 = inlined_call_operand.vmem [shape: f32[2,1,1024], index: 3, kind: input, shape index: {}]
  %s4 = inlined_call_operand.vmem [shape: f32[16,64], index: 4, kind: input, shape index: {}]
  %s5 = inlined_call_operand.vmem [shape: f32[2,512], index: 5, kind: input, shape index: {}]
  %s6 = inlined_call_operand.<no memory space> [shape: f32[1], index: 6, kind: input, shape index: {}]
  %s7 = inlined_call_operand.vmem [shape: f32[2,1,1024], index: 7, kind: output, shape index: {}]
  %s8 = sld [smem:[#allocation0]]
  $region160: #{image_reconstruction.1} parent=0
    _
  %s10 = ssub.s32 1, %s8
  %s11 = scalar_select 0, %s10, %s8
  %12 = sst [smem:[#allocation3]] %s6
  $region1: #{image_reconstruction.1} parent=0
    #allocation4 [shape = 'u8[262144]{0}', space=vmem, size = 0x40000, scoped, tag = 'input window, operand 0']
    #allocation5 [shape = 'u8[65536]{0}', space=vmem, size = 0x10000, scoped, tag = 'input window, operand 1']
    #allocation6 [shape = 'u8[65536]{0}', space=vmem, size = 0x10000, scoped, tag = 'input window, operand 2']
    loop: start=0, step=1, limit=6
    $region2: #{image_reconstruction.1} parent=1 // loop_pre_header
      _
    $region3: #{image_reconstruction.1} parent=1 // loop_header
      %s14 = sphi 0, %s18
      %p15 = scmp.ge.s32.totalorder %s14, 6
      %s21 = sphi 0, %s33
      %s22 = sphi 0, %s29
      %s23 = sphi 0, %s21
      %s24 = sphi 0, %s22
      %s25 = sphi 0, %s23
      %s26 = sphi 0, %s24
      %s38 = sphi 0, %s40
      %s41 = sphi 0, %s38
      %s42 = sphi 0, %s41
      %s58 = sphi 0, %s42
      %s74 = sphi 0, %s76
      %s77 = sphi 0, %s74
      %s78 = sphi 0, %s77
      %s94 = sphi 0, %s78
      %s110 = sphi 0, %s112
      %s113 = sphi 0, %s110
      %s114 = sphi 0, %s113
      %s130 = sphi 0, %s114
      %s138 = sphi 0, %s140
      %s141 = sphi 0, %s138
      %s142 = sphi 0, %s141
      %s158 = sphi 0, %s142
      %s162 = sphi 0, %s162
      %s164 = sphi 0, %s162
      %s165 = sphi 0, %s164
      %s179 = sphi 0, %s165
      %s183 = sphi 0, %s183
      %s185 = sphi 0, %s183
      %s186 = sphi 0, %s185
      %s200 = sphi 0, %s186
      %s204 = sphi 0, %s204
      %s206 = sphi 0, %s204
      %s207 = sphi 0, %s206
      %s221 = sphi 0, %s207
      %s229 = sphi 0, %s231
      %s232 = sphi 0, %s229
      %s233 = sphi 0, %s232
      %s249 = sphi 0, %s233
    $region4: #{image_reconstruction.1} parent=1 // loop_header_branch
      %17 = sbr.rel (%p15) target = $region8
    $region5: #{image_reconstruction.1} parent=1 // loop_body
      %s19 = ssub.s32 %s14, 1
      %s20 = ssub.s32 %s14, 2
      %s27 = sadd.s32 1, %s22
      %p28 = scmp.ge.s32.totalorder %s27, 2
      %s29 = scalar_select %p28, 0, %s27
      %s30 = sadd.s32 1, %s21
      %s31 = scalar_select %p28, %s30, %s21
      %p32 = scmp.ge.s32.totalorder %s31, 2
      %s33 = scalar_select %p32, 0, %s31
      %s34 = ssub.s32 %s21, %s33
      %s35 = ssub.s32 %s22, %s29
      %s36 = sor.u32 %s34, %s35
      %p37 = scmp.eq.s32.totalorder %s36, 0
      %s39 = sadd.s32 %s38, 1
      %s40 = scalar_select %p37, %s38, %s39
      %p43 = pneg %p37
      %p44 = scmp.eq.s32.totalorder %s14, 3
      %p45 = por %p43, %p44
      %p46 = scmp.ne.s32.totalorder %s38, %s41
      %p47 = scmp.eq.s32.totalorder %s14, 0
      %p48 = por %p46, %p47
      %p49 = scmp.ne.s32.totalorder %s38, %s41
      %p50 = scmp.eq.s32.totalorder %s19, 3
      %p51 = por %p49, %p50
      %p52 = scmp.ne.s32.totalorder %s41, %s42
      %p53 = scmp.eq.s32.totalorder %s19, 0
      %p54 = por %p52, %p53
      %p55 = scmp.ne.s32.totalorder %s41, %s42
      %p56 = scmp.eq.s32.totalorder %s20, 3
      %p57 = por %p55, %p56
      %p59 = scmp.ne.s32.totalorder %s42, %s58
      %p60 = scmp.eq.s32.totalorder %s20, 0
      %p61 = por %p59, %p60
      %s62 = smul.u32 %s22, 4
      %s63 = ssub.s32 %s62, 1
      %p64 = scmp.gt.s32.totalorder %s63, 0
      %s65 = scalar_select %p64, %s63, 0
      %s66 = smul.u32 %s29, 4
      %s67 = ssub.s32 %s66, 1
      %p68 = scmp.gt.s32.totalorder %s67, 0
      %s69 = scalar_select %p68, %s67, 0
      %s70 = ssub.s32 %s21, %s33
      %s71 = ssub.s32 %s65, %s69
      %s72 = sor.u32 %s70, %s71
      %p73 = scmp.eq.s32.totalorder %s72, 0
      %s75 = sadd.s32 %s74, 1
      %s76 = scalar_select %p73, %s74, %s75
      %p79 = pneg %p73
      %p80 = scmp.eq.s32.totalorder %s14, 3
      %p81 = por %p79, %p80
      %p82 = scmp.ne.s32.totalorder %s74, %s77
      %p83 = scmp.eq.s32.totalorder %s14, 0
      %p84 = por %p82, %p83
      %p85 = scmp.ne.s32.totalorder %s74, %s77
      %p86 = scmp.eq.s32.totalorder %s19, 3
      %p87 = por %p85, %p86
      %p88 = scmp.ne.s32.totalorder %s77, %s78
      %p89 = scmp.eq.s32.totalorder %s19, 0
      %p90 = por %p88, %p89
      %p91 = scmp.ne.s32.totalorder %s77, %s78
      %p92 = scmp.eq.s32.totalorder %s20, 3
      %p93 = por %p91, %p92
      %p95 = scmp.ne.s32.totalorder %s78, %s94
      %p96 = scmp.eq.s32.totalorder %s20, 0
      %p97 = por %p95, %p96
      %s98 = sadd.s32 %s22, 1
      %s99 = smul.u32 %s98, 4
      %p100 = scmp.lt.s32.totalorder %s99, 7
      %s101 = scalar_select %p100, %s99, 7
      %s102 = sadd.s32 %s29, 1
      %s103 = smul.u32 %s102, 4
      %p104 = scmp.lt.s32.totalorder %s103, 7
      %s105 = scalar_select %p104, %s103, 7
      %s106 = ssub.s32 %s21, %s33
      %s107 = ssub.s32 %s101, %s105
      %s108 = sor.u32 %s106, %s107
      %p109 = scmp.eq.s32.totalorder %s108, 0
      %s111 = sadd.s32 %s110, 1
      %s112 = scalar_select %p109, %s110, %s111
      %p115 = pneg %p109
      %p116 = scmp.eq.s32.totalorder %s14, 3
      %p117 = por %p115, %p116
      %p118 = scmp.ne.s32.totalorder %s110, %s113
      %p119 = scmp.eq.s32.totalorder %s14, 0
      %p120 = por %p118, %p119
      %p121 = scmp.ne.s32.totalorder %s110, %s113
      %p122 = scmp.eq.s32.totalorder %s19, 3
      %p123 = por %p121, %p122
      %p124 = scmp.ne.s32.totalorder %s113, %s114
      %p125 = scmp.eq.s32.totalorder %s19, 0
      %p126 = por %p124, %p125
      %p127 = scmp.ne.s32.totalorder %s113, %s114
      %p128 = scmp.eq.s32.totalorder %s20, 3
      %p129 = por %p127, %p128
      %p131 = scmp.ne.s32.totalorder %s114, %s130
      %p132 = scmp.eq.s32.totalorder %s20, 0
      %p133 = por %p131, %p132
      %s134 = ssub.s32 %s21, %s33
      %s135 = ssub.s32 %s22, %s29
      %s136 = sor.u32 %s134, %s135
      %p137 = scmp.eq.s32.totalorder %s136, 0
      %s139 = sadd.s32 %s138, 1
      %s140 = scalar_select %p137, %s138, %s139
      %p143 = pneg %p137
      %p144 = scmp.eq.s32.totalorder %s14, 3
      %p145 = por %p143, %p144
      %p146 = scmp.ne.s32.totalorder %s138, %s141
      %p147 = scmp.eq.s32.totalorder %s14, 0
      %p148 = por %p146, %p147
      %p149 = scmp.ne.s32.totalorder %s138, %s141
      %p150 = scmp.eq.s32.totalorder %s19, 3
      %p151 = por %p149, %p150
      %p152 = scmp.ne.s32.totalorder %s141, %s142
      %p153 = scmp.eq.s32.totalorder %s19, 0
      %p154 = por %p152, %p153
      %p155 = scmp.ne.s32.totalorder %s141, %s142
      %p156 = scmp.eq.s32.totalorder %s20, 3
      %p157 = por %p155, %p156
      %p159 = scmp.ne.s32.totalorder %s142, %s158
      %p160 = scmp.eq.s32.totalorder %s20, 0
      %p161 = por %p159, %p160
      %s163 = sadd.s32 %s162, 1
      %p166 = scmp.eq.s32.totalorder %s14, 3
      %p167 = scmp.ne.s32.totalorder %s162, %s164
      %p168 = scmp.eq.s32.totalorder %s14, 0
      %p169 = por %p167, %p168
      %p170 = scmp.ne.s32.totalorder %s162, %s164
      %p171 = scmp.eq.s32.totalorder %s19, 3
      %p172 = por %p170, %p171
      %p173 = scmp.ne.s32.totalorder %s164, %s165
      %p174 = scmp.eq.s32.totalorder %s19, 0
      %p175 = por %p173, %p174
      %p176 = scmp.ne.s32.totalorder %s164, %s165
      %p177 = scmp.eq.s32.totalorder %s20, 3
      %p178 = por %p176, %p177
      %p180 = scmp.ne.s32.totalorder %s165, %s179
      %p181 = scmp.eq.s32.totalorder %s20, 0
      %p182 = por %p180, %p181
      %s184 = sadd.s32 %s183, 1
      %p187 = scmp.eq.s32.totalorder %s14, 3
      %p188 = scmp.ne.s32.totalorder %s183, %s185
      %p189 = scmp.eq.s32.totalorder %s14, 0
      %p190 = por %p188, %p189
      %p191 = scmp.ne.s32.totalorder %s183, %s185
      %p192 = scmp.eq.s32.totalorder %s19, 3
      %p193 = por %p191, %p192
      %p194 = scmp.ne.s32.totalorder %s185, %s186
      %p195 = scmp.eq.s32.totalorder %s19, 0
      %p196 = por %p194, %p195
      %p197 = scmp.ne.s32.totalorder %s185, %s186
      %p198 = scmp.eq.s32.totalorder %s20, 3
      %p199 = por %p197, %p198
      %p201 = scmp.ne.s32.totalorder %s186, %s200
      %p202 = scmp.eq.s32.totalorder %s20, 0
      %p203 = por %p201, %p202
      %s205 = sadd.s32 %s204, 1
      %p208 = scmp.eq.s32.totalorder %s14, 3
      %p209 = scmp.ne.s32.totalorder %s204, %s206
      %p210 = scmp.eq.s32.totalorder %s14, 0
      %p211 = por %p209, %p210
      %p212 = scmp.ne.s32.totalorder %s204, %s206
      %p213 = scmp.eq.s32.totalorder %s19, 3
      %p214 = por %p212, %p213
      %p215 = scmp.ne.s32.totalorder %s206, %s207
      %p216 = scmp.eq.s32.totalorder %s19, 0
      %p217 = por %p215, %p216
      %p218 = scmp.ne.s32.totalorder %s206, %s207
      %p219 = scmp.eq.s32.totalorder %s20, 3
      %p220 = por %p218, %p219
      %p222 = scmp.ne.s32.totalorder %s207, %s221
      %p223 = scmp.eq.s32.totalorder %s20, 0
      %p224 = por %p222, %p223
      %s225 = ssub.s32 %s21, %s33
      %s226 = ssub.s32 %s22, %s29
      %s227 = sor.u32 %s225, %s226
      %p228 = scmp.eq.s32.totalorder %s227, 0
      %s230 = sadd.s32 %s229, 1
      %s231 = scalar_select %p228, %s229, %s230
      %p234 = pneg %p228
      %p235 = scmp.eq.s32.totalorder %s14, 3
      %p236 = por %p234, %p235
      %p237 = scmp.ne.s32.totalorder %s229, %s232
      %p238 = scmp.eq.s32.totalorder %s14, 0
      %p239 = por %p237, %p238
      %p240 = scmp.ne.s32.totalorder %s229, %s232
      %p241 = scmp.eq.s32.totalorder %s19, 3
      %p242 = por %p240, %p241
      %p243 = scmp.ne.s32.totalorder %s232, %s233
      %p244 = scmp.eq.s32.totalorder %s19, 0
      %p245 = por %p243, %p244
      %p246 = scmp.ne.s32.totalorder %s232, %s233
      %p247 = scmp.eq.s32.totalorder %s20, 3
      %p248 = por %p246, %p247
      %p250 = scmp.ne.s32.totalorder %s233, %s249
      %p251 = scmp.eq.s32.totalorder %s20, 0
      %p252 = por %p250, %p251
      %p253 = scmp.le.s32.totalorder 1, %s14
      %p254 = scmp.lt.s32.totalorder %s14, 5
      %p255 = pnand %p253, %p254
      %p256 = pneg %p255
      // Predicated region
      $region9: #{image_reconstruction.1} parent=5 // pred_check
        _
      $region10: #{image_reconstruction.1} parent=5 // pred_check_branch
        %258 = sbr.rel (%p255) target = $region12
      $region11: #{image_reconstruction.1} parent=5 // pred_region
        %s259 = ssub.s32 %s14, 1
        // Predicated region
        $region13: #{image_reconstruction.1} parent=11 // pred_check
          %p260 = pneg %p175
        $region14: #{image_reconstruction.1} parent=11 // pred_check_branch
          %262 = sbr.rel (%p260) target = $region16
        $region15: #{image_reconstruction.1} parent=11 // pred_region
          _
        $region16: #{image_reconstruction.1} parent=11 // pred_fallthru
          _
        // Predicated region
        $region17: #{image_reconstruction.1} parent=11 // pred_check
          %p263 = pneg %p196
        $region18: #{image_reconstruction.1} parent=11 // pred_check_branch
          %265 = sbr.rel (%p263) target = $region20
        $region19: #{image_reconstruction.1} parent=11 // pred_region
          _
        $region20: #{image_reconstruction.1} parent=11 // pred_fallthru
          _
        // Predicated region
        $region21: #{image_reconstruction.1} parent=11 // pred_check
          %p266 = pneg %p217
        $region22: #{image_reconstruction.1} parent=11 // pred_check_branch
          %268 = sbr.rel (%p266) target = $region24
        $region23: #{image_reconstruction.1} parent=11 // pred_region
          _
        $region24: #{image_reconstruction.1} parent=11 // pred_fallthru
          _
      $region12: #{image_reconstruction.1} parent=5 // pred_fallthru
        _
      %p269 = scmp.lt.s32.totalorder %s14, 4
      // Predicated region
      $region25: #{image_reconstruction.1} parent=5 // pred_check
        %p270 = pneg %p269
      $region26: #{image_reconstruction.1} parent=5 // pred_check_branch
        %272 = sbr.rel (%p270) target = $region28
      $region27: #{image_reconstruction.1} parent=5 // pred_region
        // Predicated region
        $region29: #{image_reconstruction.1} parent=27 // pred_check
          %p273 = pneg %p48
        $region30: #{image_reconstruction.1} parent=27 // pred_check_branch
          %275 = sbr.rel (%p273) target = $region32
        $region31: #{image_reconstruction.1} parent=27 // pred_region
          %s276 = sand.u32 %s38, 1
          %s277 = sand.u32 %s38, 1
          %s278 = smul.addr %s277, 256
          %s279 = scalar_lea.vmem [#allocation4], %s278
          %s280 = smul.u32 4, %s22
          %s281 = smul.addr %s21, 64
          %s282 = sadd.s32 %s280, %s281
          %s283 = smul.addr %s282, 8
          %s284 = scalar_lea.vmem %s0, %s283
          // Predicated region
          $region33: #{image_reconstruction.1} parent=31 // pred_check
            _
          $region34: #{image_reconstruction.1} parent=31 // pred_check_branch
            %286 = sbr.rel (0) target = $region36
          $region35: #{image_reconstruction.1} parent=31 // pred_region
            // Predicated region
            $region37: #{image_reconstruction.1} parent=35 // pred_check
              _
            $region38: #{image_reconstruction.1} parent=35 // pred_check_branch
              %288 = sbr.rel (0) target = $region40
            $region39: #{image_reconstruction.1} parent=35 // pred_region
              loop: start=0, step=1, limit=1
              $region41: #{image_reconstruction.1} parent=39 // loop_pre_header
                _
              $region42: #{image_reconstruction.1} parent=39 // loop_header
                %s290 = sphi 0, %s294
                %p291 = scmp.ge.s32.totalorder %s290, 1
                %s295 = sphi %s284, %s284
                %s296 = sphi %s279, %s279
              $region43: #{image_reconstruction.1} parent=39 // loop_header_branch
                %293 = sbr.rel (%p291) target = $region47
              $region44: #{image_reconstruction.1} parent=39 // loop_body
                %v297 = vld [vmem:[%s295] sm:$0xff]
                %298 = vst [vmem:[%s296] sm:$0xff] %v297
                %v299 = vld [vmem:[%s295 + $0x8] sm:$0xff]
                %300 = vst [vmem:[%s296 + $0x8] sm:$0xff] %v299
                %v301 = vld [vmem:[%s295 + $0x10] sm:$0xff]
                %302 = vst [vmem:[%s296 + $0x10] sm:$0xff] %v301
                %v303 = vld [vmem:[%s295 + $0x18] sm:$0xff]
                %304 = vst [vmem:[%s296 + $0x18] sm:$0xff] %v303
                %v305 = vld [vmem:[%s295 + $0x40] sm:$0xff]
                %306 = vst [vmem:[%s296 + $0x20] sm:$0xff] %v305
                %v307 = vld [vmem:[%s295 + $0x48] sm:$0xff]
                %308 = vst [vmem:[%s296 + $0x28] sm:$0xff] %v307
                %v309 = vld [vmem:[%s295 + $0x50] sm:$0xff]
                %310 = vst [vmem:[%s296 + $0x30] sm:$0xff] %v309
                %v311 = vld [vmem:[%s295 + $0x58] sm:$0xff]
                %312 = vst [vmem:[%s296 + $0x38] sm:$0xff] %v311
                %v313 = vld [vmem:[%s295 + $0x80] sm:$0xff]
                %314 = vst [vmem:[%s296 + $0x40] sm:$0xff] %v313
                %v315 = vld [vmem:[%s295 + $0x88] sm:$0xff]
                %316 = vst [vmem:[%s296 + $0x48] sm:$0xff] %v315
                %v317 = vld [vmem:[%s295 + $0x90] sm:$0xff]
                %318 = vst [vmem:[%s296 + $0x50] sm:$0xff] %v317
                %v319 = vld [vmem:[%s295 + $0x98] sm:$0xff]
                %320 = vst [vmem:[%s296 + $0x58] sm:$0xff] %v319
                %v321 = vld [vmem:[%s295 + $0xc0] sm:$0xff]
                %322 = vst [vmem:[%s296 + $0x60] sm:$0xff] %v321
                %v323 = vld [vmem:[%s295 + $0xc8] sm:$0xff]
                %324 = vst [vmem:[%s296 + $0x68] sm:$0xff] %v323
                %v325 = vld [vmem:[%s295 + $0xd0] sm:$0xff]
                %326 = vst [vmem:[%s296 + $0x70] sm:$0xff] %v325
                %v327 = vld [vmem:[%s295 + $0xd8] sm:$0xff]
                %328 = vst [vmem:[%s296 + $0x78] sm:$0xff] %v327
                %v329 = vld [vmem:[%s295 + $0x100] sm:$0xff]
                %330 = vst [vmem:[%s296 + $0x80] sm:$0xff] %v329
                %v331 = vld [vmem:[%s295 + $0x108] sm:$0xff]
                %332 = vst [vmem:[%s296 + $0x88] sm:$0xff] %v331
                %v333 = vld [vmem:[%s295 + $0x110] sm:$0xff]
                %334 = vst [vmem:[%s296 + $0x90] sm:$0xff] %v333
                %v335 = vld [vmem:[%s295 + $0x118] sm:$0xff]
                %336 = vst [vmem:[%s296 + $0x98] sm:$0xff] %v335
                %v337 = vld [vmem:[%s295 + $0x140] sm:$0xff]
                %338 = vst [vmem:[%s296 + $0xa0] sm:$0xff] %v337
                %v339 = vld [vmem:[%s295 + $0x148] sm:$0xff]
                %340 = vst [vmem:[%s296 + $0xa8] sm:$0xff] %v339
                %v341 = vld [vmem:[%s295 + $0x150] sm:$0xff]
                %342 = vst [vmem:[%s296 + $0xb0] sm:$0xff] %v341
                %v343 = vld [vmem:[%s295 + $0x158] sm:$0xff]
                %344 = vst [vmem:[%s296 + $0xb8] sm:$0xff] %v343
                %v345 = vld [vmem:[%s295 + $0x180] sm:$0xff]
                %346 = vst [vmem:[%s296 + $0xc0] sm:$0xff] %v345
                %v347 = vld [vmem:[%s295 + $0x188] sm:$0xff]
                %348 = vst [vmem:[%s296 + $0xc8] sm:$0xff] %v347
                %v349 = vld [vmem:[%s295 + $0x190] sm:$0xff]
                %350 = vst [vmem:[%s296 + $0xd0] sm:$0xff] %v349
                %v351 = vld [vmem:[%s295 + $0x198] sm:$0xff]
                %352 = vst [vmem:[%s296 + $0xd8] sm:$0xff] %v351
                %v353 = vld [vmem:[%s295 + $0x1c0] sm:$0xff]
                %354 = vst [vmem:[%s296 + $0xe0] sm:$0xff] %v353
                %v355 = vld [vmem:[%s295 + $0x1c8] sm:$0xff]
                %356 = vst [vmem:[%s296 + $0xe8] sm:$0xff] %v355
                %v357 = vld [vmem:[%s295 + $0x1d0] sm:$0xff]
                %358 = vst [vmem:[%s296 + $0xf0] sm:$0xff] %v357
                %v359 = vld [vmem:[%s295 + $0x1d8] sm:$0xff]
                %360 = vst [vmem:[%s296 + $0xf8] sm:$0xff] %v359
              $region45: #{image_reconstruction.1} parent=39 // loop_footer
                %s294 = sadd.s32 1, %s290
              $region46: #{image_reconstruction.1} parent=39 // loop_footer_branch
                %289 = sbr.rel target = $region42
              $region47: #{image_reconstruction.1} parent=39 // loop_exit
                _
            $region40: #{image_reconstruction.1} parent=35 // pred_fallthru
              _
            // Predicated region
            $region48: #{image_reconstruction.1} parent=35 // pred_check
              _
            $region49: #{image_reconstruction.1} parent=35 // pred_check_branch
              %362 = sbr.rel target = $region51
            $region50: #{image_reconstruction.1} parent=35 // pred_region
              _
            $region51: #{image_reconstruction.1} parent=35 // pred_fallthru
              _
          $region36: #{image_reconstruction.1} parent=31 // pred_fallthru
            _
          %363 = vnop
        $region32: #{image_reconstruction.1} parent=27 // pred_fallthru
          _
        // Predicated region
        $region52: #{image_reconstruction.1} parent=27 // pred_check
          %p364 = pneg %p84
        $region53: #{image_reconstruction.1} parent=27 // pred_check_branch
          %366 = sbr.rel (%p364) target = $region55
        $region54: #{image_reconstruction.1} parent=27 // pred_region
          %s367 = sand.u32 %s74, 1
          %s368 = sand.u32 %s74, 1
          %s369 = smul.addr %s368, 64
          %s370 = scalar_lea.vmem [#allocation5], %s369
          %s371 = smul.u32 %s22, 4
          %s372 = ssub.s32 %s371, 1
          %p373 = scmp.gt.s32.totalorder %s372, 0
          %s374 = scalar_select %p373, %s372, 0
          %s375 = smul.addr %s21, 64
          %s376 = sadd.s32 %s374, %s375
          %s377 = smul.addr %s376, 8
          %s378 = scalar_lea.vmem %s1, %s377
          // Predicated region
          $region56: #{image_reconstruction.1} parent=54 // pred_check
            _
          $region57: #{image_reconstruction.1} parent=54 // pred_check_branch
            %380 = sbr.rel (0) target = $region59
          $region58: #{image_reconstruction.1} parent=54 // pred_region
            // Predicated region
            $region60: #{image_reconstruction.1} parent=58 // pred_check
              _
            $region61: #{image_reconstruction.1} parent=58 // pred_check_branch
              %382 = sbr.rel (0) target = $region63
            $region62: #{image_reconstruction.1} parent=58 // pred_region
              // Predicated region
              $region75: #{image_reconstruction.1} parent=62 // pred_check
                _
              $region76: #{image_reconstruction.1} parent=62 // pred_check_branch
                %411 = sbr.rel (0) target = $region78
              $region77: #{image_reconstruction.1} parent=62 // pred_region
                loop: start=0, step=1, limit=1
                $region79: #{image_reconstruction.1} parent=77 // loop_pre_header
                  _
                $region80: #{image_reconstruction.1} parent=77 // loop_header
                  %s413 = sphi 0, %s417
                  %p414 = scmp.ge.s32.totalorder %s413, 1
                  %s418 = sphi %s378, %s378
                  %s419 = sphi %s370, %s370
                $region81: #{image_reconstruction.1} parent=77 // loop_header_branch
                  %416 = sbr.rel (%p414) target = $region85
                $region82: #{image_reconstruction.1} parent=77 // loop_body
                  %v420 = vld [vmem:[%s418] sm:$0xff]
                  %421 = vst [vmem:[%s419] sm:$0xff] %v420
                  %v422 = vld [vmem:[%s418 + $0x40] sm:$0xff]
                  %423 = vst [vmem:[%s419 + $0x8] sm:$0xff] %v422
                  %v424 = vld [vmem:[%s418 + $0x80] sm:$0xff]
                  %425 = vst [vmem:[%s419 + $0x10] sm:$0xff] %v424
                  %v426 = vld [vmem:[%s418 + $0xc0] sm:$0xff]
                  %427 = vst [vmem:[%s419 + $0x18] sm:$0xff] %v426
                  %v428 = vld [vmem:[%s418 + $0x100] sm:$0xff]
                  %429 = vst [vmem:[%s419 + $0x20] sm:$0xff] %v428
                  %v430 = vld [vmem:[%s418 + $0x140] sm:$0xff]
                  %431 = vst [vmem:[%s419 + $0x28] sm:$0xff] %v430
                  %v432 = vld [vmem:[%s418 + $0x180] sm:$0xff]
                  %433 = vst [vmem:[%s419 + $0x30] sm:$0xff] %v432
                  %v434 = vld [vmem:[%s418 + $0x1c0] sm:$0xff]
                  %435 = vst [vmem:[%s419 + $0x38] sm:$0xff] %v434
                $region83: #{image_reconstruction.1} parent=77 // loop_footer
                  %s417 = sadd.s32 1, %s413
                $region84: #{image_reconstruction.1} parent=77 // loop_footer_branch
                  %412 = sbr.rel target = $region80
                $region85: #{image_reconstruction.1} parent=77 // loop_exit
                  _
              $region78: #{image_reconstruction.1} parent=62 // pred_fallthru
                _
              // Predicated region
              $region86: #{image_reconstruction.1} parent=62 // pred_check
                _
              $region87: #{image_reconstruction.1} parent=62 // pred_check_branch
                %437 = sbr.rel target = $region89
              $region88: #{image_reconstruction.1} parent=62 // pred_region
                _
              $region89: #{image_reconstruction.1} parent=62 // pred_fallthru
                _
            $region63: #{image_reconstruction.1} parent=58 // pred_fallthru
              _
            // Predicated region
            $region64: #{image_reconstruction.1} parent=58 // pred_check
              _
            $region65: #{image_reconstruction.1} parent=58 // pred_check_branch
              %384 = sbr.rel target = $region67
            $region66: #{image_reconstruction.1} parent=58 // pred_region
              loop: start=0, step=1, limit=1
              $region68: #{image_reconstruction.1} parent=66 // loop_pre_header
                _
              $region69: #{image_reconstruction.1} parent=66 // loop_header
                %s387 = sphi 0, %s391
                %p388 = scmp.ge.s32.totalorder %s387, 1
                %s392 = sphi %s378, %s378
                %s393 = sphi %s370, %s370
              $region70: #{image_reconstruction.1} parent=66 // loop_header_branch
                %390 = sbr.rel (%p388) target = $region74
              $region71: #{image_reconstruction.1} parent=66 // loop_body
                %v394 = vld [vmem:[%s392] sm:$0xff]
                %395 = vst [vmem:[%s393] sm:$0xff] %v394
                %v396 = vld [vmem:[%s392 + $0x40] sm:$0xff]
                %397 = vst [vmem:[%s393 + $0x8] sm:$0xff] %v396
                %v398 = vld [vmem:[%s392 + $0x80] sm:$0xff]
                %399 = vst [vmem:[%s393 + $0x10] sm:$0xff] %v398
                %v400 = vld [vmem:[%s392 + $0xc0] sm:$0xff]
                %401 = vst [vmem:[%s393 + $0x18] sm:$0xff] %v400
                %v402 = vld [vmem:[%s392 + $0x100] sm:$0xff]
                %403 = vst [vmem:[%s393 + $0x20] sm:$0xff] %v402
                %v404 = vld [vmem:[%s392 + $0x140] sm:$0xff]
                %405 = vst [vmem:[%s393 + $0x28] sm:$0xff] %v404
                %v406 = vld [vmem:[%s392 + $0x180] sm:$0xff]
                %407 = vst [vmem:[%s393 + $0x30] sm:$0xff] %v406
                %v408 = vld [vmem:[%s392 + $0x1c0] sm:$0xff]
                %409 = vst [vmem:[%s393 + $0x38] sm:$0xff] %v408
              $region72: #{image_reconstruction.1} parent=66 // loop_footer
                %s391 = sadd.s32 1, %s387
              $region73: #{image_reconstruction.1} parent=66 // loop_footer_branch
                %386 = sbr.rel target = $region69
              $region74: #{image_reconstruction.1} parent=66 // loop_exit
                _
            $region67: #{image_reconstruction.1} parent=58 // pred_fallthru
              _
          $region59: #{image_reconstruction.1} parent=54 // pred_fallthru
            _
          %438 = vnop
        $region55: #{image_reconstruction.1} parent=27 // pred_fallthru
          _
        // Predicated region
        $region90: #{image_reconstruction.1} parent=27 // pred_check
          %p439 = pneg %p120
        $region91: #{image_reconstruction.1} parent=27 // pred_check_branch
          %441 = sbr.rel (%p439) target = $region93
        $region92: #{image_reconstruction.1} parent=27 // pred_region
          %s442 = sand.u32 %s110, 1
          %s443 = sand.u32 %s110, 1
          %s444 = smul.addr %s443, 64
          %s445 = scalar_lea.vmem [#allocation6], %s444
          %s446 = sadd.s32 %s22, 1
          %s447 = smul.u32 %s446, 4
          %p448 = scmp.lt.s32.totalorder %s447, 7
          %s449 = scalar_select %p448, %s447, 7
          %s450 = smul.addr %s21, 64
          %s451 = sadd.s32 %s449, %s450
          %s452 = smul.addr %s451, 8
          %s453 = scalar_lea.vmem %s2, %s452
          // Predicated region
          $region94: #{image_reconstruction.1} parent=92 // pred_check
            _
          $region95: #{image_reconstruction.1} parent=92 // pred_check_branch
            %455 = sbr.rel (0) target = $region97
          $region96: #{image_reconstruction.1} parent=92 // pred_region
            // Predicated region
            $region98: #{image_reconstruction.1} parent=96 // pred_check
              _
            $region99: #{image_reconstruction.1} parent=96 // pred_check_branch
              %457 = sbr.rel (0) target = $region101
            $region100: #{image_reconstruction.1} parent=96 // pred_region
              // Predicated region
              $region113: #{image_reconstruction.1} parent=100 // pred_check
                _
              $region114: #{image_reconstruction.1} parent=100 // pred_check_branch
                %486 = sbr.rel (0) target = $region116
              $region115: #{image_reconstruction.1} parent=100 // pred_region
                loop: start=0, step=1, limit=1
                $region117: #{image_reconstruction.1} parent=115 // loop_pre_header
                  _
                $region118: #{image_reconstruction.1} parent=115 // loop_header
                  %s488 = sphi 0, %s492
                  %p489 = scmp.ge.s32.totalorder %s488, 1
                  %s493 = sphi %s453, %s453
                  %s494 = sphi %s445, %s445
                $region119: #{image_reconstruction.1} parent=115 // loop_header_branch
                  %491 = sbr.rel (%p489) target = $region123
                $region120: #{image_reconstruction.1} parent=115 // loop_body
                  %v495 = vld [vmem:[%s493] sm:$0xff]
                  %496 = vst [vmem:[%s494] sm:$0xff] %v495
                  %v497 = vld [vmem:[%s493 + $0x40] sm:$0xff]
                  %498 = vst [vmem:[%s494 + $0x8] sm:$0xff] %v497
                  %v499 = vld [vmem:[%s493 + $0x80] sm:$0xff]
                  %500 = vst [vmem:[%s494 + $0x10] sm:$0xff] %v499
                  %v501 = vld [vmem:[%s493 + $0xc0] sm:$0xff]
                  %502 = vst [vmem:[%s494 + $0x18] sm:$0xff] %v501
                  %v503 = vld [vmem:[%s493 + $0x100] sm:$0xff]
                  %504 = vst [vmem:[%s494 + $0x20] sm:$0xff] %v503
                  %v505 = vld [vmem:[%s493 + $0x140] sm:$0xff]
                  %506 = vst [vmem:[%s494 + $0x28] sm:$0xff] %v505
                  %v507 = vld [vmem:[%s493 + $0x180] sm:$0xff]
                  %508 = vst [vmem:[%s494 + $0x30] sm:$0xff] %v507
                  %v509 = vld [vmem:[%s493 + $0x1c0] sm:$0xff]
                  %510 = vst [vmem:[%s494 + $0x38] sm:$0xff] %v509
                $region121: #{image_reconstruction.1} parent=115 // loop_footer
                  %s492 = sadd.s32 1, %s488
                $region122: #{image_reconstruction.1} parent=115 // loop_footer_branch
                  %487 = sbr.rel target = $region118
                $region123: #{image_reconstruction.1} parent=115 // loop_exit
                  _
              $region116: #{image_reconstruction.1} parent=100 // pred_fallthru
                _
              // Predicated region
              $region124: #{image_reconstruction.1} parent=100 // pred_check
                _
              $region125: #{image_reconstruction.1} parent=100 // pred_check_branch
                %512 = sbr.rel target = $region127
              $region126: #{image_reconstruction.1} parent=100 // pred_region
                _
              $region127: #{image_reconstruction.1} parent=100 // pred_fallthru
                _
            $region101: #{image_reconstruction.1} parent=96 // pred_fallthru
              _
            // Predicated region
            $region102: #{image_reconstruction.1} parent=96 // pred_check
              _
            $region103: #{image_reconstruction.1} parent=96 // pred_check_branch
              %459 = sbr.rel target = $region105
            $region104: #{image_reconstruction.1} parent=96 // pred_region
              loop: start=0, step=1, limit=1
              $region106: #{image_reconstruction.1} parent=104 // loop_pre_header
                _
              $region107: #{image_reconstruction.1} parent=104 // loop_header
                %s462 = sphi 0, %s466
                %p463 = scmp.ge.s32.totalorder %s462, 1
                %s467 = sphi %s453, %s453
                %s468 = sphi %s445, %s445
              $region108: #{image_reconstruction.1} parent=104 // loop_header_branch
                %465 = sbr.rel (%p463) target = $region112
              $region109: #{image_reconstruction.1} parent=104 // loop_body
                %v469 = vld [vmem:[%s467] sm:$0xff]
                %470 = vst [vmem:[%s468] sm:$0xff] %v469
                %v471 = vld [vmem:[%s467 + $0x40] sm:$0xff]
                %472 = vst [vmem:[%s468 + $0x8] sm:$0xff] %v471
                %v473 = vld [vmem:[%s467 + $0x80] sm:$0xff]
                %474 = vst [vmem:[%s468 + $0x10] sm:$0xff] %v473
                %v475 = vld [vmem:[%s467 + $0xc0] sm:$0xff]
                %476 = vst [vmem:[%s468 + $0x18] sm:$0xff] %v475
                %v477 = vld [vmem:[%s467 + $0x100] sm:$0xff]
                %478 = vst [vmem:[%s468 + $0x20] sm:$0xff] %v477
                %v479 = vld [vmem:[%s467 + $0x140] sm:$0xff]
                %480 = vst [vmem:[%s468 + $0x28] sm:$0xff] %v479
                %v481 = vld [vmem:[%s467 + $0x180] sm:$0xff]
                %482 = vst [vmem:[%s468 + $0x30] sm:$0xff] %v481
                %v483 = vld [vmem:[%s467 + $0x1c0] sm:$0xff]
                %484 = vst [vmem:[%s468 + $0x38] sm:$0xff] %v483
              $region110: #{image_reconstruction.1} parent=104 // loop_footer
                %s466 = sadd.s32 1, %s462
              $region111: #{image_reconstruction.1} parent=104 // loop_footer_branch
                %461 = sbr.rel target = $region107
              $region112: #{image_reconstruction.1} parent=104 // loop_exit
                _
            $region105: #{image_reconstruction.1} parent=96 // pred_fallthru
              _
          $region97: #{image_reconstruction.1} parent=92 // pred_fallthru
            _
          %513 = vnop
        $region93: #{image_reconstruction.1} parent=27 // pred_fallthru
          _
        // Predicated region
        $region128: #{image_reconstruction.1} parent=27 // pred_check
          %p514 = pneg %p148
        $region129: #{image_reconstruction.1} parent=27 // pred_check_branch
          %516 = sbr.rel (%p514) target = $region131
        $region130: #{image_reconstruction.1} parent=27 // pred_region
          %s517 = smul.u32 4, %s22
          %p518 = scmp.lt.s32.totalorder %s21, 1
          %s519 = scalar_select %p518, %s21, 1
          %p520 = scmp.lt.s32.totalorder %s517, 7
          %s521 = scalar_select %p520, %s517, 7
          %s522 = smul.addr %s519, 8
          %s523 = sadd.s32 %s521, %s522
          %s524 = scalar_lea.vmem %s3, %s523
          %s525 = smul.u32 4, %s22
        $region131: #{image_reconstruction.1} parent=27 // pred_fallthru
          _
      $region28: #{image_reconstruction.1} parent=5 // pred_fallthru
        _
      %p526 = scmp.le.s32.totalorder 1, %s14
      %p527 = scmp.lt.s32.totalorder %s14, 5
      %p528 = pnand %p526, %p527
      %p529 = pneg %p528
      // Predicated region
      $region132: #{image_reconstruction.1} parent=5 // pred_check
        _
      $region133: #{image_reconstruction.1} parent=5 // pred_check_branch
        %531 = sbr.rel (%p528) target = $region135
      $region134: #{image_reconstruction.1} parent=5 // pred_region
        %s532 = ssub.s32 %s14, 1
        %s533 = sand.u32 %s41, 1
        %s534 = sand.u32 %s41, 1
        %s535 = smul.addr %s534, 256
        %s536 = scalar_lea.vmem [#allocation4], %s535
        // Predicated region
        $region136: #{image_reconstruction.1} parent=134 // pred_check
          %p537 = pneg %p54
        $region137: #{image_reconstruction.1} parent=134 // pred_check_branch
          %539 = sbr.rel (%p537) target = $region139
        $region138: #{image_reconstruction.1} parent=134 // pred_region
          _
        $region139: #{image_reconstruction.1} parent=134 // pred_fallthru
          _
        %s540 = sand.u32 %s77, 1
        %s541 = sand.u32 %s77, 1
        %s542 = smul.addr %s541, 64
        %s543 = scalar_lea.vmem [#allocation5], %s542
        // Predicated region
        $region140: #{image_reconstruction.1} parent=134 // pred_check
          %p544 = pneg %p90
        $region141: #{image_reconstruction.1} parent=134 // pred_check_branch
          %546 = sbr.rel (%p544) target = $region143
        $region142: #{image_reconstruction.1} parent=134 // pred_region
          _
        $region143: #{image_reconstruction.1} parent=134 // pred_fallthru
          _
        %s547 = sand.u32 %s113, 1
        %s548 = sand.u32 %s113, 1
        %s549 = smul.addr %s548, 64
        %s550 = scalar_lea.vmem [#allocation6], %s549
        // Predicated region
        $region144: #{image_reconstruction.1} parent=134 // pred_check
          %p551 = pneg %p126
        $region145: #{image_reconstruction.1} parent=134 // pred_check_branch
          %553 = sbr.rel (%p551) target = $region147
        $region146: #{image_reconstruction.1} parent=134 // pred_region
          _
        $region147: #{image_reconstruction.1} parent=134 // pred_fallthru
          _
        %s554 = sand.u32 %s41, 1
        %s555 = sand.u32 %s41, 1
        %s556 = smul.addr %s555, 256
        %s557 = scalar_lea.vmem [#allocation4], %s556
        %p558 = pneg %p54
        %p559 = pneg %p51
        %s560 = sand.u32 %s77, 1
        %s561 = sand.u32 %s77, 1
        %s562 = smul.addr %s561, 64
        %s563 = scalar_lea.vmem [#allocation5], %s562
        %p564 = pneg %p90
        %p565 = pneg %p87
        %s566 = sand.u32 %s113, 1
        %s567 = sand.u32 %s113, 1
        %s568 = smul.addr %s567, 64
        %s569 = scalar_lea.vmem [#allocation6], %s568
        %p570 = pneg %p126
        %p571 = pneg %p123
        %s572 = smul.u32 4, %s24
        %p573 = scmp.lt.s32.totalorder %s23, 1
        %s574 = scalar_select %p573, %s23, 1
        %p575 = scmp.lt.s32.totalorder %s572, 7
        %s576 = scalar_select %p575, %s572, 7
        %s577 = smul.addr %s574, 8
        %s578 = sadd.s32 %s576, %s577
        %s579 = scalar_lea.vmem %s3, %s578
        %p580 = pneg %p154
        %p581 = pneg %p151
        %p582 = pneg %p175
        %p583 = pneg %p172
        %p584 = pneg %p196
        %p585 = pneg %p193
        %p586 = pneg %p217
        %p587 = pneg %p214
        %p588 = pneg %p245
        %p589 = pneg %p242
        %s590 = smul.u32 4, %s24
        %p591 = scmp.lt.s32.totalorder %s23, 1
        %s592 = scalar_select %p591, %s23, 1
        %p593 = scmp.lt.s32.totalorder %s590, 7
        %s594 = scalar_select %p593, %s590, 7
        %s595 = smul.addr %s592, 8
        %s596 = sadd.s32 %s594, %s595
        %s597 = scalar_lea.vmem %s7, %s596
        %s598 = smul.u32 4, %s24
        %s599 = smul.u32 %s24, 4
        %s600 = ssub.s32 %s599, 1
        %p601 = scmp.gt.s32.totalorder %s600, 0
        %s602 = scalar_select %p601, %s600, 0
        %s603 = sadd.s32 %s24, 1
        %s604 = smul.u32 %s603, 4
        %p605 = scmp.lt.s32.totalorder %s604, 7
        %s606 = scalar_select %p605, %s604, 7
        %s607 = smul.u32 4, %s24
        %p608 = scmp.lt.s32.totalorder %s23, 1
        %s609 = scalar_select %p608, %s23, 1
        %p610 = scmp.lt.s32.totalorder %s607, 7
        %s611 = scalar_select %p610, %s607, 7
        %s612 = smul.addr %s609, 8
        %s613 = sadd.s32 %s611, %s612
        %s614 = scalar_lea.vmem %s3, %s613
        %s615 = smul.u32 4, %s24
        %s616 = smul.u32 4, %s24
        %p617 = scmp.lt.s32.totalorder %s23, 1
        %s618 = scalar_select %p617, %s23, 1
        %p619 = scmp.lt.s32.totalorder %s616, 7
        %s620 = scalar_select %p619, %s616, 7
        %s621 = smul.addr %s618, 8
        %s622 = sadd.s32 %s620, %s621
        %s623 = scalar_lea.vmem %s7, %s622
        %s624 = smul.u32 4, %s24
        %v625 = vld [vmem:[%s4] sm:$0xff]
        %v626 = vld [vmem:[%s4 + $0x8] sm:$0xff]
        %v627 = vld [vmem:[%s536] sm:$0xff]
        %v628 = vld [vmem:[%s536 + $0x8] sm:$0xff]
        %v629 = vld [vmem:[%s536 + $0x10] sm:$0xff]
        %v630 = vld [vmem:[%s536 + $0x18] sm:$0xff]
        %v631 = vld [vmem:[%s536 + $0x20] sm:$0xff]
        %v632 = vld [vmem:[%s536 + $0x28] sm:$0xff]
        %v633 = vld [vmem:[%s536 + $0x30] sm:$0xff]
        %v634 = vld [vmem:[%s536 + $0x38] sm:$0xff]
        %v635 = vld [vmem:[%s536 + $0x40] sm:$0xff]
        %v636 = vld [vmem:[%s536 + $0x48] sm:$0xff]
        %v637 = vld [vmem:[%s536 + $0x50] sm:$0xff]
        %v638 = vld [vmem:[%s536 + $0x58] sm:$0xff]
        %v639 = vld [vmem:[%s536 + $0x60] sm:$0xff]
        %v640 = vld [vmem:[%s536 + $0x68] sm:$0xff]
        %v641 = vld [vmem:[%s536 + $0x70] sm:$0xff]
        %v642 = vld [vmem:[%s536 + $0x78] sm:$0xff]
        %v643 = vld [vmem:[%s536 + $0x80] sm:$0xff]
        %v644 = vld [vmem:[%s536 + $0x88] sm:$0xff]
        %v645 = vld [vmem:[%s536 + $0x90] sm:$0xff]
        %v646 = vld [vmem:[%s536 + $0x98] sm:$0xff]
        %v647 = vld [vmem:[%s536 + $0xa0] sm:$0xff]
        %v648 = vld [vmem:[%s536 + $0xa8] sm:$0xff]
        %v649 = vld [vmem:[%s536 + $0xb0] sm:$0xff]
        %v650 = vld [vmem:[%s536 + $0xb8] sm:$0xff]
        %v651 = vld [vmem:[%s536 + $0xc0] sm:$0xff]
        %v652 = vld [vmem:[%s536 + $0xc8] sm:$0xff]
        %v653 = vld [vmem:[%s536 + $0xd0] sm:$0xff]
        %v654 = vld [vmem:[%s536 + $0xd8] sm:$0xff]
        %v655 = vld [vmem:[%s536 + $0xe0] sm:$0xff]
        %v656 = vld [vmem:[%s536 + $0xe8] sm:$0xff]
        %v657 = vld [vmem:[%s536 + $0xf0] sm:$0xff]
        %v658 = vld [vmem:[%s536 + $0xf8] sm:$0xff]
        %vm659 = vcmask 523264
        %v661 = vsel %vm659, %v625, 0
        %v664 = vsel %vm659, %v626, 0
        %v666 = vand.u32 %v628, 4294901760
        %667 = vmatprep.subr.mxu0 %v666
        %v668 = vand.u32 %v627, 4294901760
        %669 = vmatpush1.msra.mxu0 %v668
        %v670 = vand.u32 %v632, 4294901760
        %671 = vmatprep.subr.mxu0 %v670
        %v672 = vand.u32 %v631, 4294901760
        %673 = vmatpush1.msra.mxu0 %v672
        %v674 = vand.u32 %v636, 4294901760
        %675 = vmatprep.subr.mxu0 %v674
        %v676 = vand.u32 %v635, 4294901760
        %677 = vmatpush1.msra.mxu0 %v676
        %v678 = vand.u32 %v640, 4294901760
        %679 = vmatprep.subr.mxu0 %v678
        %v680 = vand.u32 %v639, 4294901760
        %681 = vmatpush1.msra.mxu0 %v680
        %v682 = vand.u32 %v644, 4294901760
        %683 = vmatprep.subr.mxu0 %v682
        %v684 = vand.u32 %v643, 4294901760
        %685 = vmatpush1.msra.mxu0 %v684
        %v686 = vand.u32 %v648, 4294901760
        %687 = vmatprep.subr.mxu0 %v686
        %v688 = vand.u32 %v647, 4294901760
        %689 = vmatpush1.msra.mxu0 %v688
        %v690 = vand.u32 %v652, 4294901760
        %691 = vmatprep.subr.mxu0 %v690
        %v692 = vand.u32 %v651, 4294901760
        %693 = vmatpush1.msra.mxu0 %v692
        %v694 = vand.u32 %v656, 4294901760
        %695 = vmatprep.subr.mxu0 %v694
        %v696 = vand.u32 %v655, 4294901760
        %697 = vmatpush1.msra.mxu0 %v696
        %698 = vmatprep.subr.mxu0 0.0
        %699 = vmatpush1.msra.mxu0 0.0
        %700 = vmatprep.subr.mxu0 0.0
        %701 = vmatpush1.msra.mxu0 0.0
        %702 = vmatprep.subr.mxu0 0.0
        %703 = vmatpush1.msra.mxu0 0.0
        %704 = vmatprep.subr.mxu0 0.0
        %705 = vmatpush1.msra.mxu0 0.0
        %706 = vmatprep.subr.mxu0 0.0
        %707 = vmatpush1.msra.mxu0 0.0
        %708 = vmatprep.subr.mxu0 0.0
        %709 = vmatpush1.msra.mxu0 0.0
        %710 = vmatprep.subr.mxu0 0.0
        %711 = vmatpush1.msra.mxu0 0.0
        %712 = vmatprep.subr.mxu0 0.0
        %713 = vmatpush1.msra.mxu0 0.0
        %714 = vmatprep.subr.mxu0 0.0
        %715 = vmatpush1.msra.mxu0 0.0
        %716 = vmatprep.subr.mxu0 0.0
        %717 = vmatpush1.msra.mxu0 0.0
        %718 = vmatprep.subr.mxu0 0.0
        %719 = vmatpush1.msra.mxu0 0.0
        %720 = vmatprep.subr.mxu0 0.0
        %721 = vmatpush1.msra.mxu0 0.0
        %722 = vmatprep.subr.mxu0 0.0
        %723 = vmatpush1.msra.mxu0 0.0
        %724 = vmatprep.subr.mxu0 0.0
        %725 = vmatpush1.msra.mxu0 0.0
        %726 = vmatprep.subr.mxu0 0.0
        %727 = vmatpush1.msra.mxu0 0.0
        %728 = vmatprep.subr.mxu0 0.0
        %729 = vmatpush1.msra.mxu0 0.0
        %730 = vmatprep.subr.mxu0 0.0
        %731 = vmatpush1.msra.mxu0 0.0
        %732 = vmatprep.subr.mxu0 0.0
        %733 = vmatpush1.msra.mxu0 0.0
        %734 = vmatprep.subr.mxu0 0.0
        %735 = vmatpush1.msra.mxu0 0.0
        %736 = vmatprep.subr.mxu0 0.0
        %737 = vmatpush1.msra.mxu0 0.0
        %738 = vmatprep.subr.mxu0 0.0
        %739 = vmatpush1.msra.mxu0 0.0
        %740 = vmatprep.subr.mxu0 0.0
        %741 = vmatpush1.msra.mxu0 0.0
        %742 = vmatprep.subr.mxu0 0.0
        %743 = vmatpush1.msra.mxu0 0.0
        %744 = vmatprep.subr.mxu0 0.0
        %745 = vmatpush1.msra.mxu0 0.0
        %746 = vmatprep.mubr.f32.mxu0 0.0
        %v747 = vand.u32 %v661, 4294901760
        %v748 = vsub.f32 %v661, %v747
        %v749 = vand.u32 %v748, 4294901760
        %v750 = vsub.f32 %v748, %v749
        %v751 = vand.u32 %v750, 4294901760
        %752 = vmatmul.mubr.f32.gmra.mrb[0].mxu0 %v751
        %v753 = vpop.f32.mrb[0].mxu0
        %v754 = vadd.f32 0.0, %v753
        %v755 = vpop.f32.mrb[0].mxu0
        %v756 = vadd.f32 0.0, %v755
        %757 = vmatprep.mubr.f32.mxu0 0.0
        %v758 = vand.u32 %v664, 4294901760
        %v759 = vsub.f32 %v664, %v758
        %v760 = vand.u32 %v759, 4294901760
        %v761 = vsub.f32 %v759, %v760
        %v762 = vand.u32 %v761, 4294901760
        %763 = vmatmul.mubr.f32.gmra.mrb[0].mxu0 %v762
        %v764 = vpop.f32.mrb[0].mxu0
        %v765 = vadd.f32 0.0, %v764
        %v766 = vpop.f32.mrb[0].mxu0
        %v767 = vadd.f32 0.0, %v766
        %768 = vdwg.mxu0
        %v769 = vand.u32 %v628, 4294901760
        %v770 = vsub.f32 %v628, %v769
        %v771 = vand.u32 %v770, 4294901760
        %v772 = vsub.f32 %v770, %v771
        %v773 = vand.u32 %v772, 4294901760
        %774 = vmatprep.subr.mxu0 %v773
        %v775 = vand.u32 %v627, 4294901760
        %v776 = vsub.f32 %v627, %v775
        %v777 = vand.u32 %v776, 4294901760
        %v778 = vsub.f32 %v776, %v777
        %v779 = vand.u32 %v778, 4294901760
        %780 = vmatpush1.msra.mxu0 %v779
        %v781 = vand.u32 %v632, 4294901760
        %v782 = vsub.f32 %v632, %v781
        %v783 = vand.u32 %v782, 4294901760
        %v784 = vsub.f32 %v782, %v783
        %v785 = vand.u32 %v784, 4294901760
        %786 = vmatprep.subr.mxu0 %v785
        %v787 = vand.u32 %v631, 4294901760
        %v788 = vsub.f32 %v631, %v787
        %v789 = vand.u32 %v788, 4294901760
        %v790 = vsub.f32 %v788, %v789
        %v791 = vand.u32 %v790, 4294901760
        %792 = vmatpush1.msra.mxu0 %v791
        %v793 = vand.u32 %v636, 4294901760
        %v794 = vsub.f32 %v636, %v793
        %v795 = vand.u32 %v794, 4294901760
        %v796 = vsub.f32 %v794, %v795
        %v797 = vand.u32 %v796, 4294901760
        %798 = vmatprep.subr.mxu0 %v797
        %v799 = vand.u32 %v635, 4294901760
        %v800 = vsub.f32 %v635, %v799
        %v801 = vand.u32 %v800, 4294901760
        %v802 = vsub.f32 %v800, %v801
        %v803 = vand.u32 %v802, 4294901760
        %804 = vmatpush1.msra.mxu0 %v803
        %v805 = vand.u32 %v640, 4294901760
        %v806 = vsub.f32 %v640, %v805
        %v807 = vand.u32 %v806, 4294901760
        %v808 = vsub.f32 %v806, %v807
        %v809 = vand.u32 %v808, 4294901760
        %810 = vmatprep.subr.mxu0 %v809
        %v811 = vand.u32 %v639, 4294901760
        %v812 = vsub.f32 %v639, %v811
        %v813 = vand.u32 %v812, 4294901760
        %v814 = vsub.f32 %v812, %v813
        %v815 = vand.u32 %v814, 4294901760
        %816 = vmatpush1.msra.mxu0 %v815
        %v817 = vand.u32 %v644, 4294901760
        %v818 = vsub.f32 %v644, %v817
        %v819 = vand.u32 %v818, 4294901760
        %v820 = vsub.f32 %v818, %v819
        %v821 = vand.u32 %v820, 4294901760
        %822 = vmatprep.subr.mxu0 %v821
        %v823 = vand.u32 %v643, 4294901760
        %v824 = vsub.f32 %v643, %v823
        %v825 = vand.u32 %v824, 4294901760
        %v826 = vsub.f32 %v824, %v825
        %v827 = vand.u32 %v826, 4294901760
        %828 = vmatpush1.msra.mxu0 %v827
        %v829 = vand.u32 %v648, 4294901760
        %v830 = vsub.f32 %v648, %v829
        %v831 = vand.u32 %v830, 4294901760
        %v832 = vsub.f32 %v830, %v831
        %v833 = vand.u32 %v832, 4294901760
        %834 = vmatprep.subr.mxu0 %v833
        %v835 = vand.u32 %v647, 4294901760
        %v836 = vsub.f32 %v647, %v835
        %v837 = vand.u32 %v836, 4294901760
        %v838 = vsub.f32 %v836, %v837
        %v839 = vand.u32 %v838, 4294901760
        %840 = vmatpush1.msra.mxu0 %v839
        %v841 = vand.u32 %v652, 4294901760
        %v842 = vsub.f32 %v652, %v841
        %v843 = vand.u32 %v842, 4294901760
        %v844 = vsub.f32 %v842, %v843
        %v845 = vand.u32 %v844, 4294901760
        %846 = vmatprep.subr.mxu0 %v845
        %v847 = vand.u32 %v651, 4294901760
        %v848 = vsub.f32 %v651, %v847
        %v849 = vand.u32 %v848, 4294901760
        %v850 = vsub.f32 %v848, %v849
        %v851 = vand.u32 %v850, 4294901760
        %852 = vmatpush1.msra.mxu0 %v851
        %v853 = vand.u32 %v656, 4294901760
        %v854 = vsub.f32 %v656, %v853
        %v855 = vand.u32 %v854, 4294901760
        %v856 = vsub.f32 %v854, %v855
        %v857 = vand.u32 %v856, 4294901760
        %858 = vmatprep.subr.mxu0 %v857
        %v859 = vand.u32 %v655, 4294901760
        %v860 = vsub.f32 %v655, %v859
        %v861 = vand.u32 %v860, 4294901760
        %v862 = vsub.f32 %v860, %v861
        %v863 = vand.u32 %v862, 4294901760
        %864 = vmatpush1.msra.mxu0 %v863
        %865 = vmatprep.subr.mxu0 0.0
        %866 = vmatpush1.msra.mxu0 0.0
        %867 = vmatprep.subr.mxu0 0.0
        %868 = vmatpush1.msra.mxu0 0.0
        %869 = vmatprep.subr.mxu0 0.0
        %870 = vmatpush1.msra.mxu0 0.0
        %871 = vmatprep.subr.mxu0 0.0
        %872 = vmatpush1.msra.mxu0 0.0
        %873 = vmatprep.subr.mxu0 0.0
        %874 = vmatpush1.msra.mxu0 0.0
        %875 = vmatprep.subr.mxu0 0.0
        %876 = vmatpush1.msra.mxu0 0.0
        %877 = vmatprep.subr.mxu0 0.0
        %878 = vmatpush1.msra.mxu0 0.0
        %879 = vmatprep.subr.mxu0 0.0
        %880 = vmatpush1.msra.mxu0 0.0
        %881 = vmatprep.subr.mxu0 0.0
        %882 = vmatpush1.msra.mxu0 0.0
        %883 = vmatprep.subr.mxu0 0.0
        %884 = vmatpush1.msra.mxu0 0.0
        %885 = vmatprep.subr.mxu0 0.0
        %886 = vmatpush1.msra.mxu0 0.0
        %887 = vmatprep.subr.mxu0 0.0
        %888 = vmatpush1.msra.mxu0 0.0
        %889 = vmatprep.subr.mxu0 0.0
        %890 = vmatpush1.msra.mxu0 0.0
        %891 = vmatprep.subr.mxu0 0.0
        %892 = vmatpush1.msra.mxu0 0.0
        %893 = vmatprep.subr.mxu0 0.0
        %894 = vmatpush1.msra.mxu0 0.0
        %895 = vmatprep.subr.mxu0 0.0
        %896 = vmatpush1.msra.mxu0 0.0
        %897 = vmatprep.subr.mxu0 0.0
        %898 = vmatpush1.msra.mxu0 0.0
        %899 = vmatprep.subr.mxu0 0.0
        %900 = vmatpush1.msra.mxu0 0.0
        %901 = vmatprep.subr.mxu0 0.0
        %902 = vmatpush1.msra.mxu0 0.0
        %903 = vmatprep.subr.mxu0 0.0
        %904 = vmatpush1.msra.mxu0 0.0
        %905 = vmatprep.subr.mxu0 0.0
        %906 = vmatpush1.msra.mxu0 0.0
        %907 = vmatprep.subr.mxu0 0.0
        %908 = vmatpush1.msra.mxu0 0.0
        %909 = vmatprep.subr.mxu0 0.0
        %910 = vmatpush1.msra.mxu0 0.0
        %911 = vmatprep.subr.mxu0 0.0
        %912 = vmatpush1.msra.mxu0 0.0
        %913 = vmatprep.mubr.f32.mxu0 0.0
        %v914 = vand.u32 %v661, 4294901760
        %915 = vmatmul.mubr.f32.gmra.mrb[0].mxu0 %v914
        %v916 = vpop.f32.mrb[0].mxu0
        %v917 = vadd.f32 %v754, %v916
        %v918 = vpop.f32.mrb[0].mxu0
        %v919 = vadd.f32 %v756, %v918
        %920 = vmatprep.mubr.f32.mxu0 0.0
        %v921 = vand.u32 %v664, 4294901760
        %922 = vmatmul.mubr.f32.gmra.mrb[0].mxu0 %v921
        %v923 = vpop.f32.mrb[0].mxu0
        %v924 = vadd.f32 %v765, %v923
        %v925 = vpop.f32.mrb[0].mxu0
        %v926 = vadd.f32 %v767, %v925
        %927 = vdwg.mxu0
        %v928 = vand.u32 %v628, 4294901760
        %v929 = vsub.f32 %v628, %v928
        %930 = vmatprep.subr.mxu0 %v929
        %v931 = vand.u32 %v627, 4294901760
        %v932 = vsub.f32 %v627, %v931
        %933 = vmatpush1.msra.mxu0 %v932
        %v934 = vand.u32 %v632, 4294901760
        %v935 = vsub.f32 %v632, %v934
        %936 = vmatprep.subr.mxu0 %v935
        %v937 = vand.u32 %v631, 4294901760
        %v938 = vsub.f32 %v631, %v937
        %939 = vmatpush1.msra.mxu0 %v938
        %v940 = vand.u32 %v636, 4294901760
        %v941 = vsub.f32 %v636, %v940
        %942 = vmatprep.subr.mxu0 %v941
        %v943 = vand.u32 %v635, 4294901760
        %v944 = vsub.f32 %v635, %v943
        %945 = vmatpush1.msra.mxu0 %v944
        %v946 = vand.u32 %v640, 4294901760
        %v947 = vsub.f32 %v640, %v946
        %948 = vmatprep.subr.mxu0 %v947
        %v949 = vand.u32 %v639, 4294901760
        %v950 = vsub.f32 %v639, %v949
        %951 = vmatpush1.msra.mxu0 %v950
        %v952 = vand.u32 %v644, 4294901760
        %v953 = vsub.f32 %v644, %v952
        %954 = vmatprep.subr.mxu0 %v953
        %v955 = vand.u32 %v643, 4294901760
        %v956 = vsub.f32 %v643, %v955
        %957 = vmatpush1.msra.mxu0 %v956
        %v958 = vand.u32 %v648, 4294901760
        %v959 = vsub.f32 %v648, %v958
        %960 = vmatprep.subr.mxu0 %v959
        %v961 = vand.u32 %v647, 4294901760
        %v962 = vsub.f32 %v647, %v961
        %963 = vmatpush1.msra.mxu0 %v962
        %v964 = vand.u32 %v652, 4294901760
        %v965 = vsub.f32 %v652, %v964
        %966 = vmatprep.subr.mxu0 %v965
        %v967 = vand.u32 %v651, 4294901760
        %v968 = vsub.f32 %v651, %v967
        %969 = vmatpush1.msra.mxu0 %v968
        %v970 = vand.u32 %v656, 4294901760
        %v971 = vsub.f32 %v656, %v970
        %972 = vmatprep.subr.mxu0 %v971
        %v973 = vand.u32 %v655, 4294901760
        %v974 = vsub.f32 %v655, %v973
        %975 = vmatpush1.msra.mxu0 %v974
        %976 = vmatprep.subr.mxu0 0.0
        %977 = vmatpush1.msra.mxu0 0.0
        %978 = vmatprep.subr.mxu0 0.0
        %979 = vmatpush1.msra.mxu0 0.0
        %980 = vmatprep.subr.mxu0 0.0
        %981 = vmatpush1.msra.mxu0 0.0
        %982 = vmatprep.subr.mxu0 0.0
        %983 = vmatpush1.msra.mxu0 0.0
        %984 = vmatprep.subr.mxu0 0.0
        %985 = vmatpush1.msra.mxu0 0.0
        %986 = vmatprep.subr.mxu0 0.0
        %987 = vmatpush1.msra.mxu0 0.0
        %988 = vmatprep.subr.mxu0 0.0
        %989 = vmatpush1.msra.mxu0 0.0
        %990 = vmatprep.subr.mxu0 0.0
        %991 = vmatpush1.msra.mxu0 0.0
        %992 = vmatprep.subr.mxu0 0.0
        %993 = vmatpush1.msra.mxu0 0.0
        %994 = vmatprep.subr.mxu0 0.0
        %995 = vmatpush1.msra.mxu0 0.0
        %996 = vmatprep.subr.mxu0 0.0
        %997 = vmatpush1.msra.mxu0 0.0
        %998 = vmatprep.subr.mxu0 0.0
        %999 = vmatpush1.msra.mxu0 0.0
        %1000 = vmatprep.subr.mxu0 0.0
        %1001 = vmatpush1.msra.mxu0 0.0
        %1002 = vmatprep.subr.mxu0 0.0
        %1003 = vmatpush1.msra.mxu0 0.0
        %1004 = vmatprep.subr.mxu0 0.0
        %1005 = vmatpush1.msra.mxu0 0.0
        %1006 = vmatprep.subr.mxu0 0.0
        %1007 = vmatpush1.msra.mxu0 0.0
        %1008 = vmatprep.subr.mxu0 0.0
        %1009 = vmatpush1.msra.mxu0 0.0
        %1010 = vmatprep.subr.mxu0 0.0
        %1011 = vmatpush1.msra.mxu0 0.0
        %1012 = vmatprep.subr.mxu0 0.0
        %1013 = vmatpush1.msra.mxu0 0.0
        %1014 = vmatprep.subr.mxu0 0.0
        %1015 = vmatpush1.msra.mxu0 0.0
        %1016 = vmatprep.subr.mxu0 0.0
        %1017 = vmatpush1.msra.mxu0 0.0
        %1018 = vmatprep.subr.mxu0 0.0
        %1019 = vmatpush1.msra.mxu0 0.0
        %1020 = vmatprep.subr.mxu0 0.0
        %1021 = vmatpush1.msra.mxu0 0.0
        %1022 = vmatprep.subr.mxu0 0.0
        %1023 = vmatpush1.msra.mxu0 0.0
        %1024 = vmatprep.mubr.f32.mxu0 0.0
        %v1025 = vand.u32 %v661, 4294901760
        %v1026 = vsub.f32 %v661, %v1025
        %1027 = vmatmul.mubr.f32.gmra.mrb[0].mxu0 %v1026
        %v1028 = vpop.f32.mrb[0].mxu0
        %v1029 = vadd.f32 %v917, %v1028
        %v1030 = vpop.f32.mrb[0].mxu0
        %v1031 = vadd.f32 %v919, %v1030
        %1032 = vmatprep.mubr.f32.mxu0 0.0
        %v1033 = vand.u32 %v664, 4294901760
        %v1034 = vsub.f32 %v664, %v1033
        %1035 = vmatmul.mubr.f32.gmra.mrb[0].mxu0 %v1034
        %v1036 = vpop.f32.mrb[0].mxu0
        %v1037 = vadd.f32 %v924, %v1036
        %v1038 = vpop.f32.mrb[0].mxu0
        %v1039 = vadd.f32 %v926, %v1038
        %1040 = vdwg.mxu0
        %v1041 = vand.u32 %v628, 4294901760
        %1042 = vmatprep.subr.mxu0 %v1041
        %v1043 = vand.u32 %v627, 4294901760
        %1044 = vmatpush1.msra.mxu0 %v1043
        %v1045 = vand.u32 %v632, 4294901760
        %1046 = vmatprep.subr.mxu0 %v1045
        %v1047 = vand.u32 %v631, 4294901760
        %1048 = vmatpush1.msra.mxu0 %v1047
        %v1049 = vand.u32 %v636, 4294901760
        %1050 = vmatprep.subr.mxu0 %v1049
        %v1051 = vand.u32 %v635, 4294901760
        %1052 = vmatpush1.msra.mxu0 %v1051
        %v1053 = vand.u32 %v640, 4294901760
        %1054 = vmatprep.subr.mxu0 %v1053
        %v1055 = vand.u32 %v639, 4294901760
        %1056 = vmatpush1.msra.mxu0 %v1055
        %v1057 = vand.u32 %v644, 4294901760
        %1058 = vmatprep.subr.mxu0 %v1057
        %v1059 = vand.u32 %v643, 4294901760
        %1060 = vmatpush1.msra.mxu0 %v1059
        %v1061 = vand.u32 %v648, 4294901760
        %1062 = vmatprep.subr.mxu0 %v1061
        %v1063 = vand.u32 %v647, 4294901760
        %1064 = vmatpush1.msra.mxu0 %v1063
        %v1065 = vand.u32 %v652, 4294901760
        %1066 = vmatprep.subr.mxu0 %v1065
        %v1067 = vand.u32 %v651, 4294901760
        %1068 = vmatpush1.msra.mxu0 %v1067
        %v1069 = vand.u32 %v656, 4294901760
        %1070 = vmatprep.subr.mxu0 %v1069
        %v1071 = vand.u32 %v655, 4294901760
        %1072 = vmatpush1.msra.mxu0 %v1071
        %1073 = vmatprep.subr.mxu0 0.0
        %1074 = vmatpush1.msra.mxu0 0.0
        %1075 = vmatprep.subr.mxu0 0.0
        %1076 = vmatpush1.msra.mxu0 0.0
        %1077 = vmatprep.subr.mxu0 0.0
        %1078 = vmatpush1.msra.mxu0 0.0
        %1079 = vmatprep.subr.mxu0 0.0
        %1080 = vmatpush1.msra.mxu0 0.0
        %1081 = vmatprep.subr.mxu0 0.0
        %1082 = vmatpush1.msra.mxu0 0.0
        %1083 = vmatprep.subr.mxu0 0.0
        %1084 = vmatpush1.msra.mxu0 0.0
        %1085 = vmatprep.subr.mxu0 0.0
        %1086 = vmatpush1.msra.mxu0 0.0
        %1087 = vmatprep.subr.mxu0 0.0
        %1088 = vmatpush1.msra.mxu0 0.0
        %1089 = vmatprep.subr.mxu0 0.0
        %1090 = vmatpush1.msra.mxu0 0.0
        %1091 = vmatprep.subr.mxu0 0.0
        %1092 = vmatpush1.msra.mxu0 0.0
        %1093 = vmatprep.subr.mxu0 0.0
        %1094 = vmatpush1.msra.mxu0 0.0
        %1095 = vmatprep.subr.mxu0 0.0
        %1096 = vmatpush1.msra.mxu0 0.0
        %1097 = vmatprep.subr.mxu0 0.0
        %1098 = vmatpush1.msra.mxu0 0.0
        %1099 = vmatprep.subr.mxu0 0.0
        %1100 = vmatpush1.msra.mxu0 0.0
        %1101 = vmatprep.subr.mxu0 0.0
        %1102 = vmatpush1.msra.mxu0 0.0
        %1103 = vmatprep.subr.mxu0 0.0
        %1104 = vmatpush1.msra.mxu0 0.0
        %1105 = vmatprep.subr.mxu0 0.0
        %1106 = vmatpush1.msra.mxu0 0.0
        %1107 = vmatprep.subr.mxu0 0.0
        %1108 = vmatpush1.msra.mxu0 0.0
        %1109 = vmatprep.subr.mxu0 0.0
        %1110 = vmatpush1.msra.mxu0 0.0
        %1111 = vmatprep.subr.mxu0 0.0
        %1112 = vmatpush1.msra.mxu0 0.0
        %1113 = vmatprep.subr.mxu0 0.0
        %1114 = vmatpush1.msra.mxu0 0.0
        %1115 = vmatprep.subr.mxu0 0.0
        %1116 = vmatpush1.msra.mxu0 0.0
        %1117 = vmatprep.subr.mxu0 0.0
        %1118 = vmatpush1.msra.mxu0 0.0
        %1119 = vmatprep.subr.mxu0 0.0
        %1120 = vmatpush1.msra.mxu0 0.0
        %1121 = vmatprep.mubr.f32.mxu0 0.0
        %v1122 = vand.u32 %v661, 4294901760
        %v1123 = vsub.f32 %v661, %v1122
        %v1124 = vand.u32 %v1123, 4294901760
        %1125 = vmatmul.mubr.f32.gmra.mrb[0].mxu0 %v1124
        %v1126 = vpop.f32.mrb[0].mxu0
        %v1127 = vadd.f32 %v1029, %v1126
        %v1128 = vpop.f32.mrb[0].mxu0
        %v1129 = vadd.f32 %v1031, %v1128
        %1130 = vmatprep.mubr.f32.mxu0 0.0
        %v1131 = vand.u32 %v664, 4294901760
        %v1132 = vsub.f32 %v664, %v1131
        %v1133 = vand.u32 %v1132, 4294901760
        %1134 = vmatmul.mubr.f32.gmra.mrb[0].mxu0 %v1133
        %v1135 = vpop.f32.mrb[0].mxu0
        %v1136 = vadd.f32 %v1037, %v1135
        %v1137 = vpop.f32.mrb[0].mxu0
        %v1138 = vadd.f32 %v1039, %v1137
        %1139 = vdwg.mxu0
        %v1140 = vand.u32 %v628, 4294901760
        %v1141 = vsub.f32 %v628, %v1140
        %v1142 = vand.u32 %v1141, 4294901760
        %1143 = vmatprep.subr.mxu0 %v1142
        %v1144 = vand.u32 %v627, 4294901760
        %v1145 = vsub.f32 %v627, %v1144
        %v1146 = vand.u32 %v1145, 4294901760
        %1147 = vmatpush1.msra.mxu0 %v1146
        %v1148 = vand.u32 %v632, 4294901760
        %v1149 = vsub.f32 %v632, %v1148
        %v1150 = vand.u32 %v1149, 4294901760
        %1151 = vmatprep.subr.mxu0 %v1150
        %v1152 = vand.u32 %v631, 4294901760
        %v1153 = vsub.f32 %v631, %v1152
        %v1154 = vand.u32 %v1153, 4294901760
        %1155 = vmatpush1.msra.mxu0 %v1154
        %v1156 = vand.u32 %v636, 4294901760
        %v1157 = vsub.f32 %v636, %v1156
        %v1158 = vand.u32 %v1157, 4294901760
        %1159 = vmatprep.subr.mxu0 %v1158
        %v1160 = vand.u32 %v635, 4294901760
        %v1161 = vsub.f32 %v635, %v1160
        %v1162 = vand.u32 %v1161, 4294901760
        %1163 = vmatpush1.msra.mxu0 %v1162
        %v1164 = vand.u32 %v640, 4294901760
        %v1165 = vsub.f32 %v640, %v1164
        %v1166 = vand.u32 %v1165, 4294901760
        %1167 = vmatprep.subr.mxu0 %v1166
        %v1168 = vand.u32 %v639, 4294901760
        %v1169 = vsub.f32 %v639, %v1168
        %v1170 = vand.u32 %v1169, 4294901760
        %1171 = vmatpush1.msra.mxu0 %v1170
        %v1172 = vand.u32 %v644, 4294901760
        %v1173 = vsub.f32 %v644, %v1172
        %v1174 = vand.u32 %v1173, 4294901760
        %1175 = vmatprep.subr.mxu0 %v1174
        %v1176 = vand.u32 %v643, 4294901760
        %v1177 = vsub.f32 %v643, %v1176
        %v1178 = vand.u32 %v1177, 4294901760
        %1179 = vmatpush1.msra.mxu0 %v1178
        %v1180 = vand.u32 %v648, 4294901760
        %v1181 = vsub.f32 %v648, %v1180
        %v1182 = vand.u32 %v1181, 4294901760
        %1183 = vmatprep.subr.mxu0 %v1182
        %v1184 = vand.u32 %v647, 4294901760
        %v1185 = vsub.f32 %v647, %v1184
        %v1186 = vand.u32 %v1185, 4294901760
        %1187 = vmatpush1.msra.mxu0 %v1186
        %v1188 = vand.u32 %v652, 4294901760
        %v1189 = vsub.f32 %v652, %v1188
        %v1190 = vand.u32 %v1189, 4294901760
        %1191 = vmatprep.subr.mxu0 %v1190
        %v1192 = vand.u32 %v651, 4294901760
        %v1193 = vsub.f32 %v651, %v1192
        %v1194 = vand.u32 %v1193, 4294901760
        %1195 = vmatpush1.msra.mxu0 %v1194
        %v1196 = vand.u32 %v656, 4294901760
        %v1197 = vsub.f32 %v656, %v1196
        %v1198 = vand.u32 %v1197, 4294901760
        %1199 = vmatprep.subr.mxu0 %v1198
        %v1200 = vand.u32 %v655, 4294901760
        %v1201 = vsub.f32 %v655, %v1200
        %v1202 = vand.u32 %v1201, 4294901760
        %1203 = vmatpush1.msra.mxu0 %v1202
        %1204 = vmatprep.subr.mxu0 0.0
        %1205 = vmatpush1.msra.mxu0 0.0
        %1206 = vmatprep.subr.mxu0 0.0
        %1207 = vmatpush1.msra.mxu0 0.0
        %1208 = vmatprep.subr.mxu0 0.0
        %1209 = vmatpush1.msra.mxu0 0.0
        %1210 = vmatprep.subr.mxu0 0.0
        %1211 = vmatpush1.msra.mxu0 0.0
        %1212 = vmatprep.subr.mxu0 0.0
        %1213 = vmatpush1.msra.mxu0 0.0
        %1214 = vmatprep.subr.mxu0 0.0
        %1215 = vmatpush1.msra.mxu0 0.0
        %1216 = vmatprep.subr.mxu0 0.0
        %1217 = vmatpush1.msra.mxu0 0.0
        %1218 = vmatprep.subr.mxu0 0.0
        %1219 = vmatpush1.msra.mxu0 0.0
        %1220 = vmatprep.subr.mxu0 0.0
        %1221 = vmatpush1.msra.mxu0 0.0
        %1222 = vmatprep.subr.mxu0 0.0
        %1223 = vmatpush1.msra.mxu0 0.0
        %1224 = vmatprep.subr.mxu0 0.0
        %1225 = vmatpush1.msra.mxu0 0.0
        %1226 = vmatprep.subr.mxu0 0.0
        %1227 = vmatpush1.msra.mxu0 0.0
        %1228 = vmatprep.subr.mxu0 0.0
        %1229 = vmatpush1.msra.mxu0 0.0
        %1230 = vmatprep.subr.mxu0 0.0
        %1231 = vmatpush1.msra.mxu0 0.0
        %1232 = vmatprep.subr.mxu0 0.0
        %1233 = vmatpush1.msra.mxu0 0.0
        %1234 = vmatprep.subr.mxu0 0.0
        %1235 = vmatpush1.msra.mxu0 0.0
        %1236 = vmatprep.subr.mxu0 0.0
        %1237 = vmatpush1.msra.mxu0 0.0
        %1238 = vmatprep.subr.mxu0 0.0
        %1239 = vmatpush1.msra.mxu0 0.0
        %1240 = vmatprep.subr.mxu0 0.0
        %1241 = vmatpush1.msra.mxu0 0.0
        %1242 = vmatprep.subr.mxu0 0.0
        %1243 = vmatpush1.msra.mxu0 0.0
        %1244 = vmatprep.subr.mxu0 0.0
        %1245 = vmatpush1.msra.mxu0 0.0
        %1246 = vmatprep.subr.mxu0 0.0
        %1247 = vmatpush1.msra.mxu0 0.0
        %1248 = vmatprep.subr.mxu0 0.0
        %1249 = vmatpush1.msra.mxu0 0.0
        %1250 = vmatprep.subr.mxu0 0.0
        %1251 = vmatpush1.msra.mxu0 0.0
        %1252 = vmatprep.mubr.f32.mxu0 0.0
        %v1253 = vand.u32 %v661, 4294901760
        %1254 = vmatmul.mubr.f32.gmra.mrb[0].mxu0 %v1253
        %v1255 = vpop.f32.mrb[0].mxu0
        %v1256 = vadd.f32 %v1127, %v1255
        %v1257 = vpop.f32.mrb[0].mxu0
        %v1258 = vadd.f32 %v1129, %v1257
        %1259 = vmatprep.mubr.f32.mxu0 0.0
        %v1260 = vand.u32 %v664, 4294901760
        %1261 = vmatmul.mubr.f32.gmra.mrb[0].mxu0 %v1260
        %v1262 = vpop.f32.mrb[0].mxu0
        %v1263 = vadd.f32 %v1136, %v1262
        %v1264 = vpop.f32.mrb[0].mxu0
        %v1265 = vadd.f32 %v1138, %v1264
        %1266 = vdwg.mxu0
        %v1267 = vand.u32 %v628, 4294901760
        %1268 = vmatprep.subr.mxu0 %v1267
        %v1269 = vand.u32 %v627, 4294901760
        %1270 = vmatpush1.msra.mxu0 %v1269
        %v1271 = vand.u32 %v632, 4294901760
        %1272 = vmatprep.subr.mxu0 %v1271
        %v1273 = vand.u32 %v631, 4294901760
        %1274 = vmatpush1.msra.mxu0 %v1273
        %v1275 = vand.u32 %v636, 4294901760
        %1276 = vmatprep.subr.mxu0 %v1275
        %v1277 = vand.u32 %v635, 4294901760
        %1278 = vmatpush1.msra.mxu0 %v1277
        %v1279 = vand.u32 %v640, 4294901760
        %1280 = vmatprep.subr.mxu0 %v1279
        %v1281 = vand.u32 %v639, 4294901760
        %1282 = vmatpush1.msra.mxu0 %v1281
        %v1283 = vand.u32 %v644, 4294901760
        %1284 = vmatprep.subr.mxu0 %v1283
        %v1285 = vand.u32 %v643, 4294901760
        %1286 = vmatpush1.msra.mxu0 %v1285
        %v1287 = vand.u32 %v648, 4294901760
        %1288 = vmatprep.subr.mxu0 %v1287
        %v1289 = vand.u32 %v647, 4294901760
        %1290 = vmatpush1.msra.mxu0 %v1289
        %v1291 = vand.u32 %v652, 4294901760
        %1292 = vmatprep.subr.mxu0 %v1291
        %v1293 = vand.u32 %v651, 4294901760
        %1294 = vmatpush1.msra.mxu0 %v1293
        %v1295 = vand.u32 %v656, 4294901760
        %1296 = vmatprep.subr.mxu0 %v1295
        %v1297 = vand.u32 %v655, 4294901760
        %1298 = vmatpush1.msra.mxu0 %v1297
        %1299 = vmatprep.subr.mxu0 0.0
        %1300 = vmatpush1.msra.mxu0 0.0
        %1301 = vmatprep.subr.mxu0 0.0
        %1302 = vmatpush1.msra.mxu0 0.0
        %1303 = vmatprep.subr.mxu0 0.0
        %1304 = vmatpush1.msra.mxu0 0.0
        %1305 = vmatprep.subr.mxu0 0.0
        %1306 = vmatpush1.msra.mxu0 0.0
        %1307 = vmatprep.subr.mxu0 0.0
        %1308 = vmatpush1.msra.mxu0 0.0
        %1309 = vmatprep.subr.mxu0 0.0
        %1310 = vmatpush1.msra.mxu0 0.0
        %1311 = vmatprep.subr.mxu0 0.0
        %1312 = vmatpush1.msra.mxu0 0.0
        %1313 = vmatprep.subr.mxu0 0.0
        %1314 = vmatpush1.msra.mxu0 0.0
        %1315 = vmatprep.subr.mxu0 0.0
        %1316 = vmatpush1.msra.mxu0 0.0
        %1317 = vmatprep.subr.mxu0 0.0
        %1318 = vmatpush1.msra.mxu0 0.0
        %1319 = vmatprep.subr.mxu0 0.0
        %1320 = vmatpush1.msra.mxu0 0.0
        %1321 = vmatprep.subr.mxu0 0.0
        %1322 = vmatpush1.msra.mxu0 0.0
        %1323 = vmatprep.subr.mxu0 0.0
        %1324 = vmatpush1.msra.mxu0 0.0
        %1325 = vmatprep.subr.mxu0 0.0
        %1326 = vmatpush1.msra.mxu0 0.0
        %1327 = vmatprep.subr.mxu0 0.0
        %1328 = vmatpush1.msra.mxu0 0.0
        %1329 = vmatprep.subr.mxu0 0.0
        %1330 = vmatpush1.msra.mxu0 0.0
        %1331 = vmatprep.subr.mxu0 0.0
        %1332 = vmatpush1.msra.mxu0 0.0
        %1333 = vmatprep.subr.mxu0 0.0
        %1334 = vmatpush1.msra.mxu0 0.0
        %1335 = vmatprep.subr.mxu0 0.0
        %1336 = vmatpush1.msra.mxu0 0.0
        %1337 = vmatprep.subr.mxu0 0.0
        %1338 = vmatpush1.msra.mxu0 0.0
        %1339 = vmatprep.subr.mxu0 0.0
        %1340 = vmatpush1.msra.mxu0 0.0
        %1341 = vmatprep.subr.mxu0 0.0
        %1342 = vmatpush1.msra.mxu0 0.0
        %1343 = vmatprep.subr.mxu0 0.0
        %1344 = vmatpush1.msra.mxu0 0.0
        %1345 = vmatprep.subr.mxu0 0.0
        %1346 = vmatpush1.msra.mxu0 0.0
        %1347 = vmatprep.mubr.f32.mxu0 0.0
        %v1348 = vand.u32 %v661, 4294901760
        %1349 = vmatmul.mubr.f32.gmra.mrb[0].mxu0 %v1348
        %v1350 = vpop.f32.mrb[0].mxu0
        %v1351 = vadd.f32 %v1256, %v1350
        %v1352 = vpop.f32.mrb[0].mxu0
        %v1353 = vadd.f32 %v1258, %v1352
        %1354 = vmatprep.mubr.f32.mxu0 0.0
        %v1355 = vand.u32 %v664, 4294901760
        %1356 = vmatmul.mubr.f32.gmra.mrb[0].mxu0 %v1355
        %v1357 = vpop.f32.mrb[0].mxu0
        %v1358 = vadd.f32 %v1263, %v1357
        %v1359 = vpop.f32.mrb[0].mxu0
        %v1360 = vadd.f32 %v1265, %v1359
        %1361 = vdwg.mxu0
        %v1362 = vand.u32 %v630, 4294901760
        %1363 = vmatprep.subr.mxu0 %v1362
        %v1364 = vand.u32 %v629, 4294901760
        %1365 = vmatpush1.msra.mxu0 %v1364
        %v1366 = vand.u32 %v634, 4294901760
        %1367 = vmatprep.subr.mxu0 %v1366
        %v1368 = vand.u32 %v633, 4294901760
        %1369 = vmatpush1.msra.mxu0 %v1368
        %v1370 = vand.u32 %v638, 4294901760
        %1371 = vmatprep.subr.mxu0 %v1370
        %v1372 = vand.u32 %v637, 4294901760
        %1373 = vmatpush1.msra.mxu0 %v1372
        %v1374 = vand.u32 %v642, 4294901760
        %1375 = vmatprep.subr.mxu0 %v1374
        %v1376 = vand.u32 %v641, 4294901760
        %1377 = vmatpush1.msra.mxu0 %v1376
        %v1378 = vand.u32 %v646, 4294901760
        %1379 = vmatprep.subr.mxu0 %v1378
        %v1380 = vand.u32 %v645, 4294901760
        %1381 = vmatpush1.msra.mxu0 %v1380
        %v1382 = vand.u32 %v650, 4294901760
        %1383 = vmatprep.subr.mxu0 %v1382
        %v1384 = vand.u32 %v649, 4294901760
        %1385 = vmatpush1.msra.mxu0 %v1384
        %v1386 = vand.u32 %v654, 4294901760
        %1387 = vmatprep.subr.mxu0 %v1386
        %v1388 = vand.u32 %v653, 4294901760
        %1389 = vmatpush1.msra.mxu0 %v1388
        %v1390 = vand.u32 %v658, 4294901760
        %1391 = vmatprep.subr.mxu0 %v1390
        %v1392 = vand.u32 %v657, 4294901760
        %1393 = vmatpush1.msra.mxu0 %v1392
        %1394 = vmatprep.subr.mxu0 0.0
        %1395 = vmatpush1.msra.mxu0 0.0
        %1396 = vmatprep.subr.mxu0 0.0
        %1397 = vmatpush1.msra.mxu0 0.0
        %1398 = vmatprep.subr.mxu0 0.0
        %1399 = vmatpush1.msra.mxu0 0.0
        %1400 = vmatprep.subr.mxu0 0.0
        %1401 = vmatpush1.msra.mxu0 0.0
        %1402 = vmatprep.subr.mxu0 0.0
        %1403 = vmatpush1.msra.mxu0 0.0
        %1404 = vmatprep.subr.mxu0 0.0
        %1405 = vmatpush1.msra.mxu0 0.0
        %1406 = vmatprep.subr.mxu0 0.0
        %1407 = vmatpush1.msra.mxu0 0.0
        %1408 = vmatprep.subr.mxu0 0.0
        %1409 = vmatpush1.msra.mxu0 0.0
        %1410 = vmatprep.subr.mxu0 0.0
        %1411 = vmatpush1.msra.mxu0 0.0
        %1412 = vmatprep.subr.mxu0 0.0
        %1413 = vmatpush1.msra.mxu0 0.0
        %1414 = vmatprep.subr.mxu0 0.0
        %1415 = vmatpush1.msra.mxu0 0.0
        %1416 = vmatprep.subr.mxu0 0.0
        %1417 = vmatpush1.msra.mxu0 0.0
        %1418 = vmatprep.subr.mxu0 0.0
        %1419 = vmatpush1.msra.mxu0 0.0
        %1420 = vmatprep.subr.mxu0 0.0
        %1421 = vmatpush1.msra.mxu0 0.0
        %1422 = vmatprep.subr.mxu0 0.0
        %1423 = vmatpush1.msra.mxu0 0.0
        %1424 = vmatprep.subr.mxu0 0.0
        %1425 = vmatpush1.msra.mxu0 0.0
        %1426 = vmatprep.subr.mxu0 0.0
        %1427 = vmatpush1.msra.mxu0 0.0
        %1428 = vmatprep.subr.mxu0 0.0
        %1429 = vmatpush1.msra.mxu0 0.0
        %1430 = vmatprep.subr.mxu0 0.0
        %1431 = vmatpush1.msra.mxu0 0.0
        %1432 = vmatprep.subr.mxu0 0.0
        %1433 = vmatpush1.msra.mxu0 0.0
        %1434 = vmatprep.subr.mxu0 0.0
        %1435 = vmatpush1.msra.mxu0 0.0
        %1436 = vmatprep.subr.mxu0 0.0
        %1437 = vmatpush1.msra.mxu0 0.0
        %1438 = vmatprep.subr.mxu0 0.0
        %1439 = vmatpush1.msra.mxu0 0.0
        %1440 = vmatprep.subr.mxu0 0.0
        %1441 = vmatpush1.msra.mxu0 0.0
        %1442 = vmatprep.mubr.f32.mxu0 0.0
        %v1443 = vand.u32 %v661, 4294901760
        %v1444 = vsub.f32 %v661, %v1443
        %v1445 = vand.u32 %v1444, 4294901760
        %v1446 = vsub.f32 %v1444, %v1445
        %v1447 = vand.u32 %v1446, 4294901760
        %1448 = vmatmul.mubr.f32.gmra.mrb[0].mxu0 %v1447
        %v1449 = vpop.f32.mrb[0].mxu0
        %v1450 = vadd.f32 0.0, %v1449
        %v1451 = vpop.f32.mrb[0].mxu0
        %v1452 = vadd.f32 0.0, %v1451
        %1453 = vmatprep.mubr.f32.mxu0 0.0
        %v1454 = vand.u32 %v664, 4294901760
        %v1455 = vsub.f32 %v664, %v1454
        %v1456 = vand.u32 %v1455, 4294901760
        %v1457 = vsub.f32 %v1455, %v1456
        %v1458 = vand.u32 %v1457, 4294901760
        %1459 = vmatmul.mubr.f32.gmra.mrb[0].mxu0 %v1458
        %v1460 = vpop.f32.mrb[0].mxu0
        %v1461 = vadd.f32 0.0, %v1460
        %v1462 = vpop.f32.mrb[0].mxu0
        %v1463 = vadd.f32 0.0, %v1462
        %1464 = vdwg.mxu0
        %v1465 = vand.u32 %v630, 4294901760
        %v1466 = vsub.f32 %v630, %v1465
        %v1467 = vand.u32 %v1466, 4294901760
        %v1468 = vsub.f32 %v1466, %v1467
        %v1469 = vand.u32 %v1468, 4294901760
        %1470 = vmatprep.subr.mxu0 %v1469
        %v1471 = vand.u32 %v629, 4294901760
        %v1472 = vsub.f32 %v629, %v1471
        %v1473 = vand.u32 %v1472, 4294901760
        %v1474 = vsub.f32 %v1472, %v1473
        %v1475 = vand.u32 %v1474, 4294901760
        %1476 = vmatpush1.msra.mxu0 %v1475
        %v1477 = vand.u32 %v634, 4294901760
        %v1478 = vsub.f32 %v634, %v1477
        %v1479 = vand.u32 %v1478, 4294901760
        %v1480 = vsub.f32 %v1478, %v1479
        %v1481 = vand.u32 %v1480, 4294901760
        %1482 = vmatprep.subr.mxu0 %v1481
        %v1483 = vand.u32 %v633, 4294901760
        %v1484 = vsub.f32 %v633, %v1483
        %v1485 = vand.u32 %v1484, 4294901760
        %v1486 = vsub.f32 %v1484, %v1485
        %v1487 = vand.u32 %v1486, 4294901760
        %1488 = vmatpush1.msra.mxu0 %v1487
        %v1489 = vand.u32 %v638, 4294901760
        %v1490 = vsub.f32 %v638, %v1489
        %v1491 = vand.u32 %v1490, 4294901760
        %v1492 = vsub.f32 %v1490, %v1491
        %v1493 = vand.u32 %v1492, 4294901760
        %1494 = vmatprep.subr.mxu0 %v1493
        %v1495 = vand.u32 %v637, 4294901760
        %v1496 = vsub.f32 %v637, %v1495
        %v1497 = vand.u32 %v1496, 4294901760
        %v1498 = vsub.f32 %v1496, %v1497
        %v1499 = vand.u32 %v1498, 4294901760
        %1500 = vmatpush1.msra.mxu0 %v1499
        %v1501 = vand.u32 %v642, 4294901760
        %v1502 = vsub.f32 %v642, %v1501
        %v1503 = vand.u32 %v1502, 4294901760
        %v1504 = vsub.f32 %v1502, %v1503
        %v1505 = vand.u32 %v1504, 4294901760
        %1506 = vmatprep.subr.mxu0 %v1505
        %v1507 = vand.u32 %v641, 4294901760
        %v1508 = vsub.f32 %v641, %v1507
        %v1509 = vand.u32 %v1508, 4294901760
        %v1510 = vsub.f32 %v1508, %v1509
        %v1511 = vand.u32 %v1510, 4294901760
        %1512 = vmatpush1.msra.mxu0 %v1511
        %v1513 = vand.u32 %v646, 4294901760
        %v1514 = vsub.f32 %v646, %v1513
        %v1515 = vand.u32 %v1514, 4294901760
        %v1516 = vsub.f32 %v1514, %v1515
        %v1517 = vand.u32 %v1516, 4294901760
        %1518 = vmatprep.subr.mxu0 %v1517
        %v1519 = vand.u32 %v645, 4294901760
        %v1520 = vsub.f32 %v645, %v1519
        %v1521 = vand.u32 %v1520, 4294901760
        %v1522 = vsub.f32 %v1520, %v1521
        %v1523 = vand.u32 %v1522, 4294901760
        %1524 = vmatpush1.msra.mxu0 %v1523
        %v1525 = vand.u32 %v650, 4294901760
        %v1526 = vsub.f32 %v650, %v1525
        %v1527 = vand.u32 %v1526, 4294901760
        %v1528 = vsub.f32 %v1526, %v1527
        %v1529 = vand.u32 %v1528, 4294901760
        %1530 = vmatprep.subr.mxu0 %v1529
        %v1531 = vand.u32 %v649, 4294901760
        %v1532 = vsub.f32 %v649, %v1531
        %v1533 = vand.u32 %v1532, 4294901760
        %v1534 = vsub.f32 %v1532, %v1533
        %v1535 = vand.u32 %v1534, 4294901760
        %1536 = vmatpush1.msra.mxu0 %v1535
        %v1537 = vand.u32 %v654, 4294901760
        %v1538 = vsub.f32 %v654, %v1537
        %v1539 = vand.u32 %v1538, 4294901760
        %v1540 = vsub.f32 %v1538, %v1539
        %v1541 = vand.u32 %v1540, 4294901760
        %1542 = vmatprep.subr.mxu0 %v1541
        %v1543 = vand.u32 %v653, 4294901760
        %v1544 = vsub.f32 %v653, %v1543
        %v1545 = vand.u32 %v1544, 4294901760
        %v1546 = vsub.f32 %v1544, %v1545
        %v1547 = vand.u32 %v1546, 4294901760
        %1548 = vmatpush1.msra.mxu0 %v1547
        %v1549 = vand.u32 %v658, 4294901760
        %v1550 = vsub.f32 %v658, %v1549
        %v1551 = vand.u32 %v1550, 4294901760
        %v1552 = vsub.f32 %v1550, %v1551
        %v1553 = vand.u32 %v1552, 4294901760
        %1554 = vmatprep.subr.mxu0 %v1553
        %v1555 = vand.u32 %v657, 4294901760
        %v1556 = vsub.f32 %v657, %v1555
        %v1557 = vand.u32 %v1556, 4294901760
        %v1558 = vsub.f32 %v1556, %v1557
        %v1559 = vand.u32 %v1558, 4294901760
        %1560 = vmatpush1.msra.mxu0 %v1559
        %1561 = vmatprep.subr.mxu0 0.0
        %1562 = vmatpush1.msra.mxu0 0.0
        %1563 = vmatprep.subr.mxu0 0.0
        %1564 = vmatpush1.msra.mxu0 0.0
        %1565 = vmatprep.subr.mxu0 0.0
        %1566 = vmatpush1.msra.mxu0 0.0
        %1567 = vmatprep.subr.mxu0 0.0
        %1568 = vmatpush1.msra.mxu0 0.0
        %1569 = vmatprep.subr.mxu0 0.0
        %1570 = vmatpush1.msra.mxu0 0.0
        %1571 = vmatprep.subr.mxu0 0.0
        %1572 = vmatpush1.msra.mxu0 0.0
        %1573 = vmatprep.subr.mxu0 0.0
        %1574 = vmatpush1.msra.mxu0 0.0
        %1575 = vmatprep.subr.mxu0 0.0
        %1576 = vmatpush1.msra.mxu0 0.0
        %1577 = vmatprep.subr.mxu0 0.0
        %1578 = vmatpush1.msra.mxu0 0.0
        %1579 = vmatprep.subr.mxu0 0.0
        %1580 = vmatpush1.msra.mxu0 0.0
        %1581 = vmatprep.subr.mxu0 0.0
        %1582 = vmatpush1.msra.mxu0 0.0
        %1583 = vmatprep.subr.mxu0 0.0
        %1584 = vmatpush1.msra.mxu0 0.0
        %1585 = vmatprep.subr.mxu0 0.0
        %1586 = vmatpush1.msra.mxu0 0.0
        %1587 = vmatprep.subr.mxu0 0.0
        %1588 = vmatpush1.msra.mxu0 0.0
        %1589 = vmatprep.subr.mxu0 0.0
        %1590 = vmatpush1.msra.mxu0 0.0
        %1591 = vmatprep.subr.mxu0 0.0
        %1592 = vmatpush1.msra.mxu0 0.0
        %1593 = vmatprep.subr.mxu0 0.0
        %1594 = vmatpush1.msra.mxu0 0.0
        %1595 = vmatprep.subr.mxu0 0.0
        %1596 = vmatpush1.msra.mxu0 0.0
        %1597 = vmatprep.subr.mxu0 0.0
        %1598 = vmatpush1.msra.mxu0 0.0
        %1599 = vmatprep.subr.mxu0 0.0
        %1600 = vmatpush1.msra.mxu0 0.0
        %1601 = vmatprep.subr.mxu0 0.0
        %1602 = vmatpush1.msra.mxu0 0.0
        %1603 = vmatprep.subr.mxu0 0.0
        %1604 = vmatpush1.msra.mxu0 0.0
        %1605 = vmatprep.subr.mxu0 0.0
        %1606 = vmatpush1.msra.mxu0 0.0
        %1607 = vmatprep.subr.mxu0 0.0
        %1608 = vmatpush1.msra.mxu0 0.0
        %1609 = vmatprep.mubr.f32.mxu0 0.0
        %v1610 = vand.u32 %v661, 4294901760
        %1611 = vmatmul.mubr.f32.gmra.mrb[0].mxu0 %v1610
        %v1612 = vpop.f32.mrb[0].mxu0
        %v1613 = vadd.f32 %v1450, %v1612
        %v1614 = vpop.f32.mrb[0].mxu0
        %v1615 = vadd.f32 %v1452, %v1614
        %1616 = vmatprep.mubr.f32.mxu0 0.0
        %v1617 = vand.u32 %v664, 4294901760
        %1618 = vmatmul.mubr.f32.gmra.mrb[0].mxu0 %v1617
        %v1619 = vpop.f32.mrb[0].mxu0
        %v1620 = vadd.f32 %v1461, %v1619
        %v1621 = vpop.f32.mrb[0].mxu0
        %v1622 = vadd.f32 %v1463, %v1621
        %1623 = vdwg.mxu0
        %v1624 = vand.u32 %v630, 4294901760
        %v1625 = vsub.f32 %v630, %v1624
        %1626 = vmatprep.subr.mxu0 %v1625
        %v1627 = vand.u32 %v629, 4294901760
        %v1628 = vsub.f32 %v629, %v1627
        %1629 = vmatpush1.msra.mxu0 %v1628
        %v1630 = vand.u32 %v634, 4294901760
        %v1631 = vsub.f32 %v634, %v1630
        %1632 = vmatprep.subr.mxu0 %v1631
        %v1633 = vand.u32 %v633, 4294901760
        %v1634 = vsub.f32 %v633, %v1633
        %1635 = vmatpush1.msra.mxu0 %v1634
        %v1636 = vand.u32 %v638, 4294901760
        %v1637 = vsub.f32 %v638, %v1636
        %1638 = vmatprep.subr.mxu0 %v1637
        %v1639 = vand.u32 %v637, 4294901760
        %v1640 = vsub.f32 %v637, %v1639
        %1641 = vmatpush1.msra.mxu0 %v1640
        %v1642 = vand.u32 %v642, 4294901760
        %v1643 = vsub.f32 %v642, %v1642
        %1644 = vmatprep.subr.mxu0 %v1643
        %v1645 = vand.u32 %v641, 4294901760
        %v1646 = vsub.f32 %v641, %v1645
        %1647 = vmatpush1.msra.mxu0 %v1646
        %v1648 = vand.u32 %v646, 4294901760
        %v1649 = vsub.f32 %v646, %v1648
        %1650 = vmatprep.subr.mxu0 %v1649
        %v1651 = vand.u32 %v645, 4294901760
        %v1652 = vsub.f32 %v645, %v1651
        %1653 = vmatpush1.msra.mxu0 %v1652
        %v1654 = vand.u32 %v650, 4294901760
        %v1655 = vsub.f32 %v650, %v1654
        %1656 = vmatprep.subr.mxu0 %v1655
        %v1657 = vand.u32 %v649, 4294901760
        %v1658 = vsub.f32 %v649, %v1657
        %1659 = vmatpush1.msra.mxu0 %v1658
        %v1660 = vand.u32 %v654, 4294901760
        %v1661 = vsub.f32 %v654, %v1660
        %1662 = vmatprep.subr.mxu0 %v1661
        %v1663 = vand.u32 %v653, 4294901760
        %v1664 = vsub.f32 %v653, %v1663
        %1665 = vmatpush1.msra.mxu0 %v1664
        %v1666 = vand.u32 %v658, 4294901760
        %v1667 = vsub.f32 %v658, %v1666
        %1668 = vmatprep.subr.mxu0 %v1667
        %v1669 = vand.u32 %v657, 4294901760
        %v1670 = vsub.f32 %v657, %v1669
        %1671 = vmatpush1.msra.mxu0 %v1670
        %1672 = vmatprep.subr.mxu0 0.0
        %1673 = vmatpush1.msra.mxu0 0.0
        %1674 = vmatprep.subr.mxu0 0.0
        %1675 = vmatpush1.msra.mxu0 0.0
        %1676 = vmatprep.subr.mxu0 0.0
        %1677 = vmatpush1.msra.mxu0 0.0
        %1678 = vmatprep.subr.mxu0 0.0
        %1679 = vmatpush1.msra.mxu0 0.0
        %1680 = vmatprep.subr.mxu0 0.0
        %1681 = vmatpush1.msra.mxu0 0.0
        %1682 = vmatprep.subr.mxu0 0.0
        %1683 = vmatpush1.msra.mxu0 0.0
        %1684 = vmatprep.subr.mxu0 0.0
        %1685 = vmatpush1.msra.mxu0 0.0
        %1686 = vmatprep.subr.mxu0 0.0
        %1687 = vmatpush1.msra.mxu0 0.0
        %1688 = vmatprep.subr.mxu0 0.0
        %1689 = vmatpush1.msra.mxu0 0.0
        %1690 = vmatprep.subr.mxu0 0.0
        %1691 = vmatpush1.msra.mxu0 0.0
        %1692 = vmatprep.subr.mxu0 0.0
        %1693 = vmatpush1.msra.mxu0 0.0
        %1694 = vmatprep.subr.mxu0 0.0
        %1695 = vmatpush1.msra.mxu0 0.0
        %1696 = vmatprep.subr.mxu0 0.0
        %1697 = vmatpush1.msra.mxu0 0.0
        %1698 = vmatprep.subr.mxu0 0.0
        %1699 = vmatpush1.msra.mxu0 0.0
        %1700 = vmatprep.subr.mxu0 0.0
        %1701 = vmatpush1.msra.mxu0 0.0
        %1702 = vmatprep.subr.mxu0 0.0
        %1703 = vmatpush1.msra.mxu0 0.0
        %1704 = vmatprep.subr.mxu0 0.0
        %1705 = vmatpush1.msra.mxu0 0.0
        %1706 = vmatprep.subr.mxu0 0.0
        %1707 = vmatpush1.msra.mxu0 0.0
        %1708 = vmatprep.subr.mxu0 0.0
        %1709 = vmatpush1.msra.mxu0 0.0
        %1710 = vmatprep.subr.mxu0 0.0
        %1711 = vmatpush1.msra.mxu0 0.0
        %1712 = vmatprep.subr.mxu0 0.0
        %1713 = vmatpush1.msra.mxu0 0.0
        %1714 = vmatprep.subr.mxu0 0.0
        %1715 = vmatpush1.msra.mxu0 0.0
        %1716 = vmatprep.subr.mxu0 0.0
        %1717 = vmatpush1.msra.mxu0 0.0
        %1718 = vmatprep.subr.mxu0 0.0
        %1719 = vmatpush1.msra.mxu0 0.0
        %1720 = vmatprep.mubr.f32.mxu0 0.0
        %v1721 = vand.u32 %v661, 4294901760
        %v1722 = vsub.f32 %v661, %v1721
        %1723 = vmatmul.mubr.f32.gmra.mrb[0].mxu0 %v1722
        %v1724 = vpop.f32.mrb[0].mxu0
        %v1725 = vadd.f32 %v1613, %v1724
        %v1726 = vpop.f32.mrb[0].mxu0
        %v1727 = vadd.f32 %v1615, %v1726
        %1728 = vmatprep.mubr.f32.mxu0 0.0
        %v1729 = vand.u32 %v664, 4294901760
        %v1730 = vsub.f32 %v664, %v1729
        %1731 = vmatmul.mubr.f32.gmra.mrb[0].mxu0 %v1730
        %v1732 = vpop.f32.mrb[0].mxu0
        %v1733 = vadd.f32 %v1620, %v1732
        %v1734 = vpop.f32.mrb[0].mxu0
        %v1735 = vadd.f32 %v1622, %v1734
        %1736 = vdwg.mxu0
        %v1737 = vand.u32 %v630, 4294901760
        %1738 = vmatprep.subr.mxu0 %v1737
        %v1739 = vand.u32 %v629, 4294901760
        %1740 = vmatpush1.msra.mxu0 %v1739
        %v1741 = vand.u32 %v634, 4294901760
        %1742 = vmatprep.subr.mxu0 %v1741
        %v1743 = vand.u32 %v633, 4294901760
        %1744 = vmatpush1.msra.mxu0 %v1743
        %v1745 = vand.u32 %v638, 4294901760
        %1746 = vmatprep.subr.mxu0 %v1745
        %v1747 = vand.u32 %v637, 4294901760
        %1748 = vmatpush1.msra.mxu0 %v1747
        %v1749 = vand.u32 %v642, 4294901760
        %1750 = vmatprep.subr.mxu0 %v1749
        %v1751 = vand.u32 %v641, 4294901760
        %1752 = vmatpush1.msra.mxu0 %v1751
        %v1753 = vand.u32 %v646, 4294901760
        %1754 = vmatprep.subr.mxu0 %v1753
        %v1755 = vand.u32 %v645, 4294901760
        %1756 = vmatpush1.msra.mxu0 %v1755
        %v1757 = vand.u32 %v650, 4294901760
        %1758 = vmatprep.subr.mxu0 %v1757
        %v1759 = vand.u32 %v649, 4294901760
        %1760 = vmatpush1.msra.mxu0 %v1759
        %v1761 = vand.u32 %v654, 4294901760
        %1762 = vmatprep.subr.mxu0 %v1761
        %v1763 = vand.u32 %v653, 4294901760
        %1764 = vmatpush1.msra.mxu0 %v1763
        %v1765 = vand.u32 %v658, 4294901760
        %1766 = vmatprep.subr.mxu0 %v1765
        %v1767 = vand.u32 %v657, 4294901760
        %1768 = vmatpush1.msra.mxu0 %v1767
        %1769 = vmatprep.subr.mxu0 0.0
        %1770 = vmatpush1.msra.mxu0 0.0
        %1771 = vmatprep.subr.mxu0 0.0
        %1772 = vmatpush1.msra.mxu0 0.0
        %1773 = vmatprep.subr.mxu0 0.0
        %1774 = vmatpush1.msra.mxu0 0.0
        %1775 = vmatprep.subr.mxu0 0.0
        %1776 = vmatpush1.msra.mxu0 0.0
        %1777 = vmatprep.subr.mxu0 0.0
        %1778 = vmatpush1.msra.mxu0 0.0
        %1779 = vmatprep.subr.mxu0 0.0
        %1780 = vmatpush1.msra.mxu0 0.0
        %1781 = vmatprep.subr.mxu0 0.0
        %1782 = vmatpush1.msra.mxu0 0.0
        %1783 = vmatprep.subr.mxu0 0.0
        %1784 = vmatpush1.msra.mxu0 0.0
        %1785 = vmatprep.subr.mxu0 0.0
        %1786 = vmatpush1.msra.mxu0 0.0
        %1787 = vmatprep.subr.mxu0 0.0
        %1788 = vmatpush1.msra.mxu0 0.0
        %1789 = vmatprep.subr.mxu0 0.0
        %1790 = vmatpush1.msra.mxu0 0.0
        %1791 = vmatprep.subr.mxu0 0.0
        %1792 = vmatpush1.msra.mxu0 0.0
        %1793 = vmatprep.subr.mxu0 0.0
        %1794 = vmatpush1.msra.mxu0 0.0
        %1795 = vmatprep.subr.mxu0 0.0
        %1796 = vmatpush1.msra.mxu0 0.0
        %1797 = vmatprep.subr.mxu0 0.0
        %1798 = vmatpush1.msra.mxu0 0.0
        %1799 = vmatprep.subr.mxu0 0.0
        %1800 = vmatpush1.msra.mxu0 0.0
        %1801 = vmatprep.subr.mxu0 0.0
        %1802 = vmatpush1.msra.mxu0 0.0
        %1803 = vmatprep.subr.mxu0 0.0
        %1804 = vmatpush1.msra.mxu0 0.0
        %1805 = vmatprep.subr.mxu0 0.0
        %1806 = vmatpush1.msra.mxu0 0.0
        %1807 = vmatprep.subr.mxu0 0.0
        %1808 = vmatpush1.msra.mxu0 0.0
        %1809 = vmatprep.subr.mxu0 0.0
        %1810 = vmatpush1.msra.mxu0 0.0
        %1811 = vmatprep.subr.mxu0 0.0
        %1812 = vmatpush1.msra.mxu0 0.0
        %1813 = vmatprep.subr.mxu0 0.0
        %1814 = vmatpush1.msra.mxu0 0.0
        %1815 = vmatprep.subr.mxu0 0.0
        %1816 = vmatpush1.msra.mxu0 0.0
        %1817 = vmatprep.mubr.f32.mxu0 0.0
        %v1818 = vand.u32 %v661, 4294901760
        %v1819 = vsub.f32 %v661, %v1818
        %v1820 = vand.u32 %v1819, 4294901760
        %1821 = vmatmul.mubr.f32.gmra.mrb[0].mxu0 %v1820
        %v1822 = vpop.f32.mrb[0].mxu0
        %v1823 = vadd.f32 %v1725, %v1822
        %v1824 = vpop.f32.mrb[0].mxu0
        %v1825 = vadd.f32 %v1727, %v1824
        %1826 = vmatprep.mubr.f32.mxu0 0.0
        %v1827 = vand.u32 %v664, 4294901760
        %v1828 = vsub.f32 %v664, %v1827
        %v1829 = vand.u32 %v1828, 4294901760
        %1830 = vmatmul.mubr.f32.gmra.mrb[0].mxu0 %v1829
        %v1831 = vpop.f32.mrb[0].mxu0
        %v1832 = vadd.f32 %v1733, %v1831
        %v1833 = vpop.f32.mrb[0].mxu0
        %v1834 = vadd.f32 %v1735, %v1833
        %1835 = vdwg.mxu0
        %v1836 = vand.u32 %v630, 4294901760
        %v1837 = vsub.f32 %v630, %v1836
        %v1838 = vand.u32 %v1837, 4294901760
        %1839 = vmatprep.subr.mxu0 %v1838
        %v1840 = vand.u32 %v629, 4294901760
        %v1841 = vsub.f32 %v629, %v1840
        %v1842 = vand.u32 %v1841, 4294901760
        %1843 = vmatpush1.msra.mxu0 %v1842
        %v1844 = vand.u32 %v634, 4294901760
        %v1845 = vsub.f32 %v634, %v1844
        %v1846 = vand.u32 %v1845, 4294901760
        %1847 = vmatprep.subr.mxu0 %v1846
        %v1848 = vand.u32 %v633, 4294901760
        %v1849 = vsub.f32 %v633, %v1848
        %v1850 = vand.u32 %v1849, 4294901760
        %1851 = vmatpush1.msra.mxu0 %v1850
        %v1852 = vand.u32 %v638, 4294901760
        %v1853 = vsub.f32 %v638, %v1852
        %v1854 = vand.u32 %v1853, 4294901760
        %1855 = vmatprep.subr.mxu0 %v1854
        %v1856 = vand.u32 %v637, 4294901760
        %v1857 = vsub.f32 %v637, %v1856
        %v1858 = vand.u32 %v1857, 4294901760
        %1859 = vmatpush1.msra.mxu0 %v1858
        %v1860 = vand.u32 %v642, 4294901760
        %v1861 = vsub.f32 %v642, %v1860
        %v1862 = vand.u32 %v1861, 4294901760
        %1863 = vmatprep.subr.mxu0 %v1862
        %v1864 = vand.u32 %v641, 4294901760
        %v1865 = vsub.f32 %v641, %v1864
        %v1866 = vand.u32 %v1865, 4294901760
        %1867 = vmatpush1.msra.mxu0 %v1866
        %v1868 = vand.u32 %v646, 4294901760
        %v1869 = vsub.f32 %v646, %v1868
        %v1870 = vand.u32 %v1869, 4294901760
        %1871 = vmatprep.subr.mxu0 %v1870
        %v1872 = vand.u32 %v645, 4294901760
        %v1873 = vsub.f32 %v645, %v1872
        %v1874 = vand.u32 %v1873, 4294901760
        %1875 = vmatpush1.msra.mxu0 %v1874
        %v1876 = vand.u32 %v650, 4294901760
        %v1877 = vsub.f32 %v650, %v1876
        %v1878 = vand.u32 %v1877, 4294901760
        %1879 = vmatprep.subr.mxu0 %v1878
        %v1880 = vand.u32 %v649, 4294901760
        %v1881 = vsub.f32 %v649, %v1880
        %v1882 = vand.u32 %v1881, 4294901760
        %1883 = vmatpush1.msra.mxu0 %v1882
        %v1884 = vand.u32 %v654, 4294901760
        %v1885 = vsub.f32 %v654, %v1884
        %v1886 = vand.u32 %v1885, 4294901760
        %1887 = vmatprep.subr.mxu0 %v1886
        %v1888 = vand.u32 %v653, 4294901760
        %v1889 = vsub.f32 %v653, %v1888
        %v1890 = vand.u32 %v1889, 4294901760
        %1891 = vmatpush1.msra.mxu0 %v1890
        %v1892 = vand.u32 %v658, 4294901760
        %v1893 = vsub.f32 %v658, %v1892
        %v1894 = vand.u32 %v1893, 4294901760
        %1895 = vmatprep.subr.mxu0 %v1894
        %v1896 = vand.u32 %v657, 4294901760
        %v1897 = vsub.f32 %v657, %v1896
        %v1898 = vand.u32 %v1897, 4294901760
        %1899 = vmatpush1.msra.mxu0 %v1898
        %1900 = vmatprep.subr.mxu0 0.0
        %1901 = vmatpush1.msra.mxu0 0.0
        %1902 = vmatprep.subr.mxu0 0.0
        %1903 = vmatpush1.msra.mxu0 0.0
        %1904 = vmatprep.subr.mxu0 0.0
        %1905 = vmatpush1.msra.mxu0 0.0
        %1906 = vmatprep.subr.mxu0 0.0
        %1907 = vmatpush1.msra.mxu0 0.0
        %1908 = vmatprep.subr.mxu0 0.0
        %1909 = vmatpush1.msra.mxu0 0.0
        %1910 = vmatprep.subr.mxu0 0.0
        %1911 = vmatpush1.msra.mxu0 0.0
        %1912 = vmatprep.subr.mxu0 0.0
        %1913 = vmatpush1.msra.mxu0 0.0
        %1914 = vmatprep.subr.mxu0 0.0
        %1915 = vmatpush1.msra.mxu0 0.0
        %1916 = vmatprep.subr.mxu0 0.0
        %1917 = vmatpush1.msra.mxu0 0.0
        %1918 = vmatprep.subr.mxu0 0.0
        %1919 = vmatpush1.msra.mxu0 0.0
        %1920 = vmatprep.subr.mxu0 0.0
        %1921 = vmatpush1.msra.mxu0 0.0
        %1922 = vmatprep.subr.mxu0 0.0
        %1923 = vmatpush1.msra.mxu0 0.0
        %1924 = vmatprep.subr.mxu0 0.0
        %1925 = vmatpush1.msra.mxu0 0.0
        %1926 = vmatprep.subr.mxu0 0.0
        %1927 = vmatpush1.msra.mxu0 0.0
        %1928 = vmatprep.subr.mxu0 0.0
        %1929 = vmatpush1.msra.mxu0 0.0
        %1930 = vmatprep.subr.mxu0 0.0
        %1931 = vmatpush1.msra.mxu0 0.0
        %1932 = vmatprep.subr.mxu0 0.0
        %1933 = vmatpush1.msra.mxu0 0.0
        %1934 = vmatprep.subr.mxu0 0.0
        %1935 = vmatpush1.msra.mxu0 0.0
        %1936 = vmatprep.subr.mxu0 0.0
        %1937 = vmatpush1.msra.mxu0 0.0
        %1938 = vmatprep.subr.mxu0 0.0
        %1939 = vmatpush1.msra.mxu0 0.0
        %1940 = vmatprep.subr.mxu0 0.0
        %1941 = vmatpush1.msra.mxu0 0.0
        %1942 = vmatprep.subr.mxu0 0.0
        %1943 = vmatpush1.msra.mxu0 0.0
        %1944 = vmatprep.subr.mxu0 0.0
        %1945 = vmatpush1.msra.mxu0 0.0
        %1946 = vmatprep.subr.mxu0 0.0
        %1947 = vmatpush1.msra.mxu0 0.0
        %1948 = vmatprep.mubr.f32.mxu0 0.0
        %v1949 = vand.u32 %v661, 4294901760
        %1950 = vmatmul.mubr.f32.gmra.mrb[0].mxu0 %v1949
        %v1951 = vpop.f32.mrb[0].mxu0
        %v1952 = vadd.f32 %v1823, %v1951
        %v1953 = vpop.f32.mrb[0].mxu0
        %v1954 = vadd.f32 %v1825, %v1953
        %1955 = vmatprep.mubr.f32.mxu0 0.0
        %v1956 = vand.u32 %v664, 4294901760
        %1957 = vmatmul.mubr.f32.gmra.mrb[0].mxu0 %v1956
        %v1958 = vpop.f32.mrb[0].mxu0
        %v1959 = vadd.f32 %v1832, %v1958
        %v1960 = vpop.f32.mrb[0].mxu0
        %v1961 = vadd.f32 %v1834, %v1960
        %1962 = vdwg.mxu0
        %v1963 = vand.u32 %v630, 4294901760
        %1964 = vmatprep.subr.mxu0 %v1963
        %v1965 = vand.u32 %v629, 4294901760
        %1966 = vmatpush1.msra.mxu0 %v1965
        %v1967 = vand.u32 %v634, 4294901760
        %1968 = vmatprep.subr.mxu0 %v1967
        %v1969 = vand.u32 %v633, 4294901760
        %1970 = vmatpush1.msra.mxu0 %v1969
        %v1971 = vand.u32 %v638, 4294901760
        %1972 = vmatprep.subr.mxu0 %v1971
        %v1973 = vand.u32 %v637, 4294901760
        %1974 = vmatpush1.msra.mxu0 %v1973
        %v1975 = vand.u32 %v642, 4294901760
        %1976 = vmatprep.subr.mxu0 %v1975
        %v1977 = vand.u32 %v641, 4294901760
        %1978 = vmatpush1.msra.mxu0 %v1977
        %v1979 = vand.u32 %v646, 4294901760
        %1980 = vmatprep.subr.mxu0 %v1979
        %v1981 = vand.u32 %v645, 4294901760
        %1982 = vmatpush1.msra.mxu0 %v1981
        %v1983 = vand.u32 %v650, 4294901760
        %1984 = vmatprep.subr.mxu0 %v1983
        %v1985 = vand.u32 %v649, 4294901760
        %1986 = vmatpush1.msra.mxu0 %v1985
        %v1987 = vand.u32 %v654, 4294901760
        %1988 = vmatprep.subr.mxu0 %v1987
        %v1989 = vand.u32 %v653, 4294901760
        %1990 = vmatpush1.msra.mxu0 %v1989
        %v1991 = vand.u32 %v658, 4294901760
        %1992 = vmatprep.subr.mxu0 %v1991
        %v1993 = vand.u32 %v657, 4294901760
        %1994 = vmatpush1.msra.mxu0 %v1993
        %1995 = vmatprep.subr.mxu0 0.0
        %1996 = vmatpush1.msra.mxu0 0.0
        %1997 = vmatprep.subr.mxu0 0.0
        %1998 = vmatpush1.msra.mxu0 0.0
        %1999 = vmatprep.subr.mxu0 0.0
        %2000 = vmatpush1.msra.mxu0 0.0
        %2001 = vmatprep.subr.mxu0 0.0
        %2002 = vmatpush1.msra.mxu0 0.0
        %2003 = vmatprep.subr.mxu0 0.0
        %2004 = vmatpush1.msra.mxu0 0.0
        %2005 = vmatprep.subr.mxu0 0.0
        %2006 = vmatpush1.msra.mxu0 0.0
        %2007 = vmatprep.subr.mxu0 0.0
        %2008 = vmatpush1.msra.mxu0 0.0
        %2009 = vmatprep.subr.mxu0 0.0
        %2010 = vmatpush1.msra.mxu0 0.0
        %2011 = vmatprep.subr.mxu0 0.0
        %2012 = vmatpush1.msra.mxu0 0.0
        %2013 = vmatprep.subr.mxu0 0.0
        %2014 = vmatpush1.msra.mxu0 0.0
        %2015 = vmatprep.subr.mxu0 0.0
        %2016 = vmatpush1.msra.mxu0 0.0
        %2017 = vmatprep.subr.mxu0 0.0
        %2018 = vmatpush1.msra.mxu0 0.0
        %2019 = vmatprep.subr.mxu0 0.0
        %2020 = vmatpush1.msra.mxu0 0.0
        %2021 = vmatprep.subr.mxu0 0.0
        %2022 = vmatpush1.msra.mxu0 0.0
        %2023 = vmatprep.subr.mxu0 0.0
        %2024 = vmatpush1.msra.mxu0 0.0
        %2025 = vmatprep.subr.mxu0 0.0
        %2026 = vmatpush1.msra.mxu0 0.0
        %2027 = vmatprep.subr.mxu0 0.0
        %2028 = vmatpush1.msra.mxu0 0.0
        %2029 = vmatprep.subr.mxu0 0.0
        %2030 = vmatpush1.msra.mxu0 0.0
        %2031 = vmatprep.subr.mxu0 0.0
        %2032 = vmatpush1.msra.mxu0 0.0
        %2033 = vmatprep.subr.mxu0 0.0
        %2034 = vmatpush1.msra.mxu0 0.0
        %2035 = vmatprep.subr.mxu0 0.0
        %2036 = vmatpush1.msra.mxu0 0.0
        %2037 = vmatprep.subr.mxu0 0.0
        %2038 = vmatpush1.msra.mxu0 0.0
        %2039 = vmatprep.subr.mxu0 0.0
        %2040 = vmatpush1.msra.mxu0 0.0
        %2041 = vmatprep.subr.mxu0 0.0
        %2042 = vmatpush1.msra.mxu0 0.0
        %2043 = vmatprep.mubr.f32.mxu0 0.0
        %v2044 = vand.u32 %v661, 4294901760
        %2045 = vmatmul.mubr.f32.gmra.mrb[0].mxu0 %v2044
        %v2046 = vpop.f32.mrb[0].mxu0
        %v2047 = vadd.f32 %v1952, %v2046
        %v2048 = vpop.f32.mrb[0].mxu0
        %v2049 = vadd.f32 %v1954, %v2048
        %2050 = vmatprep.mubr.f32.mxu0 0.0
        %v2051 = vand.u32 %v664, 4294901760
        %2052 = vmatmul.mubr.f32.gmra.mrb[0].mxu0 %v2051
        %v2053 = vpop.f32.mrb[0].mxu0
        %v2054 = vadd.f32 %v1959, %v2053
        %v2055 = vpop.f32.mrb[0].mxu0
        %v2056 = vadd.f32 %v1961, %v2055
        %2057 = vdwg.mxu0
        %v2058 = vld [vmem:[%s543] sm:$0xff]
        %v2059 = vld [vmem:[%s543 + $0x8] sm:$0xff]
        %v2060 = vld [vmem:[%s543 + $0x10] sm:$0xff]
        %v2061 = vld [vmem:[%s543 + $0x18] sm:$0xff]
        %v2062 = vld [vmem:[%s543 + $0x20] sm:$0xff]
        %v2063 = vld [vmem:[%s543 + $0x28] sm:$0xff]
        %v2064 = vld [vmem:[%s543 + $0x30] sm:$0xff]
        %v2065 = vld [vmem:[%s543 + $0x38] sm:$0xff]
        %2074 = vrot.lane.b32.xlu0 %v2058, 32
        %v2075 = vpop.permute.xlu0 %2074
        %2076 = vrot.lane.b32.xlu0 %v2059, 32
        %v2077 = vpop.permute.xlu0 %2076
        %2078 = vrot.lane.b32.xlu0 %v2060, 32
        %v2079 = vpop.permute.xlu0 %2078
        %2080 = vrot.lane.b32.xlu0 %v2061, 32
        %v2081 = vpop.permute.xlu0 %2080
        %2082 = vrot.lane.b32.xlu0 %v2062, 32
        %v2083 = vpop.permute.xlu0 %2082
        %2084 = vrot.lane.b32.xlu0 %v2063, 32
        %v2085 = vpop.permute.xlu0 %2084
        %2086 = vrot.lane.b32.xlu0 %v2064, 32
        %v2087 = vpop.permute.xlu0 %2086
        %2088 = vrot.lane.b32.xlu0 %v2065, 32
        %v2089 = vpop.permute.xlu0 %2088
        %2098 = vmatprep.subr.mxu0 0.0
        %v2099 = vand.u32 %v2075, 4294901760
        %2100 = vmatpush1.msra.mxu0 %v2099
        %2101 = vmatprep.subr.mxu0 0.0
        %v2102 = vand.u32 %v2077, 4294901760
        %2103 = vmatpush1.msra.mxu0 %v2102
        %2104 = vmatprep.subr.mxu0 0.0
        %v2105 = vand.u32 %v2079, 4294901760
        %2106 = vmatpush1.msra.mxu0 %v2105
        %2107 = vmatprep.subr.mxu0 0.0
        %v2108 = vand.u32 %v2081, 4294901760
        %2109 = vmatpush1.msra.mxu0 %v2108
        %2110 = vmatprep.subr.mxu0 0.0
        %v2111 = vand.u32 %v2083, 4294901760
        %2112 = vmatpush1.msra.mxu0 %v2111
        %2113 = vmatprep.subr.mxu0 0.0
        %v2114 = vand.u32 %v2085, 4294901760
        %2115 = vmatpush1.msra.mxu0 %v2114
        %2116 = vmatprep.subr.mxu0 0.0
        %v2117 = vand.u32 %v2087, 4294901760
        %2118 = vmatpush1.msra.mxu0 %v2117
        %2119 = vmatprep.subr.mxu0 0.0
        %v2120 = vand.u32 %v2089, 4294901760
        %2121 = vmatpush1.msra.mxu0 %v2120
        %2122 = vmatprep.subr.mxu0 0.0
        %2123 = vmatpush1.msra.mxu0 0.0
        %2124 = vmatprep.subr.mxu0 0.0
        %2125 = vmatpush1.msra.mxu0 0.0
        %2126 = vmatprep.subr.mxu0 0.0
        %2127 = vmatpush1.msra.mxu0 0.0
        %2128 = vmatprep.subr.mxu0 0.0
        %2129 = vmatpush1.msra.mxu0 0.0
        %2130 = vmatprep.subr.mxu0 0.0
        %2131 = vmatpush1.msra.mxu0 0.0
        %2132 = vmatprep.subr.mxu0 0.0
        %2133 = vmatpush1.msra.mxu0 0.0
        %2134 = vmatprep.subr.mxu0 0.0
        %2135 = vmatpush1.msra.mxu0 0.0
        %2136 = vmatprep.subr.mxu0 0.0
        %2137 = vmatpush1.msra.mxu0 0.0
        %2138 = vmatprep.subr.mxu0 0.0
        %2139 = vmatpush1.msra.mxu0 0.0
        %2140 = vmatprep.subr.mxu0 0.0
        %2141 = vmatpush1.msra.mxu0 0.0
        %2142 = vmatprep.subr.mxu0 0.0
        %2143 = vmatpush1.msra.mxu0 0.0
        %2144 = vmatprep.subr.mxu0 0.0
        %2145 = vmatpush1.msra.mxu0 0.0
        %2146 = vmatprep.subr.mxu0 0.0
        %2147 = vmatpush1.msra.mxu0 0.0
        %2148 = vmatprep.subr.mxu0 0.0
        %2149 = vmatpush1.msra.mxu0 0.0
        %2150 = vmatprep.subr.mxu0 0.0
        %2151 = vmatpush1.msra.mxu0 0.0
        %2152 = vmatprep.subr.mxu0 0.0
        %2153 = vmatpush1.msra.mxu0 0.0
        %2154 = vmatprep.subr.mxu0 0.0
        %2155 = vmatpush1.msra.mxu0 0.0
        %2156 = vmatprep.subr.mxu0 0.0
        %2157 = vmatpush1.msra.mxu0 0.0
        %2158 = vmatprep.subr.mxu0 0.0
        %2159 = vmatpush1.msra.mxu0 0.0
        %2160 = vmatprep.subr.mxu0 0.0
        %2161 = vmatpush1.msra.mxu0 0.0
        %2162 = vmatprep.subr.mxu0 0.0
        %2163 = vmatpush1.msra.mxu0 0.0
        %2164 = vmatprep.subr.mxu0 0.0
        %2165 = vmatpush1.msra.mxu0 0.0
        %2166 = vmatprep.subr.mxu0 0.0
        %2167 = vmatpush1.msra.mxu0 0.0
        %2168 = vmatprep.subr.mxu0 0.0
        %2169 = vmatpush1.msra.mxu0 0.0
        %2170 = vmatprep.mubr.f32.mxu0 0.0
        %v2171 = vand.u32 %v661, 4294901760
        %v2172 = vsub.f32 %v661, %v2171
        %v2173 = vand.u32 %v2172, 4294901760
        %v2174 = vsub.f32 %v2172, %v2173
        %v2175 = vand.u32 %v2174, 4294901760
        %2176 = vmatmul.mubr.f32.gmra.mrb[0].mxu0 %v2175
        %v2177 = vpop.f32.mrb[0].mxu0
        %v2178 = vadd.f32 0.0, %v2177
        %v2179 = vpop.f32.mrb[0].mxu0
        %2180 = vmatprep.mubr.f32.mxu0 0.0
        %v2181 = vand.u32 %v664, 4294901760
        %v2182 = vsub.f32 %v664, %v2181
        %v2183 = vand.u32 %v2182, 4294901760
        %v2184 = vsub.f32 %v2182, %v2183
        %v2185 = vand.u32 %v2184, 4294901760
        %2186 = vmatmul.mubr.f32.gmra.mrb[0].mxu0 %v2185
        %v2187 = vpop.f32.mrb[0].mxu0
        %v2188 = vadd.f32 0.0, %v2187
        %v2189 = vpop.f32.mrb[0].mxu0
        %2190 = vdwg.mxu0
        %2191 = vmatprep.subr.mxu0 0.0
        %v2192 = vand.u32 %v2075, 4294901760
        %v2193 = vsub.f32 %v2075, %v2192
        %v2194 = vand.u32 %v2193, 4294901760
        %v2195 = vsub.f32 %v2193, %v2194
        %v2196 = vand.u32 %v2195, 4294901760
        %2197 = vmatpush1.msra.mxu0 %v2196
        %2198 = vmatprep.subr.mxu0 0.0
        %v2199 = vand.u32 %v2077, 4294901760
        %v2200 = vsub.f32 %v2077, %v2199
        %v2201 = vand.u32 %v2200, 4294901760
        %v2202 = vsub.f32 %v2200, %v2201
        %v2203 = vand.u32 %v2202, 4294901760
        %2204 = vmatpush1.msra.mxu0 %v2203
        %2205 = vmatprep.subr.mxu0 0.0
        %v2206 = vand.u32 %v2079, 4294901760
        %v2207 = vsub.f32 %v2079, %v2206
        %v2208 = vand.u32 %v2207, 4294901760
        %v2209 = vsub.f32 %v2207, %v2208
        %v2210 = vand.u32 %v2209, 4294901760
        %2211 = vmatpush1.msra.mxu0 %v2210
        %2212 = vmatprep.subr.mxu0 0.0
        %v2213 = vand.u32 %v2081, 4294901760
        %v2214 = vsub.f32 %v2081, %v2213
        %v2215 = vand.u32 %v2214, 4294901760
        %v2216 = vsub.f32 %v2214, %v2215
        %v2217 = vand.u32 %v2216, 4294901760
        %2218 = vmatpush1.msra.mxu0 %v2217
        %2219 = vmatprep.subr.mxu0 0.0
        %v2220 = vand.u32 %v2083, 4294901760
        %v2221 = vsub.f32 %v2083, %v2220
        %v2222 = vand.u32 %v2221, 4294901760
        %v2223 = vsub.f32 %v2221, %v2222
        %v2224 = vand.u32 %v2223, 4294901760
        %2225 = vmatpush1.msra.mxu0 %v2224
        %2226 = vmatprep.subr.mxu0 0.0
        %v2227 = vand.u32 %v2085, 4294901760
        %v2228 = vsub.f32 %v2085, %v2227
        %v2229 = vand.u32 %v2228, 4294901760
        %v2230 = vsub.f32 %v2228, %v2229
        %v2231 = vand.u32 %v2230, 4294901760
        %2232 = vmatpush1.msra.mxu0 %v2231
        %2233 = vmatprep.subr.mxu0 0.0
        %v2234 = vand.u32 %v2087, 4294901760
        %v2235 = vsub.f32 %v2087, %v2234
        %v2236 = vand.u32 %v2235, 4294901760
        %v2237 = vsub.f32 %v2235, %v2236
        %v2238 = vand.u32 %v2237, 4294901760
        %2239 = vmatpush1.msra.mxu0 %v2238
        %2240 = vmatprep.subr.mxu0 0.0
        %v2241 = vand.u32 %v2089, 4294901760
        %v2242 = vsub.f32 %v2089, %v2241
        %v2243 = vand.u32 %v2242, 4294901760
        %v2244 = vsub.f32 %v2242, %v2243
        %v2245 = vand.u32 %v2244, 4294901760
        %2246 = vmatpush1.msra.mxu0 %v2245
        %2247 = vmatprep.subr.mxu0 0.0
        %2248 = vmatpush1.msra.mxu0 0.0
        %2249 = vmatprep.subr.mxu0 0.0
        %2250 = vmatpush1.msra.mxu0 0.0
        %2251 = vmatprep.subr.mxu0 0.0
        %2252 = vmatpush1.msra.mxu0 0.0
        %2253 = vmatprep.subr.mxu0 0.0
        %2254 = vmatpush1.msra.mxu0 0.0
        %2255 = vmatprep.subr.mxu0 0.0
        %2256 = vmatpush1.msra.mxu0 0.0
        %2257 = vmatprep.subr.mxu0 0.0
        %2258 = vmatpush1.msra.mxu0 0.0
        %2259 = vmatprep.subr.mxu0 0.0
        %2260 = vmatpush1.msra.mxu0 0.0
        %2261 = vmatprep.subr.mxu0 0.0
        %2262 = vmatpush1.msra.mxu0 0.0
        %2263 = vmatprep.subr.mxu0 0.0
        %2264 = vmatpush1.msra.mxu0 0.0
        %2265 = vmatprep.subr.mxu0 0.0
        %2266 = vmatpush1.msra.mxu0 0.0
        %2267 = vmatprep.subr.mxu0 0.0
        %2268 = vmatpush1.msra.mxu0 0.0
        %2269 = vmatprep.subr.mxu0 0.0
        %2270 = vmatpush1.msra.mxu0 0.0
        %2271 = vmatprep.subr.mxu0 0.0
        %2272 = vmatpush1.msra.mxu0 0.0
        %2273 = vmatprep.subr.mxu0 0.0
        %2274 = vmatpush1.msra.mxu0 0.0
        %2275 = vmatprep.subr.mxu0 0.0
        %2276 = vmatpush1.msra.mxu0 0.0
        %2277 = vmatprep.subr.mxu0 0.0
        %2278 = vmatpush1.msra.mxu0 0.0
        %2279 = vmatprep.subr.mxu0 0.0
        %2280 = vmatpush1.msra.mxu0 0.0
        %2281 = vmatprep.subr.mxu0 0.0
        %2282 = vmatpush1.msra.mxu0 0.0
        %2283 = vmatprep.subr.mxu0 0.0
        %2284 = vmatpush1.msra.mxu0 0.0
        %2285 = vmatprep.subr.mxu0 0.0
        %2286 = vmatpush1.msra.mxu0 0.0
        %2287 = vmatprep.subr.mxu0 0.0
        %2288 = vmatpush1.msra.mxu0 0.0
        %2289 = vmatprep.subr.mxu0 0.0
        %2290 = vmatpush1.msra.mxu0 0.0
        %2291 = vmatprep.subr.mxu0 0.0
        %2292 = vmatpush1.msra.mxu0 0.0
        %2293 = vmatprep.subr.mxu0 0.0
        %2294 = vmatpush1.msra.mxu0 0.0
        %2295 = vmatprep.mubr.f32.mxu0 0.0
        %v2296 = vand.u32 %v661, 4294901760
        %2297 = vmatmul.mubr.f32.gmra.mrb[0].mxu0 %v2296
        %v2298 = vpop.f32.mrb[0].mxu0
        %v2299 = vadd.f32 %v2178, %v2298
        %v2300 = vpop.f32.mrb[0].mxu0
        %2301 = vmatprep.mubr.f32.mxu0 0.0
        %v2302 = vand.u32 %v664, 4294901760
        %2303 = vmatmul.mubr.f32.gmra.mrb[0].mxu0 %v2302
        %v2304 = vpop.f32.mrb[0].mxu0
        %v2305 = vadd.f32 %v2188, %v2304
        %v2306 = vpop.f32.mrb[0].mxu0
        %2307 = vdwg.mxu0
        %2308 = vmatprep.subr.mxu0 0.0
        %v2309 = vand.u32 %v2075, 4294901760
        %v2310 = vsub.f32 %v2075, %v2309
        %2311 = vmatpush1.msra.mxu0 %v2310
        %2312 = vmatprep.subr.mxu0 0.0
        %v2313 = vand.u32 %v2077, 4294901760
        %v2314 = vsub.f32 %v2077, %v2313
        %2315 = vmatpush1.msra.mxu0 %v2314
        %2316 = vmatprep.subr.mxu0 0.0
        %v2317 = vand.u32 %v2079, 4294901760
        %v2318 = vsub.f32 %v2079, %v2317
        %2319 = vmatpush1.msra.mxu0 %v2318
        %2320 = vmatprep.subr.mxu0 0.0
        %v2321 = vand.u32 %v2081, 4294901760
        %v2322 = vsub.f32 %v2081, %v2321
        %2323 = vmatpush1.msra.mxu0 %v2322
        %2324 = vmatprep.subr.mxu0 0.0
        %v2325 = vand.u32 %v2083, 4294901760
        %v2326 = vsub.f32 %v2083, %v2325
        %2327 = vmatpush1.msra.mxu0 %v2326
        %2328 = vmatprep.subr.mxu0 0.0
        %v2329 = vand.u32 %v2085, 4294901760
        %v2330 = vsub.f32 %v2085, %v2329
        %2331 = vmatpush1.msra.mxu0 %v2330
        %2332 = vmatprep.subr.mxu0 0.0
        %v2333 = vand.u32 %v2087, 4294901760
        %v2334 = vsub.f32 %v2087, %v2333
        %2335 = vmatpush1.msra.mxu0 %v2334
        %2336 = vmatprep.subr.mxu0 0.0
        %v2337 = vand.u32 %v2089, 4294901760
        %v2338 = vsub.f32 %v2089, %v2337
        %2339 = vmatpush1.msra.mxu0 %v2338
        %2340 = vmatprep.subr.mxu0 0.0
        %2341 = vmatpush1.msra.mxu0 0.0
        %2342 = vmatprep.subr.mxu0 0.0
        %2343 = vmatpush1.msra.mxu0 0.0
        %2344 = vmatprep.subr.mxu0 0.0
        %2345 = vmatpush1.msra.mxu0 0.0
        %2346 = vmatprep.subr.mxu0 0.0
        %2347 = vmatpush1.msra.mxu0 0.0
        %2348 = vmatprep.subr.mxu0 0.0
        %2349 = vmatpush1.msra.mxu0 0.0
        %2350 = vmatprep.subr.mxu0 0.0
        %2351 = vmatpush1.msra.mxu0 0.0
        %2352 = vmatprep.subr.mxu0 0.0
        %2353 = vmatpush1.msra.mxu0 0.0
        %2354 = vmatprep.subr.mxu0 0.0
        %2355 = vmatpush1.msra.mxu0 0.0
        %2356 = vmatprep.subr.mxu0 0.0
        %2357 = vmatpush1.msra.mxu0 0.0
        %2358 = vmatprep.subr.mxu0 0.0
        %2359 = vmatpush1.msra.mxu0 0.0
        %2360 = vmatprep.subr.mxu0 0.0
        %2361 = vmatpush1.msra.mxu0 0.0
        %2362 = vmatprep.subr.mxu0 0.0
        %2363 = vmatpush1.msra.mxu0 0.0
        %2364 = vmatprep.subr.mxu0 0.0
        %2365 = vmatpush1.msra.mxu0 0.0
        %2366 = vmatprep.subr.mxu0 0.0
        %2367 = vmatpush1.msra.mxu0 0.0
        %2368 = vmatprep.subr.mxu0 0.0
        %2369 = vmatpush1.msra.mxu0 0.0
        %2370 = vmatprep.subr.mxu0 0.0
        %2371 = vmatpush1.msra.mxu0 0.0
        %2372 = vmatprep.subr.mxu0 0.0
        %2373 = vmatpush1.msra.mxu0 0.0
        %2374 = vmatprep.subr.mxu0 0.0
        %2375 = vmatpush1.msra.mxu0 0.0
        %2376 = vmatprep.subr.mxu0 0.0
        %2377 = vmatpush1.msra.mxu0 0.0
        %2378 = vmatprep.subr.mxu0 0.0
        %2379 = vmatpush1.msra.mxu0 0.0
        %2380 = vmatprep.subr.mxu0 0.0
        %2381 = vmatpush1.msra.mxu0 0.0
        %2382 = vmatprep.subr.mxu0 0.0
        %2383 = vmatpush1.msra.mxu0 0.0
        %2384 = vmatprep.subr.mxu0 0.0
        %2385 = vmatpush1.msra.mxu0 0.0
        %2386 = vmatprep.subr.mxu0 0.0
        %2387 = vmatpush1.msra.mxu0 0.0
        %2388 = vmatprep.mubr.f32.mxu0 0.0
        %v2389 = vand.u32 %v661, 4294901760
        %v2390 = vsub.f32 %v661, %v2389
        %2391 = vmatmul.mubr.f32.gmra.mrb[0].mxu0 %v2390
        %v2392 = vpop.f32.mrb[0].mxu0
        %v2393 = vadd.f32 %v2299, %v2392
        %v2394 = vpop.f32.mrb[0].mxu0
        %2395 = vmatprep.mubr.f32.mxu0 0.0
        %v2396 = vand.u32 %v664, 4294901760
        %v2397 = vsub.f32 %v664, %v2396
        %2398 = vmatmul.mubr.f32.gmra.mrb[0].mxu0 %v2397
        %v2399 = vpop.f32.mrb[0].mxu0
        %v2400 = vadd.f32 %v2305, %v2399
        %v2401 = vpop.f32.mrb[0].mxu0
        %2402 = vdwg.mxu0
        %2403 = vmatprep.subr.mxu0 0.0
        %v2404 = vand.u32 %v2075, 4294901760
        %2405 = vmatpush1.msra.mxu0 %v2404
        %2406 = vmatprep.subr.mxu0 0.0
        %v2407 = vand.u32 %v2077, 4294901760
        %2408 = vmatpush1.msra.mxu0 %v2407
        %2409 = vmatprep.subr.mxu0 0.0
        %v2410 = vand.u32 %v2079, 4294901760
        %2411 = vmatpush1.msra.mxu0 %v2410
        %2412 = vmatprep.subr.mxu0 0.0
        %v2413 = vand.u32 %v2081, 4294901760
        %2414 = vmatpush1.msra.mxu0 %v2413
        %2415 = vmatprep.subr.mxu0 0.0
        %v2416 = vand.u32 %v2083, 4294901760
        %2417 = vmatpush1.msra.mxu0 %v2416
        %2418 = vmatprep.subr.mxu0 0.0
        %v2419 = vand.u32 %v2085, 4294901760
        %2420 = vmatpush1.msra.mxu0 %v2419
        %2421 = vmatprep.subr.mxu0 0.0
        %v2422 = vand.u32 %v2087, 4294901760
        %2423 = vmatpush1.msra.mxu0 %v2422
        %2424 = vmatprep.subr.mxu0 0.0
        %v2425 = vand.u32 %v2089, 4294901760
        %2426 = vmatpush1.msra.mxu0 %v2425
        %2427 = vmatprep.subr.mxu0 0.0
        %2428 = vmatpush1.msra.mxu0 0.0
        %2429 = vmatprep.subr.mxu0 0.0
        %2430 = vmatpush1.msra.mxu0 0.0
        %2431 = vmatprep.subr.mxu0 0.0
        %2432 = vmatpush1.msra.mxu0 0.0
        %2433 = vmatprep.subr.mxu0 0.0
        %2434 = vmatpush1.msra.mxu0 0.0
        %2435 = vmatprep.subr.mxu0 0.0
        %2436 = vmatpush1.msra.mxu0 0.0
        %2437 = vmatprep.subr.mxu0 0.0
        %2438 = vmatpush1.msra.mxu0 0.0
        %2439 = vmatprep.subr.mxu0 0.0
        %2440 = vmatpush1.msra.mxu0 0.0
        %2441 = vmatprep.subr.mxu0 0.0
        %2442 = vmatpush1.msra.mxu0 0.0
        %2443 = vmatprep.subr.mxu0 0.0
        %2444 = vmatpush1.msra.mxu0 0.0
        %2445 = vmatprep.subr.mxu0 0.0
        %2446 = vmatpush1.msra.mxu0 0.0
        %2447 = vmatprep.subr.mxu0 0.0
        %2448 = vmatpush1.msra.mxu0 0.0
        %2449 = vmatprep.subr.mxu0 0.0
        %2450 = vmatpush1.msra.mxu0 0.0
        %2451 = vmatprep.subr.mxu0 0.0
        %2452 = vmatpush1.msra.mxu0 0.0
        %2453 = vmatprep.subr.mxu0 0.0
        %2454 = vmatpush1.msra.mxu0 0.0
        %2455 = vmatprep.subr.mxu0 0.0
        %2456 = vmatpush1.msra.mxu0 0.0
        %2457 = vmatprep.subr.mxu0 0.0
        %2458 = vmatpush1.msra.mxu0 0.0
        %2459 = vmatprep.subr.mxu0 0.0
        %2460 = vmatpush1.msra.mxu0 0.0
        %2461 = vmatprep.subr.mxu0 0.0
        %2462 = vmatpush1.msra.mxu0 0.0
        %2463 = vmatprep.subr.mxu0 0.0
        %2464 = vmatpush1.msra.mxu0 0.0
        %2465 = vmatprep.subr.mxu0 0.0
        %2466 = vmatpush1.msra.mxu0 0.0
        %2467 = vmatprep.subr.mxu0 0.0
        %2468 = vmatpush1.msra.mxu0 0.0
        %2469 = vmatprep.subr.mxu0 0.0
        %2470 = vmatpush1.msra.mxu0 0.0
        %2471 = vmatprep.subr.mxu0 0.0
        %2472 = vmatpush1.msra.mxu0 0.0
        %2473 = vmatprep.subr.mxu0 0.0
        %2474 = vmatpush1.msra.mxu0 0.0
        %2475 = vmatprep.mubr.f32.mxu0 0.0
        %v2476 = vand.u32 %v661, 4294901760
        %v2477 = vsub.f32 %v661, %v2476
        %v2478 = vand.u32 %v2477, 4294901760
        %2479 = vmatmul.mubr.f32.gmra.mrb[0].mxu0 %v2478
        %v2480 = vpop.f32.mrb[0].mxu0
        %v2481 = vadd.f32 %v2393, %v2480
        %v2482 = vpop.f32.mrb[0].mxu0
        %2483 = vmatprep.mubr.f32.mxu0 0.0
        %v2484 = vand.u32 %v664, 4294901760
        %v2485 = vsub.f32 %v664, %v2484
        %v2486 = vand.u32 %v2485, 4294901760
        %2487 = vmatmul.mubr.f32.gmra.mrb[0].mxu0 %v2486
        %v2488 = vpop.f32.mrb[0].mxu0
        %v2489 = vadd.f32 %v2400, %v2488
        %v2490 = vpop.f32.mrb[0].mxu0
        %2491 = vdwg.mxu0
        %2492 = vmatprep.subr.mxu0 0.0
        %v2493 = vand.u32 %v2075, 4294901760
        %v2494 = vsub.f32 %v2075, %v2493
        %v2495 = vand.u32 %v2494, 4294901760
        %2496 = vmatpush1.msra.mxu0 %v2495
        %2497 = vmatprep.subr.mxu0 0.0
        %v2498 = vand.u32 %v2077, 4294901760
        %v2499 = vsub.f32 %v2077, %v2498
        %v2500 = vand.u32 %v2499, 4294901760
        %2501 = vmatpush1.msra.mxu0 %v2500
        %2502 = vmatprep.subr.mxu0 0.0
        %v2503 = vand.u32 %v2079, 4294901760
        %v2504 = vsub.f32 %v2079, %v2503
        %v2505 = vand.u32 %v2504, 4294901760
        %2506 = vmatpush1.msra.mxu0 %v2505
        %2507 = vmatprep.subr.mxu0 0.0
        %v2508 = vand.u32 %v2081, 4294901760
        %v2509 = vsub.f32 %v2081, %v2508
        %v2510 = vand.u32 %v2509, 4294901760
        %2511 = vmatpush1.msra.mxu0 %v2510
        %2512 = vmatprep.subr.mxu0 0.0
        %v2513 = vand.u32 %v2083, 4294901760
        %v2514 = vsub.f32 %v2083, %v2513
        %v2515 = vand.u32 %v2514, 4294901760
        %2516 = vmatpush1.msra.mxu0 %v2515
        %2517 = vmatprep.subr.mxu0 0.0
        %v2518 = vand.u32 %v2085, 4294901760
        %v2519 = vsub.f32 %v2085, %v2518
        %v2520 = vand.u32 %v2519, 4294901760
        %2521 = vmatpush1.msra.mxu0 %v2520
        %2522 = vmatprep.subr.mxu0 0.0
        %v2523 = vand.u32 %v2087, 4294901760
        %v2524 = vsub.f32 %v2087, %v2523
        %v2525 = vand.u32 %v2524, 4294901760
        %2526 = vmatpush1.msra.mxu0 %v2525
        %2527 = vmatprep.subr.mxu0 0.0
        %v2528 = vand.u32 %v2089, 4294901760
        %v2529 = vsub.f32 %v2089, %v2528
        %v2530 = vand.u32 %v2529, 4294901760
        %2531 = vmatpush1.msra.mxu0 %v2530
        %2532 = vmatprep.subr.mxu0 0.0
        %2533 = vmatpush1.msra.mxu0 0.0
        %2534 = vmatprep.subr.mxu0 0.0
        %2535 = vmatpush1.msra.mxu0 0.0
        %2536 = vmatprep.subr.mxu0 0.0
        %2537 = vmatpush1.msra.mxu0 0.0
        %2538 = vmatprep.subr.mxu0 0.0
        %2539 = vmatpush1.msra.mxu0 0.0
        %2540 = vmatprep.subr.mxu0 0.0
        %2541 = vmatpush1.msra.mxu0 0.0
        %2542 = vmatprep.subr.mxu0 0.0
        %2543 = vmatpush1.msra.mxu0 0.0
        %2544 = vmatprep.subr.mxu0 0.0
        %2545 = vmatpush1.msra.mxu0 0.0
        %2546 = vmatprep.subr.mxu0 0.0
        %2547 = vmatpush1.msra.mxu0 0.0
        %2548 = vmatprep.subr.mxu0 0.0
        %2549 = vmatpush1.msra.mxu0 0.0
        %2550 = vmatprep.subr.mxu0 0.0
        %2551 = vmatpush1.msra.mxu0 0.0
        %2552 = vmatprep.subr.mxu0 0.0
        %2553 = vmatpush1.msra.mxu0 0.0
        %2554 = vmatprep.subr.mxu0 0.0
        %2555 = vmatpush1.msra.mxu0 0.0
        %2556 = vmatprep.subr.mxu0 0.0
        %2557 = vmatpush1.msra.mxu0 0.0
        %2558 = vmatprep.subr.mxu0 0.0
        %2559 = vmatpush1.msra.mxu0 0.0
        %2560 = vmatprep.subr.mxu0 0.0
        %2561 = vmatpush1.msra.mxu0 0.0
        %2562 = vmatprep.subr.mxu0 0.0
        %2563 = vmatpush1.msra.mxu0 0.0
        %2564 = vmatprep.subr.mxu0 0.0
        %2565 = vmatpush1.msra.mxu0 0.0
        %2566 = vmatprep.subr.mxu0 0.0
        %2567 = vmatpush1.msra.mxu0 0.0
        %2568 = vmatprep.subr.mxu0 0.0
        %2569 = vmatpush1.msra.mxu0 0.0
        %2570 = vmatprep.subr.mxu0 0.0
        %2571 = vmatpush1.msra.mxu0 0.0
        %2572 = vmatprep.subr.mxu0 0.0
        %2573 = vmatpush1.msra.mxu0 0.0
        %2574 = vmatprep.subr.mxu0 0.0
        %2575 = vmatpush1.msra.mxu0 0.0
        %2576 = vmatprep.subr.mxu0 0.0
        %2577 = vmatpush1.msra.mxu0 0.0
        %2578 = vmatprep.subr.mxu0 0.0
        %2579 = vmatpush1.msra.mxu0 0.0
        %2580 = vmatprep.mubr.f32.mxu0 0.0
        %v2581 = vand.u32 %v661, 4294901760
        %2582 = vmatmul.mubr.f32.gmra.mrb[0].mxu0 %v2581
        %v2583 = vpop.f32.mrb[0].mxu0
        %v2584 = vadd.f32 %v2481, %v2583
        %v2585 = vpop.f32.mrb[0].mxu0
        %2586 = vmatprep.mubr.f32.mxu0 0.0
        %v2587 = vand.u32 %v664, 4294901760
        %2588 = vmatmul.mubr.f32.gmra.mrb[0].mxu0 %v2587
        %v2589 = vpop.f32.mrb[0].mxu0
        %v2590 = vadd.f32 %v2489, %v2589
        %v2591 = vpop.f32.mrb[0].mxu0
        %2592 = vdwg.mxu0
        %2593 = vmatprep.subr.mxu0 0.0
        %v2594 = vand.u32 %v2075, 4294901760
        %2595 = vmatpush1.msra.mxu0 %v2594
        %2596 = vmatprep.subr.mxu0 0.0
        %v2597 = vand.u32 %v2077, 4294901760
        %2598 = vmatpush1.msra.mxu0 %v2597
        %2599 = vmatprep.subr.mxu0 0.0
        %v2600 = vand.u32 %v2079, 4294901760
        %2601 = vmatpush1.msra.mxu0 %v2600
        %2602 = vmatprep.subr.mxu0 0.0
        %v2603 = vand.u32 %v2081, 4294901760
        %2604 = vmatpush1.msra.mxu0 %v2603
        %2605 = vmatprep.subr.mxu0 0.0
        %v2606 = vand.u32 %v2083, 4294901760
        %2607 = vmatpush1.msra.mxu0 %v2606
        %2608 = vmatprep.subr.mxu0 0.0
        %v2609 = vand.u32 %v2085, 4294901760
        %2610 = vmatpush1.msra.mxu0 %v2609
        %2611 = vmatprep.subr.mxu0 0.0
        %v2612 = vand.u32 %v2087, 4294901760
        %2613 = vmatpush1.msra.mxu0 %v2612
        %2614 = vmatprep.subr.mxu0 0.0
        %v2615 = vand.u32 %v2089, 4294901760
        %2616 = vmatpush1.msra.mxu0 %v2615
        %2617 = vmatprep.subr.mxu0 0.0
        %2618 = vmatpush1.msra.mxu0 0.0
        %2619 = vmatprep.subr.mxu0 0.0
        %2620 = vmatpush1.msra.mxu0 0.0
        %2621 = vmatprep.subr.mxu0 0.0
        %2622 = vmatpush1.msra.mxu0 0.0
        %2623 = vmatprep.subr.mxu0 0.0
        %2624 = vmatpush1.msra.mxu0 0.0
        %2625 = vmatprep.subr.mxu0 0.0
        %2626 = vmatpush1.msra.mxu0 0.0
        %2627 = vmatprep.subr.mxu0 0.0
        %2628 = vmatpush1.msra.mxu0 0.0
        %2629 = vmatprep.subr.mxu0 0.0
        %2630 = vmatpush1.msra.mxu0 0.0
        %2631 = vmatprep.subr.mxu0 0.0
        %2632 = vmatpush1.msra.mxu0 0.0
        %2633 = vmatprep.subr.mxu0 0.0
        %2634 = vmatpush1.msra.mxu0 0.0
        %2635 = vmatprep.subr.mxu0 0.0
        %2636 = vmatpush1.msra.mxu0 0.0
        %2637 = vmatprep.subr.mxu0 0.0
        %2638 = vmatpush1.msra.mxu0 0.0
        %2639 = vmatprep.subr.mxu0 0.0
        %2640 = vmatpush1.msra.mxu0 0.0
        %2641 = vmatprep.subr.mxu0 0.0
        %2642 = vmatpush1.msra.mxu0 0.0
        %2643 = vmatprep.subr.mxu0 0.0
        %2644 = vmatpush1.msra.mxu0 0.0
        %2645 = vmatprep.subr.mxu0 0.0
        %2646 = vmatpush1.msra.mxu0 0.0
        %2647 = vmatprep.subr.mxu0 0.0
        %2648 = vmatpush1.msra.mxu0 0.0
        %2649 = vmatprep.subr.mxu0 0.0
        %2650 = vmatpush1.msra.mxu0 0.0
        %2651 = vmatprep.subr.mxu0 0.0
        %2652 = vmatpush1.msra.mxu0 0.0
        %2653 = vmatprep.subr.mxu0 0.0
        %2654 = vmatpush1.msra.mxu0 0.0
        %2655 = vmatprep.subr.mxu0 0.0
        %2656 = vmatpush1.msra.mxu0 0.0
        %2657 = vmatprep.subr.mxu0 0.0
        %2658 = vmatpush1.msra.mxu0 0.0
        %2659 = vmatprep.subr.mxu0 0.0
        %2660 = vmatpush1.msra.mxu0 0.0
        %2661 = vmatprep.subr.mxu0 0.0
        %2662 = vmatpush1.msra.mxu0 0.0
        %2663 = vmatprep.subr.mxu0 0.0
        %2664 = vmatpush1.msra.mxu0 0.0
        %2665 = vmatprep.mubr.f32.mxu0 0.0
        %v2666 = vand.u32 %v661, 4294901760
        %2667 = vmatmul.mubr.f32.gmra.mrb[0].mxu0 %v2666
        %v2668 = vpop.f32.mrb[0].mxu0
        %v2669 = vadd.f32 %v2584, %v2668
        %v2670 = vpop.f32.mrb[0].mxu0
        %2671 = vmatprep.mubr.f32.mxu0 0.0
        %v2672 = vand.u32 %v664, 4294901760
        %2673 = vmatmul.mubr.f32.gmra.mrb[0].mxu0 %v2672
        %v2674 = vpop.f32.mrb[0].mxu0
        %v2675 = vadd.f32 %v2590, %v2674
        %v2676 = vpop.f32.mrb[0].mxu0
        %2677 = vdwg.mxu0
        %v2678 = vld [vmem:[%s550] sm:$0xff]
        %v2679 = vld [vmem:[%s550 + $0x8] sm:$0xff]
        %v2680 = vld [vmem:[%s550 + $0x10] sm:$0xff]
        %v2681 = vld [vmem:[%s550 + $0x18] sm:$0xff]
        %v2682 = vld [vmem:[%s550 + $0x20] sm:$0xff]
        %v2683 = vld [vmem:[%s550 + $0x28] sm:$0xff]
        %v2684 = vld [vmem:[%s550 + $0x30] sm:$0xff]
        %v2685 = vld [vmem:[%s550 + $0x38] sm:$0xff]
        %2686 = vmatprep.subr.mxu0 0.0
        %v2687 = vand.u32 %v2678, 4294901760
        %2688 = vmatpush1.msra.mxu0 %v2687
        %2689 = vmatprep.subr.mxu0 0.0
        %v2690 = vand.u32 %v2679, 4294901760
        %2691 = vmatpush1.msra.mxu0 %v2690
        %2692 = vmatprep.subr.mxu0 0.0
        %v2693 = vand.u32 %v2680, 4294901760
        %2694 = vmatpush1.msra.mxu0 %v2693
        %2695 = vmatprep.subr.mxu0 0.0
        %v2696 = vand.u32 %v2681, 4294901760
        %2697 = vmatpush1.msra.mxu0 %v2696
        %2698 = vmatprep.subr.mxu0 0.0
        %v2699 = vand.u32 %v2682, 4294901760
        %2700 = vmatpush1.msra.mxu0 %v2699
        %2701 = vmatprep.subr.mxu0 0.0
        %v2702 = vand.u32 %v2683, 4294901760
        %2703 = vmatpush1.msra.mxu0 %v2702
        %2704 = vmatprep.subr.mxu0 0.0
        %v2705 = vand.u32 %v2684, 4294901760
        %2706 = vmatpush1.msra.mxu0 %v2705
        %2707 = vmatprep.subr.mxu0 0.0
        %v2708 = vand.u32 %v2685, 4294901760
        %2709 = vmatpush1.msra.mxu0 %v2708
        %2710 = vmatprep.subr.mxu0 0.0
        %2711 = vmatpush1.msra.mxu0 0.0
        %2712 = vmatprep.subr.mxu0 0.0
        %2713 = vmatpush1.msra.mxu0 0.0
        %2714 = vmatprep.subr.mxu0 0.0
        %2715 = vmatpush1.msra.mxu0 0.0
        %2716 = vmatprep.subr.mxu0 0.0
        %2717 = vmatpush1.msra.mxu0 0.0
        %2718 = vmatprep.subr.mxu0 0.0
        %2719 = vmatpush1.msra.mxu0 0.0
        %2720 = vmatprep.subr.mxu0 0.0
        %2721 = vmatpush1.msra.mxu0 0.0
        %2722 = vmatprep.subr.mxu0 0.0
        %2723 = vmatpush1.msra.mxu0 0.0
        %2724 = vmatprep.subr.mxu0 0.0
        %2725 = vmatpush1.msra.mxu0 0.0
        %2726 = vmatprep.subr.mxu0 0.0
        %2727 = vmatpush1.msra.mxu0 0.0
        %2728 = vmatprep.subr.mxu0 0.0
        %2729 = vmatpush1.msra.mxu0 0.0
        %2730 = vmatprep.subr.mxu0 0.0
        %2731 = vmatpush1.msra.mxu0 0.0
        %2732 = vmatprep.subr.mxu0 0.0
        %2733 = vmatpush1.msra.mxu0 0.0
        %2734 = vmatprep.subr.mxu0 0.0
        %2735 = vmatpush1.msra.mxu0 0.0
        %2736 = vmatprep.subr.mxu0 0.0
        %2737 = vmatpush1.msra.mxu0 0.0
        %2738 = vmatprep.subr.mxu0 0.0
        %2739 = vmatpush1.msra.mxu0 0.0
        %2740 = vmatprep.subr.mxu0 0.0
        %2741 = vmatpush1.msra.mxu0 0.0
        %2742 = vmatprep.subr.mxu0 0.0
        %2743 = vmatpush1.msra.mxu0 0.0
        %2744 = vmatprep.subr.mxu0 0.0
        %2745 = vmatpush1.msra.mxu0 0.0
        %2746 = vmatprep.subr.mxu0 0.0
        %2747 = vmatpush1.msra.mxu0 0.0
        %2748 = vmatprep.subr.mxu0 0.0
        %2749 = vmatpush1.msra.mxu0 0.0
        %2750 = vmatprep.subr.mxu0 0.0
        %2751 = vmatpush1.msra.mxu0 0.0
        %2752 = vmatprep.subr.mxu0 0.0
        %2753 = vmatpush1.msra.mxu0 0.0
        %2754 = vmatprep.subr.mxu0 0.0
        %2755 = vmatpush1.msra.mxu0 0.0
        %2756 = vmatprep.subr.mxu0 0.0
        %2757 = vmatpush1.msra.mxu0 0.0
        %2758 = vmatprep.mubr.f32.mxu0 0.0
        %v2759 = vand.u32 %v661, 4294901760
        %v2760 = vsub.f32 %v661, %v2759
        %v2761 = vand.u32 %v2760, 4294901760
        %v2762 = vsub.f32 %v2760, %v2761
        %v2763 = vand.u32 %v2762, 4294901760
        %2764 = vmatmul.mubr.f32.gmra.mrb[0].mxu0 %v2763
        %v2765 = vpop.f32.mrb[0].mxu0
        %v2766 = vadd.f32 0.0, %v2765
        %v2767 = vpop.f32.mrb[0].mxu0
        %2768 = vmatprep.mubr.f32.mxu0 0.0
        %v2769 = vand.u32 %v664, 4294901760
        %v2770 = vsub.f32 %v664, %v2769
        %v2771 = vand.u32 %v2770, 4294901760
        %v2772 = vsub.f32 %v2770, %v2771
        %v2773 = vand.u32 %v2772, 4294901760
        %2774 = vmatmul.mubr.f32.gmra.mrb[0].mxu0 %v2773
        %v2775 = vpop.f32.mrb[0].mxu0
        %v2776 = vadd.f32 0.0, %v2775
        %v2777 = vpop.f32.mrb[0].mxu0
        %2778 = vdwg.mxu0
        %2779 = vmatprep.subr.mxu0 0.0
        %v2780 = vand.u32 %v2678, 4294901760
        %v2781 = vsub.f32 %v2678, %v2780
        %v2782 = vand.u32 %v2781, 4294901760
        %v2783 = vsub.f32 %v2781, %v2782
        %v2784 = vand.u32 %v2783, 4294901760
        %2785 = vmatpush1.msra.mxu0 %v2784
        %2786 = vmatprep.subr.mxu0 0.0
        %v2787 = vand.u32 %v2679, 4294901760
        %v2788 = vsub.f32 %v2679, %v2787
        %v2789 = vand.u32 %v2788, 4294901760
        %v2790 = vsub.f32 %v2788, %v2789
        %v2791 = vand.u32 %v2790, 4294901760
        %2792 = vmatpush1.msra.mxu0 %v2791
        %2793 = vmatprep.subr.mxu0 0.0
        %v2794 = vand.u32 %v2680, 4294901760
        %v2795 = vsub.f32 %v2680, %v2794
        %v2796 = vand.u32 %v2795, 4294901760
        %v2797 = vsub.f32 %v2795, %v2796
        %v2798 = vand.u32 %v2797, 4294901760
        %2799 = vmatpush1.msra.mxu0 %v2798
        %2800 = vmatprep.subr.mxu0 0.0
        %v2801 = vand.u32 %v2681, 4294901760
        %v2802 = vsub.f32 %v2681, %v2801
        %v2803 = vand.u32 %v2802, 4294901760
        %v2804 = vsub.f32 %v2802, %v2803
        %v2805 = vand.u32 %v2804, 4294901760
        %2806 = vmatpush1.msra.mxu0 %v2805
        %2807 = vmatprep.subr.mxu0 0.0
        %v2808 = vand.u32 %v2682, 4294901760
        %v2809 = vsub.f32 %v2682, %v2808
        %v2810 = vand.u32 %v2809, 4294901760
        %v2811 = vsub.f32 %v2809, %v2810
        %v2812 = vand.u32 %v2811, 4294901760
        %2813 = vmatpush1.msra.mxu0 %v2812
        %2814 = vmatprep.subr.mxu0 0.0
        %v2815 = vand.u32 %v2683, 4294901760
        %v2816 = vsub.f32 %v2683, %v2815
        %v2817 = vand.u32 %v2816, 4294901760
        %v2818 = vsub.f32 %v2816, %v2817
        %v2819 = vand.u32 %v2818, 4294901760
        %2820 = vmatpush1.msra.mxu0 %v2819
        %2821 = vmatprep.subr.mxu0 0.0
        %v2822 = vand.u32 %v2684, 4294901760
        %v2823 = vsub.f32 %v2684, %v2822
        %v2824 = vand.u32 %v2823, 4294901760
        %v2825 = vsub.f32 %v2823, %v2824
        %v2826 = vand.u32 %v2825, 4294901760
        %2827 = vmatpush1.msra.mxu0 %v2826
        %2828 = vmatprep.subr.mxu0 0.0
        %v2829 = vand.u32 %v2685, 4294901760
        %v2830 = vsub.f32 %v2685, %v2829
        %v2831 = vand.u32 %v2830, 4294901760
        %v2832 = vsub.f32 %v2830, %v2831
        %v2833 = vand.u32 %v2832, 4294901760
        %2834 = vmatpush1.msra.mxu0 %v2833
        %2835 = vmatprep.subr.mxu0 0.0
        %2836 = vmatpush1.msra.mxu0 0.0
        %2837 = vmatprep.subr.mxu0 0.0
        %2838 = vmatpush1.msra.mxu0 0.0
        %2839 = vmatprep.subr.mxu0 0.0
        %2840 = vmatpush1.msra.mxu0 0.0
        %2841 = vmatprep.subr.mxu0 0.0
        %2842 = vmatpush1.msra.mxu0 0.0
        %2843 = vmatprep.subr.mxu0 0.0
        %2844 = vmatpush1.msra.mxu0 0.0
        %2845 = vmatprep.subr.mxu0 0.0
        %2846 = vmatpush1.msra.mxu0 0.0
        %2847 = vmatprep.subr.mxu0 0.0
        %2848 = vmatpush1.msra.mxu0 0.0
        %2849 = vmatprep.subr.mxu0 0.0
        %2850 = vmatpush1.msra.mxu0 0.0
        %2851 = vmatprep.subr.mxu0 0.0
        %2852 = vmatpush1.msra.mxu0 0.0
        %2853 = vmatprep.subr.mxu0 0.0
        %2854 = vmatpush1.msra.mxu0 0.0
        %2855 = vmatprep.subr.mxu0 0.0
        %2856 = vmatpush1.msra.mxu0 0.0
        %2857 = vmatprep.subr.mxu0 0.0
        %2858 = vmatpush1.msra.mxu0 0.0
        %2859 = vmatprep.subr.mxu0 0.0
        %2860 = vmatpush1.msra.mxu0 0.0
        %2861 = vmatprep.subr.mxu0 0.0
        %2862 = vmatpush1.msra.mxu0 0.0
        %2863 = vmatprep.subr.mxu0 0.0
        %2864 = vmatpush1.msra.mxu0 0.0
        %2865 = vmatprep.subr.mxu0 0.0
        %2866 = vmatpush1.msra.mxu0 0.0
        %2867 = vmatprep.subr.mxu0 0.0
        %2868 = vmatpush1.msra.mxu0 0.0
        %2869 = vmatprep.subr.mxu0 0.0
        %2870 = vmatpush1.msra.mxu0 0.0
        %2871 = vmatprep.subr.mxu0 0.0
        %2872 = vmatpush1.msra.mxu0 0.0
        %2873 = vmatprep.subr.mxu0 0.0
        %2874 = vmatpush1.msra.mxu0 0.0
        %2875 = vmatprep.subr.mxu0 0.0
        %2876 = vmatpush1.msra.mxu0 0.0
        %2877 = vmatprep.subr.mxu0 0.0
        %2878 = vmatpush1.msra.mxu0 0.0
        %2879 = vmatprep.subr.mxu0 0.0
        %2880 = vmatpush1.msra.mxu0 0.0
        %2881 = vmatprep.subr.mxu0 0.0
        %2882 = vmatpush1.msra.mxu0 0.0
        %2883 = vmatprep.mubr.f32.mxu0 0.0
        %v2884 = vand.u32 %v661, 4294901760
        %2885 = vmatmul.mubr.f32.gmra.mrb[0].mxu0 %v2884
        %v2886 = vpop.f32.mrb[0].mxu0
        %v2887 = vadd.f32 %v2766, %v2886
        %v2888 = vpop.f32.mrb[0].mxu0
        %2889 = vmatprep.mubr.f32.mxu0 0.0
        %v2890 = vand.u32 %v664, 4294901760
        %2891 = vmatmul.mubr.f32.gmra.mrb[0].mxu0 %v2890
        %v2892 = vpop.f32.mrb[0].mxu0
        %v2893 = vadd.f32 %v2776, %v2892
        %v2894 = vpop.f32.mrb[0].mxu0
        %2895 = vdwg.mxu0
        %2896 = vmatprep.subr.mxu0 0.0
        %v2897 = vand.u32 %v2678, 4294901760
        %v2898 = vsub.f32 %v2678, %v2897
        %2899 = vmatpush1.msra.mxu0 %v2898
        %2900 = vmatprep.subr.mxu0 0.0
        %v2901 = vand.u32 %v2679, 4294901760
        %v2902 = vsub.f32 %v2679, %v2901
        %2903 = vmatpush1.msra.mxu0 %v2902
        %2904 = vmatprep.subr.mxu0 0.0
        %v2905 = vand.u32 %v2680, 4294901760
        %v2906 = vsub.f32 %v2680, %v2905
        %2907 = vmatpush1.msra.mxu0 %v2906
        %2908 = vmatprep.subr.mxu0 0.0
        %v2909 = vand.u32 %v2681, 4294901760
        %v2910 = vsub.f32 %v2681, %v2909
        %2911 = vmatpush1.msra.mxu0 %v2910
        %2912 = vmatprep.subr.mxu0 0.0
        %v2913 = vand.u32 %v2682, 4294901760
        %v2914 = vsub.f32 %v2682, %v2913
        %2915 = vmatpush1.msra.mxu0 %v2914
        %2916 = vmatprep.subr.mxu0 0.0
        %v2917 = vand.u32 %v2683, 4294901760
        %v2918 = vsub.f32 %v2683, %v2917
        %2919 = vmatpush1.msra.mxu0 %v2918
        %2920 = vmatprep.subr.mxu0 0.0
        %v2921 = vand.u32 %v2684, 4294901760
        %v2922 = vsub.f32 %v2684, %v2921
        %2923 = vmatpush1.msra.mxu0 %v2922
        %2924 = vmatprep.subr.mxu0 0.0
        %v2925 = vand.u32 %v2685, 4294901760
        %v2926 = vsub.f32 %v2685, %v2925
        %2927 = vmatpush1.msra.mxu0 %v2926
        %2928 = vmatprep.subr.mxu0 0.0
        %2929 = vmatpush1.msra.mxu0 0.0
        %2930 = vmatprep.subr.mxu0 0.0
        %2931 = vmatpush1.msra.mxu0 0.0
        %2932 = vmatprep.subr.mxu0 0.0
        %2933 = vmatpush1.msra.mxu0 0.0
        %2934 = vmatprep.subr.mxu0 0.0
        %2935 = vmatpush1.msra.mxu0 0.0
        %2936 = vmatprep.subr.mxu0 0.0
        %2937 = vmatpush1.msra.mxu0 0.0
        %2938 = vmatprep.subr.mxu0 0.0
        %2939 = vmatpush1.msra.mxu0 0.0
        %2940 = vmatprep.subr.mxu0 0.0
        %2941 = vmatpush1.msra.mxu0 0.0
        %2942 = vmatprep.subr.mxu0 0.0
        %2943 = vmatpush1.msra.mxu0 0.0
        %2944 = vmatprep.subr.mxu0 0.0
        %2945 = vmatpush1.msra.mxu0 0.0
        %2946 = vmatprep.subr.mxu0 0.0
        %2947 = vmatpush1.msra.mxu0 0.0
        %2948 = vmatprep.subr.mxu0 0.0
        %2949 = vmatpush1.msra.mxu0 0.0
        %2950 = vmatprep.subr.mxu0 0.0
        %2951 = vmatpush1.msra.mxu0 0.0
        %2952 = vmatprep.subr.mxu0 0.0
        %2953 = vmatpush1.msra.mxu0 0.0
        %2954 = vmatprep.subr.mxu0 0.0
        %2955 = vmatpush1.msra.mxu0 0.0
        %2956 = vmatprep.subr.mxu0 0.0
        %2957 = vmatpush1.msra.mxu0 0.0
        %2958 = vmatprep.subr.mxu0 0.0
        %2959 = vmatpush1.msra.mxu0 0.0
        %2960 = vmatprep.subr.mxu0 0.0
        %2961 = vmatpush1.msra.mxu0 0.0
        %2962 = vmatprep.subr.mxu0 0.0
        %2963 = vmatpush1.msra.mxu0 0.0
        %2964 = vmatprep.subr.mxu0 0.0
        %2965 = vmatpush1.msra.mxu0 0.0
        %2966 = vmatprep.subr.mxu0 0.0
        %2967 = vmatpush1.msra.mxu0 0.0
        %2968 = vmatprep.subr.mxu0 0.0
        %2969 = vmatpush1.msra.mxu0 0.0
        %2970 = vmatprep.subr.mxu0 0.0
        %2971 = vmatpush1.msra.mxu0 0.0
        %2972 = vmatprep.subr.mxu0 0.0
        %2973 = vmatpush1.msra.mxu0 0.0
        %2974 = vmatprep.subr.mxu0 0.0
        %2975 = vmatpush1.msra.mxu0 0.0
        %2976 = vmatprep.mubr.f32.mxu0 0.0
        %v2977 = vand.u32 %v661, 4294901760
        %v2978 = vsub.f32 %v661, %v2977
        %2979 = vmatmul.mubr.f32.gmra.mrb[0].mxu0 %v2978
        %v2980 = vpop.f32.mrb[0].mxu0
        %v2981 = vadd.f32 %v2887, %v2980
        %v2982 = vpop.f32.mrb[0].mxu0
        %2983 = vmatprep.mubr.f32.mxu0 0.0
        %v2984 = vand.u32 %v664, 4294901760
        %v2985 = vsub.f32 %v664, %v2984
        %2986 = vmatmul.mubr.f32.gmra.mrb[0].mxu0 %v2985
        %v2987 = vpop.f32.mrb[0].mxu0
        %v2988 = vadd.f32 %v2893, %v2987
        %v2989 = vpop.f32.mrb[0].mxu0
        %2990 = vdwg.mxu0
        %2991 = vmatprep.subr.mxu0 0.0
        %v2992 = vand.u32 %v2678, 4294901760
        %2993 = vmatpush1.msra.mxu0 %v2992
        %2994 = vmatprep.subr.mxu0 0.0
        %v2995 = vand.u32 %v2679, 4294901760
        %2996 = vmatpush1.msra.mxu0 %v2995
        %2997 = vmatprep.subr.mxu0 0.0
        %v2998 = vand.u32 %v2680, 4294901760
        %2999 = vmatpush1.msra.mxu0 %v2998
        %3000 = vmatprep.subr.mxu0 0.0
        %v3001 = vand.u32 %v2681, 4294901760
        %3002 = vmatpush1.msra.mxu0 %v3001
        %3003 = vmatprep.subr.mxu0 0.0
        %v3004 = vand.u32 %v2682, 4294901760
        %3005 = vmatpush1.msra.mxu0 %v3004
        %3006 = vmatprep.subr.mxu0 0.0
        %v3007 = vand.u32 %v2683, 4294901760
        %3008 = vmatpush1.msra.mxu0 %v3007
        %3009 = vmatprep.subr.mxu0 0.0
        %v3010 = vand.u32 %v2684, 4294901760
        %3011 = vmatpush1.msra.mxu0 %v3010
        %3012 = vmatprep.subr.mxu0 0.0
        %v3013 = vand.u32 %v2685, 4294901760
        %3014 = vmatpush1.msra.mxu0 %v3013
        %3015 = vmatprep.subr.mxu0 0.0
        %3016 = vmatpush1.msra.mxu0 0.0
        %3017 = vmatprep.subr.mxu0 0.0
        %3018 = vmatpush1.msra.mxu0 0.0
        %3019 = vmatprep.subr.mxu0 0.0
        %3020 = vmatpush1.msra.mxu0 0.0
        %3021 = vmatprep.subr.mxu0 0.0
        %3022 = vmatpush1.msra.mxu0 0.0
        %3023 = vmatprep.subr.mxu0 0.0
        %3024 = vmatpush1.msra.mxu0 0.0
        %3025 = vmatprep.subr.mxu0 0.0
        %3026 = vmatpush1.msra.mxu0 0.0
        %3027 = vmatprep.subr.mxu0 0.0
        %3028 = vmatpush1.msra.mxu0 0.0
        %3029 = vmatprep.subr.mxu0 0.0
        %3030 = vmatpush1.msra.mxu0 0.0
        %3031 = vmatprep.subr.mxu0 0.0
        %3032 = vmatpush1.msra.mxu0 0.0
        %3033 = vmatprep.subr.mxu0 0.0
        %3034 = vmatpush1.msra.mxu0 0.0
        %3035 = vmatprep.subr.mxu0 0.0
        %3036 = vmatpush1.msra.mxu0 0.0
        %3037 = vmatprep.subr.mxu0 0.0
        %3038 = vmatpush1.msra.mxu0 0.0
        %3039 = vmatprep.subr.mxu0 0.0
        %3040 = vmatpush1.msra.mxu0 0.0
        %3041 = vmatprep.subr.mxu0 0.0
        %3042 = vmatpush1.msra.mxu0 0.0
        %3043 = vmatprep.subr.mxu0 0.0
        %3044 = vmatpush1.msra.mxu0 0.0
        %3045 = vmatprep.subr.mxu0 0.0
        %3046 = vmatpush1.msra.mxu0 0.0
        %3047 = vmatprep.subr.mxu0 0.0
        %3048 = vmatpush1.msra.mxu0 0.0
        %3049 = vmatprep.subr.mxu0 0.0
        %3050 = vmatpush1.msra.mxu0 0.0
        %3051 = vmatprep.subr.mxu0 0.0
        %3052 = vmatpush1.msra.mxu0 0.0
        %3053 = vmatprep.subr.mxu0 0.0
        %3054 = vmatpush1.msra.mxu0 0.0
        %3055 = vmatprep.subr.mxu0 0.0
        %3056 = vmatpush1.msra.mxu0 0.0
        %3057 = vmatprep.subr.mxu0 0.0
        %3058 = vmatpush1.msra.mxu0 0.0
        %3059 = vmatprep.subr.mxu0 0.0
        %3060 = vmatpush1.msra.mxu0 0.0
        %3061 = vmatprep.subr.mxu0 0.0
        %3062 = vmatpush1.msra.mxu0 0.0
        %3063 = vmatprep.mubr.f32.mxu0 0.0
        %v3064 = vand.u32 %v661, 4294901760
        %v3065 = vsub.f32 %v661, %v3064
        %v3066 = vand.u32 %v3065, 4294901760
        %3067 = vmatmul.mubr.f32.gmra.mrb[0].mxu0 %v3066
        %v3068 = vpop.f32.mrb[0].mxu0
        %v3069 = vadd.f32 %v2981, %v3068
        %v3070 = vpop.f32.mrb[0].mxu0
        %3071 = vmatprep.mubr.f32.mxu0 0.0
        %v3072 = vand.u32 %v664, 4294901760
        %v3073 = vsub.f32 %v664, %v3072
        %v3074 = vand.u32 %v3073, 4294901760
        %3075 = vmatmul.mubr.f32.gmra.mrb[0].mxu0 %v3074
        %v3076 = vpop.f32.mrb[0].mxu0
        %v3077 = vadd.f32 %v2988, %v3076
        %v3078 = vpop.f32.mrb[0].mxu0
        %3079 = vdwg.mxu0
        %3080 = vmatprep.subr.mxu0 0.0
        %v3081 = vand.u32 %v2678, 4294901760
        %v3082 = vsub.f32 %v2678, %v3081
        %v3083 = vand.u32 %v3082, 4294901760
        %3084 = vmatpush1.msra.mxu0 %v3083
        %3085 = vmatprep.subr.mxu0 0.0
        %v3086 = vand.u32 %v2679, 4294901760
        %v3087 = vsub.f32 %v2679, %v3086
        %v3088 = vand.u32 %v3087, 4294901760
        %3089 = vmatpush1.msra.mxu0 %v3088
        %3090 = vmatprep.subr.mxu0 0.0
        %v3091 = vand.u32 %v2680, 4294901760
        %v3092 = vsub.f32 %v2680, %v3091
        %v3093 = vand.u32 %v3092, 4294901760
        %3094 = vmatpush1.msra.mxu0 %v3093
        %3095 = vmatprep.subr.mxu0 0.0
        %v3096 = vand.u32 %v2681, 4294901760
        %v3097 = vsub.f32 %v2681, %v3096
        %v3098 = vand.u32 %v3097, 4294901760
        %3099 = vmatpush1.msra.mxu0 %v3098
        %3100 = vmatprep.subr.mxu0 0.0
        %v3101 = vand.u32 %v2682, 4294901760
        %v3102 = vsub.f32 %v2682, %v3101
        %v3103 = vand.u32 %v3102, 4294901760
        %3104 = vmatpush1.msra.mxu0 %v3103
        %3105 = vmatprep.subr.mxu0 0.0
        %v3106 = vand.u32 %v2683, 4294901760
        %v3107 = vsub.f32 %v2683, %v3106
        %v3108 = vand.u32 %v3107, 4294901760
        %3109 = vmatpush1.msra.mxu0 %v3108
        %3110 = vmatprep.subr.mxu0 0.0
        %v3111 = vand.u32 %v2684, 4294901760
        %v3112 = vsub.f32 %v2684, %v3111
        %v3113 = vand.u32 %v3112, 4294901760
        %3114 = vmatpush1.msra.mxu0 %v3113
        %3115 = vmatprep.subr.mxu0 0.0
        %v3116 = vand.u32 %v2685, 4294901760
        %v3117 = vsub.f32 %v2685, %v3116
        %v3118 = vand.u32 %v3117, 4294901760
        %3119 = vmatpush1.msra.mxu0 %v3118
        %3120 = vmatprep.subr.mxu0 0.0
        %3121 = vmatpush1.msra.mxu0 0.0
        %3122 = vmatprep.subr.mxu0 0.0
        %3123 = vmatpush1.msra.mxu0 0.0
        %3124 = vmatprep.subr.mxu0 0.0
        %3125 = vmatpush1.msra.mxu0 0.0
        %3126 = vmatprep.subr.mxu0 0.0
        %3127 = vmatpush1.msra.mxu0 0.0
        %3128 = vmatprep.subr.mxu0 0.0
        %3129 = vmatpush1.msra.mxu0 0.0
        %3130 = vmatprep.subr.mxu0 0.0
        %3131 = vmatpush1.msra.mxu0 0.0
        %3132 = vmatprep.subr.mxu0 0.0
        %3133 = vmatpush1.msra.mxu0 0.0
        %3134 = vmatprep.subr.mxu0 0.0
        %3135 = vmatpush1.msra.mxu0 0.0
        %3136 = vmatprep.subr.mxu0 0.0
        %3137 = vmatpush1.msra.mxu0 0.0
        %3138 = vmatprep.subr.mxu0 0.0
        %3139 = vmatpush1.msra.mxu0 0.0
        %3140 = vmatprep.subr.mxu0 0.0
        %3141 = vmatpush1.msra.mxu0 0.0
        %3142 = vmatprep.subr.mxu0 0.0
        %3143 = vmatpush1.msra.mxu0 0.0
        %3144 = vmatprep.subr.mxu0 0.0
        %3145 = vmatpush1.msra.mxu0 0.0
        %3146 = vmatprep.subr.mxu0 0.0
        %3147 = vmatpush1.msra.mxu0 0.0
        %3148 = vmatprep.subr.mxu0 0.0
        %3149 = vmatpush1.msra.mxu0 0.0
        %3150 = vmatprep.subr.mxu0 0.0
        %3151 = vmatpush1.msra.mxu0 0.0
        %3152 = vmatprep.subr.mxu0 0.0
        %3153 = vmatpush1.msra.mxu0 0.0
        %3154 = vmatprep.subr.mxu0 0.0
        %3155 = vmatpush1.msra.mxu0 0.0
        %3156 = vmatprep.subr.mxu0 0.0
        %3157 = vmatpush1.msra.mxu0 0.0
        %3158 = vmatprep.subr.mxu0 0.0
        %3159 = vmatpush1.msra.mxu0 0.0
        %3160 = vmatprep.subr.mxu0 0.0
        %3161 = vmatpush1.msra.mxu0 0.0
        %3162 = vmatprep.subr.mxu0 0.0
        %3163 = vmatpush1.msra.mxu0 0.0
        %3164 = vmatprep.subr.mxu0 0.0
        %3165 = vmatpush1.msra.mxu0 0.0
        %3166 = vmatprep.subr.mxu0 0.0
        %3167 = vmatpush1.msra.mxu0 0.0
        %3168 = vmatprep.mubr.f32.mxu0 0.0
        %v3169 = vand.u32 %v661, 4294901760
        %3170 = vmatmul.mubr.f32.gmra.mrb[0].mxu0 %v3169
        %v3171 = vpop.f32.mrb[0].mxu0
        %v3172 = vadd.f32 %v3069, %v3171
        %v3173 = vpop.f32.mrb[0].mxu0
        %3174 = vmatprep.mubr.f32.mxu0 0.0
        %v3175 = vand.u32 %v664, 4294901760
        %3176 = vmatmul.mubr.f32.gmra.mrb[0].mxu0 %v3175
        %v3177 = vpop.f32.mrb[0].mxu0
        %v3178 = vadd.f32 %v3077, %v3177
        %v3179 = vpop.f32.mrb[0].mxu0
        %3180 = vdwg.mxu0
        %3181 = vmatprep.subr.mxu0 0.0
        %v3182 = vand.u32 %v2678, 4294901760
        %3183 = vmatpush1.msra.mxu0 %v3182
        %3184 = vmatprep.subr.mxu0 0.0
        %v3185 = vand.u32 %v2679, 4294901760
        %3186 = vmatpush1.msra.mxu0 %v3185
        %3187 = vmatprep.subr.mxu0 0.0
        %v3188 = vand.u32 %v2680, 4294901760
        %3189 = vmatpush1.msra.mxu0 %v3188
        %3190 = vmatprep.subr.mxu0 0.0
        %v3191 = vand.u32 %v2681, 4294901760
        %3192 = vmatpush1.msra.mxu0 %v3191
        %3193 = vmatprep.subr.mxu0 0.0
        %v3194 = vand.u32 %v2682, 4294901760
        %3195 = vmatpush1.msra.mxu0 %v3194
        %3196 = vmatprep.subr.mxu0 0.0
        %v3197 = vand.u32 %v2683, 4294901760
        %3198 = vmatpush1.msra.mxu0 %v3197
        %3199 = vmatprep.subr.mxu0 0.0
        %v3200 = vand.u32 %v2684, 4294901760
        %3201 = vmatpush1.msra.mxu0 %v3200
        %3202 = vmatprep.subr.mxu0 0.0
        %v3203 = vand.u32 %v2685, 4294901760
        %3204 = vmatpush1.msra.mxu0 %v3203
        %3205 = vmatprep.subr.mxu0 0.0
        %3206 = vmatpush1.msra.mxu0 0.0
        %3207 = vmatprep.subr.mxu0 0.0
        %3208 = vmatpush1.msra.mxu0 0.0
        %3209 = vmatprep.subr.mxu0 0.0
        %3210 = vmatpush1.msra.mxu0 0.0
        %3211 = vmatprep.subr.mxu0 0.0
        %3212 = vmatpush1.msra.mxu0 0.0
        %3213 = vmatprep.subr.mxu0 0.0
        %3214 = vmatpush1.msra.mxu0 0.0
        %3215 = vmatprep.subr.mxu0 0.0
        %3216 = vmatpush1.msra.mxu0 0.0
        %3217 = vmatprep.subr.mxu0 0.0
        %3218 = vmatpush1.msra.mxu0 0.0
        %3219 = vmatprep.subr.mxu0 0.0
        %3220 = vmatpush1.msra.mxu0 0.0
        %3221 = vmatprep.subr.mxu0 0.0
        %3222 = vmatpush1.msra.mxu0 0.0
        %3223 = vmatprep.subr.mxu0 0.0
        %3224 = vmatpush1.msra.mxu0 0.0
        %3225 = vmatprep.subr.mxu0 0.0
        %3226 = vmatpush1.msra.mxu0 0.0
        %3227 = vmatprep.subr.mxu0 0.0
        %3228 = vmatpush1.msra.mxu0 0.0
        %3229 = vmatprep.subr.mxu0 0.0
        %3230 = vmatpush1.msra.mxu0 0.0
        %3231 = vmatprep.subr.mxu0 0.0
        %3232 = vmatpush1.msra.mxu0 0.0
        %3233 = vmatprep.subr.mxu0 0.0
        %3234 = vmatpush1.msra.mxu0 0.0
        %3235 = vmatprep.subr.mxu0 0.0
        %3236 = vmatpush1.msra.mxu0 0.0
        %3237 = vmatprep.subr.mxu0 0.0
        %3238 = vmatpush1.msra.mxu0 0.0
        %3239 = vmatprep.subr.mxu0 0.0
        %3240 = vmatpush1.msra.mxu0 0.0
        %3241 = vmatprep.subr.mxu0 0.0
        %3242 = vmatpush1.msra.mxu0 0.0
        %3243 = vmatprep.subr.mxu0 0.0
        %3244 = vmatpush1.msra.mxu0 0.0
        %3245 = vmatprep.subr.mxu0 0.0
        %3246 = vmatpush1.msra.mxu0 0.0
        %3247 = vmatprep.subr.mxu0 0.0
        %3248 = vmatpush1.msra.mxu0 0.0
        %3249 = vmatprep.subr.mxu0 0.0
        %3250 = vmatpush1.msra.mxu0 0.0
        %3251 = vmatprep.subr.mxu0 0.0
        %3252 = vmatpush1.msra.mxu0 0.0
        %3253 = vmatprep.mubr.f32.mxu0 0.0
        %v3254 = vand.u32 %v661, 4294901760
        %3255 = vmatmul.mubr.f32.gmra.mrb[0].mxu0 %v3254
        %v3256 = vpop.f32.mrb[0].mxu0
        %v3257 = vadd.f32 %v3172, %v3256
        %v3258 = vpop.f32.mrb[0].mxu0
        %3259 = vmatprep.mubr.f32.mxu0 0.0
        %v3260 = vand.u32 %v664, 4294901760
        %3261 = vmatmul.mubr.f32.gmra.mrb[0].mxu0 %v3260
        %v3262 = vpop.f32.mrb[0].mxu0
        %v3263 = vadd.f32 %v3178, %v3262
        %v3264 = vpop.f32.mrb[0].mxu0
        %3265 = vdwg.mxu0
        %p3266 = scmp.gt.s32.totalorder %s24, 0
        %s3267 = scalar_select %p3266, 1, 0
        %s3268 = scvt.s32.f32 %s3267
        %v3269 = vstv %s3268
        %v3270 = vmul.f32 %v2669, %v3269
        %v3271 = vmul.f32 %v2675, %v3269
        %p3272 = scmp.lt.s32.totalorder %s24, 1
        %s3273 = scalar_select %p3272, 1, 0
        %s3274 = scvt.s32.f32 %s3273
        %v3275 = vstv %s3274
        %v3276 = vmul.f32 %v3257, %v3275
        %v3277 = vmul.f32 %v3263, %v3275
        %vm3278 = vcmask 785408
        %3279 = vst.msk [vmem:[#allocation2] sm:$0xff] %vm3278, 0.0
        %3280 = vst.msk [vmem:[#allocation2 + $0x30] sm:$0xff] %vm3278, 0.0
        %3283 = vrot.lane.b32.xlu0 %v3270, 96
        %v3284 = vpop.permute.xlu0 %3283
        %3285 = vrot.lane.b32.xlu0 %v3271, 96
        %v3286 = vpop.permute.xlu0 %3285
        %vm3289 = vcmask 1048320
        %3290 = vst.msk [vmem:[#allocation2] sm:$0xff] %vm3289, %v3284
        %3291 = vst.msk [vmem:[#allocation2 + $0x30] sm:$0xff] %vm3289, %v3286
        %3292 = vst [vmem:[#allocation2 + $0x8] sm:$0xff] %v1351
        %3293 = vst [vmem:[#allocation2 + $0x10] sm:$0xff] %v1353
        %3294 = vst [vmem:[#allocation2 + $0x18] sm:$0xff] %v2047
        %3295 = vst [vmem:[#allocation2 + $0x20] sm:$0xff] %v2049
        %3296 = vst [vmem:[#allocation2 + $0x38] sm:$0xff] %v1358
        %3297 = vst [vmem:[#allocation2 + $0x40] sm:$0xff] %v1360
        %3298 = vst [vmem:[#allocation2 + $0x48] sm:$0xff] %v2054
        %3299 = vst [vmem:[#allocation2 + $0x50] sm:$0xff] %v2056
        %vm3300 = vcmask 261120
        %3301 = vst.msk [vmem:[#allocation2 + $0x28] sm:$0xff] %vm3300, %v3276
        %3302 = vst.msk [vmem:[#allocation2 + $0x58] sm:$0xff] %vm3300, %v3277
        %vm3303 = vcmask 1047808
        %3304 = vst.msk [vmem:[#allocation2 + $0x28] sm:$0xff] %vm3303, 0.0
        %3305 = vst.msk [vmem:[#allocation2 + $0x58] sm:$0xff] %vm3303, 0.0
        %v3306 = vld [vmem:[%s5] ss:$2 sm:$0xf]
        %s3307 = scalar_lea.vmem %s5, 1
        %v3308 = vld [vmem:[%s3307] ss:$2 sm:$0xf]
        %v3309 = vld [vmem:[%s614] sm:$0xf]
        %s3310 = sld [smem:[#allocation3]]
        %v3311 = vstv %s3310
        %v3312 = vadd.f32 %v3309, %v3311
        %v3313 = vld [vmem:[#allocation2] ss:$8 sm:$0xf]
        %v3314 = vld [vmem:[#allocation2] ss:$8 sm:$0x10]
        %v3315 = vor.u32 %v3313, %v3314
        %3317 = vrot.lane.b32.xlu0 %v3315, 33
        %v3318 = vpop.permute.xlu0 %3317
        %v3319 = vrot.slane %v3318, 1
        %vm3320 = vcmask 269312
        %v3321 = vsel %vm3320, %v3318, %v3319
        %v3323 = vmul.f32 %v3306, %v3321
        %v3324 = vadd.f32 %v3312, %v3323
        %s3325 = scalar_lea.vmem [#allocation2], 1
        %v3326 = vld [vmem:[%s3325] ss:$8 sm:$0xf]
        %v3327 = vld [vmem:[%s3325] ss:$8 sm:$0x10]
        %v3328 = vor.u32 %v3326, %v3327
        %3330 = vrot.lane.b32.xlu0 %v3328, 32
        %v3331 = vpop.permute.xlu0 %3330
        %v3332 = vrot.slane %v3331, 1
        %v3333 = vsel %vm3300, %v3331, %v3332
        %v3335 = vadd.f32 %v3324, %v3333
        %s3336 = scalar_lea.vmem [#allocation2], 2
        %v3337 = vld [vmem:[%s3336] ss:$8 sm:$0xf]
        %v3338 = vld [vmem:[%s3336] ss:$8 sm:$0x10]
        %v3339 = vor.u32 %v3337, %v3338
        %3341 = vrot.lane.b32.xlu0 %v3339, 31
        %v3342 = vpop.permute.xlu0 %3341
        %v3343 = vrot.slane %v3342, 1
        %vm3344 = vcmask 252928
        %v3345 = vsel %vm3344, %v3342, %v3343
        %v3347 = vmul.f32 %v3308, %v3345
        %v3348 = vadd.f32 %v3335, %v3347
        %s3349 = scalar_lea.vmem [#allocation2], 3
        %v3350 = vld [vmem:[%s3349] ss:$8 sm:$0xf]
        %v3351 = vld [vmem:[%s3349] ss:$8 sm:$0x10]
        %v3352 = vor.u32 %v3350, %v3351
        %3354 = vrot.lane.b32.xlu0 %v3352, 1
        %v3355 = vpop.permute.xlu0 %3354
        %v3356 = vrot.slane %v3355, 1
        %vm3357 = vcmask 7168
        %v3358 = vsel %vm3357, %v3355, %v3356
        %v3360 = vmul.f32 %v3306, %v3358
        %v3361 = vadd.f32 %v3348, %v3360
        %s3362 = scalar_lea.vmem [#allocation2], 12
        %v3363 = vld [vmem:[%s3362] ss:$8 sm:$0xf]
        %v3364 = vadd.f32 %v3361, %v3363
        %s3365 = scalar_lea.vmem [#allocation2], 13
        %v3366 = vld [vmem:[%s3365] ss:$8 sm:$0xf]
        %v3367 = vld [vmem:[%s3365] ss:$8 sm:$0x10]
        %v3368 = vor.u32 %v3366, %v3367
        %3370 = vrot.lane.b32.xlu0 %v3368, 127
        %v3371 = vpop.permute.xlu0 %3370
        %v3372 = vrot.slane %v3371, 1
        %vm3373 = vcmask 1039360
        %v3374 = vsel %vm3373, %v3371, %v3372
        %v3376 = vmul.f32 %v3308, %v3374
        %v3377 = vadd.f32 %v3364, %v3376
        %s3378 = scalar_lea.vmem [#allocation2], 14
        %v3379 = vld [vmem:[%s3378] ss:$8 sm:$0xf]
        %v3380 = vld [vmem:[%s3378] ss:$8 sm:$0x10]
        %v3381 = vor.u32 %v3379, %v3380
        %3383 = vrot.lane.b32.xlu0 %v3381, 97
        %v3384 = vpop.permute.xlu0 %3383
        %v3385 = vrot.slane %v3384, 1
        %vm3386 = vcmask 793600
        %v3387 = vsel %vm3386, %v3384, %v3385
        %v3389 = vmul.f32 %v3306, %v3387
        %v3390 = vadd.f32 %v3377, %v3389
        %s3391 = scalar_lea.vmem [#allocation2], 15
        %v3392 = vld [vmem:[%s3391] ss:$8 sm:$0xf]
        %v3393 = vld [vmem:[%s3391] ss:$8 sm:$0x10]
        %v3394 = vor.u32 %v3392, %v3393
        %3396 = vrot.lane.b32.xlu0 %v3394, 96
        %v3397 = vpop.permute.xlu0 %3396
        %v3398 = vrot.slane %v3397, 1
        %v3399 = vsel %vm3278, %v3397, %v3398
        %v3401 = vadd.f32 %v3390, %v3399
        %s3402 = scalar_lea.vmem [#allocation2], 56
        %v3403 = vld [vmem:[%s3402] ss:$8 sm:$0xf]
        %v3404 = vld [vmem:[%s3402] ss:$8 sm:$0x10]
        %v3405 = vor.u32 %v3403, %v3404
        %3407 = vrot.lane.b32.xlu0 %v3405, 95
        %v3408 = vpop.permute.xlu0 %3407
        %v3409 = vrot.slane %v3408, 1
        %vm3410 = vcmask 777216
        %v3411 = vsel %vm3410, %v3408, %v3409
        %v3413 = vmul.f32 %v3308, %v3411
        %v3414 = vadd.f32 %v3401, %v3413
        %v3415 = vlaneseq
        %vm3416 = vcmp.ge.s32.totalorder %v3415, 0
        %vm3417 = vcmp.lt.s32.totalorder %v3415, 512
        %vm3418 = vmand %vm3416, %vm3417
        %3419 = vst.msk [vmem:[%s623] sm:$0xf] %vm3418, %v3414
        %s3420 = smul.u32 4, %s24
        %p3421 = scmp.lt.s32.totalorder %s23, 1
        %s3422 = scalar_select %p3421, %s23, 1
        %p3423 = scmp.lt.s32.totalorder %s3420, 7
        %s3424 = scalar_select %p3423, %s3420, 7
        %s3425 = smul.addr %s3422, 8
        %s3426 = sadd.s32 %s3424, %s3425
        %s3427 = scalar_lea.vmem %s7, %s3426
        // Predicated region
        $region148: #{image_reconstruction.1} parent=134 // pred_check
          %p3428 = pneg %p242
        $region149: #{image_reconstruction.1} parent=134 // pred_check_branch
          %3430 = sbr.rel (%p3428) target = $region151
        $region150: #{image_reconstruction.1} parent=134 // pred_region
          %s3431 = smul.u32 4, %s24
        $region151: #{image_reconstruction.1} parent=134 // pred_fallthru
          _
      $region135: #{image_reconstruction.1} parent=5 // pred_fallthru
        _
      %p3432 = scmp.le.s32.totalorder 2, %s14
      // Predicated region
      $region152: #{image_reconstruction.1} parent=5 // pred_check
        %p3433 = pneg %p3432
      $region153: #{image_reconstruction.1} parent=5 // pred_check_branch
        %3435 = sbr.rel (%p3433) target = $region155
      $region154: #{image_reconstruction.1} parent=5 // pred_region
        %s3436 = ssub.s32 %s14, 2
        // Predicated region
        $region156: #{image_reconstruction.1} parent=154 // pred_check
          %p3437 = pneg %p248
        $region157: #{image_reconstruction.1} parent=154 // pred_check_branch
          %3439 = sbr.rel (%p3437) target = $region159
        $region158: #{image_reconstruction.1} parent=154 // pred_region
          %s3440 = smul.u32 4, %s26
          %p3441 = scmp.lt.s32.totalorder %s25, 1
          %s3442 = scalar_select %p3441, %s25, 1
          %p3443 = scmp.lt.s32.totalorder %s3440, 7
          %s3444 = scalar_select %p3443, %s3440, 7
          %s3445 = smul.addr %s3442, 8
          %s3446 = sadd.s32 %s3444, %s3445
          %s3447 = scalar_lea.vmem %s7, %s3446
        $region159: #{image_reconstruction.1} parent=154 // pred_fallthru
          _
      $region155: #{image_reconstruction.1} parent=5 // pred_fallthru
        _
    $region6: #{image_reconstruction.1} parent=1 // loop_footer
      %s18 = sadd.s32 1, %s14
    $region7: #{image_reconstruction.1} parent=1 // loop_footer_branch
      %13 = sbr.rel target = $region3
    $region8: #{image_reconstruction.1} parent=1 // loop_exit
      _

</llo_original>
